<compile_context>
chip_gen: v7x
topology: tpu7x:2x2x1
jax: 0.10.0
libtpu: 0.0.40
codegen_flags: <defaults>
</compile_context>

<pallas_src>
import numpy as np
import jax
import jax.numpy as jnp
from jax.experimental import pallas as pl
from jax.experimental.pallas import tpu as pltpu  # noqa: F401  (single grid-less call; no TPU-specific params needed)

# ----------------------------------------------------------------------------
# Configuration (the torch module's `params`), small deterministic shapes.
# ----------------------------------------------------------------------------
GROUP_SIZE = 2
N_GROUPS = 2
KERNEL_SIZE = 3
STRIDE = 2
N_LAYERS = 2
ETA = 0.1
POOL_SIZE = 2
N_CLASSES = 4
IN_H = 16
IN_W = 16
N_CHANNELS = 4
BATCH = 2
BN_EPS = 1e-5


def calc_pad_sizes(stride, kernel_size, height, width):
    top_pad = stride
    if (height + top_pad - kernel_size) % stride == 0:
        bot_pad = 0
    else:
        bot_pad = stride - (height + top_pad - kernel_size) % stride
    left_pad = stride
    if (width + left_pad - kernel_size) % stride == 0:
        right_pad = 0
    else:
        right_pad = stride - (width + left_pad - kernel_size) % stride
    right_pad += stride
    bot_pad += stride
    return (left_pad, right_pad, top_pad, bot_pad)


_LEFT, _RIGHT, _TOP, _BOT = calc_pad_sizes(STRIDE, KERNEL_SIZE, IN_H, IN_W)
PAD = (_LEFT, _TOP)
H_OUT = int(np.floor((IN_H + 2 * PAD[0] - KERNEL_SIZE) / STRIDE + 1))
W_OUT = int(np.floor((IN_W + 2 * PAD[1] - KERNEL_SIZE) / STRIDE + 1))
CONV2D_OUT = (H_OUT - 1) * STRIDE - 2 * PAD[0] + KERNEL_SIZE
OUTPUT_PAD = IN_H - CONV2D_OUT               # torch: np.max(input_height - conv2d_out, 0)
GDIM = GROUP_SIZE * N_GROUPS

NSPAT_IN = N_CHANNELS * IN_H * IN_W          # 1024 : flattened (c, iy, ix)
NSPAT_U = GDIM * H_OUT * W_OUT               # 324  : flattened (g, oy, ox)

assert 0 <= OUTPUT_PAD < STRIDE
# conv_transpose2d output size must equal the input image size (so y - Bu is valid)
assert (H_OUT - 1) * STRIDE - 2 * PAD[0] + KERNEL_SIZE + OUTPUT_PAD == IN_H


# ----------------------------------------------------------------------------
# Constant (parameter-independent) structure matrices, built once in numpy.
# ----------------------------------------------------------------------------
def adaptive_pool_matrix(in_size, out_size):
    P = np.zeros((in_size, out_size), dtype=np.float32)
    for i in range(out_size):
        s = (i * in_size) // out_size
        e = int(np.ceil((i + 1) * in_size / out_size))
        P[s:e, i] = 1.0 / (e - s)
    return P


def make_consts():
    # G[q, kk, p] = 1 iff input pixel q is kernel tap kk of conv output pixel p
    # (stride / padding structure; missing taps = implicit zero padding).
    G = np.zeros((IN_H * IN_W, KERNEL_SIZE * KERNEL_SIZE, H_OUT * W_OUT), np.float32)
    for oy in range(H_OUT):
        for ox in range(W_OUT):
            for ky in range(KERNEL_SIZE):
                for kx in range(KERNEL_SIZE):
                    iy = oy * STRIDE + ky - PAD[0]
                    ix = ox * STRIDE + kx - PAD[1]
                    if 0 <= iy < IN_H and 0 <= ix < IN_W:
                        G[iy * IN_W + ix, ky * KERNEL_SIZE + kx, oy * W_OUT + ox] = 1.0
    # AdaptiveAvgPool2d(POOL_SIZE) on an H_OUT x W_OUT map as an (81, 4) matrix.
    Ph = adaptive_pool_matrix(H_OUT, POOL_SIZE)
    Pw = adaptive_pool_matrix(W_OUT, POOL_SIZE)
    P2 = np.einsum("yi,xj->yxij", Ph, Pw).reshape(H_OUT * W_OUT, POOL_SIZE * POOL_SIZE)
    # Channel-segment indicator for the in-kernel BatchNorm reductions/broadcasts.
    Seg = np.zeros((NSPAT_U, GDIM), np.float32)
    for g in range(GDIM):
        Seg[g * H_OUT * W_OUT:(g + 1) * H_OUT * W_OUT, g] = 1.0
    return {"G": jnp.asarray(G), "P2": jnp.asarray(P2),
            "Seg": jnp.asarray(Seg), "SegT": jnp.asarray(Seg.T.copy())}


# ----------------------------------------------------------------------------
# The single fused Pallas kernel (whole forward pass).
# ----------------------------------------------------------------------------
def _make_fused_kernel(batch):
    inv_n = 1.0 / float(batch * H_OUT * W_OUT)   # BatchNorm2d count N*H*W

    def kernel(*refs):
        # ---- unpack refs (mirrors the arg list built in forward()) ----------
        idx = 0
        y_ref = refs[idx]; idx += 1
        layer_refs = []
        for k in range(N_LAYERS):
            tf_ref = refs[idx]; idx += 1
            tb_ref = None
            if k > 0:                    # layer 0: u_tmp == 0  =>  Bu == 0
                tb_ref = refs[idx]; idx += 1
            lam_ref = refs[idx]; idx += 1
            layer_refs.append((tf_ref, tb_ref, lam_ref))
        seg_ref, segT_ref, mfc_ref, fcb_ref = refs[idx:idx + 4]; idx += 4
        logits_ref, uhat_ref = refs[idx], refs[idx + 1]

        # ---- FISTA / ISTA unrolled loop, state resident in VMEM -------------
        y2 = y_ref[...]                                            # (B, 1024)
        u_old = jnp.zeros((batch, NSPAT_U), jnp.float32)           # (B, 324)
        u_tmp = jnp.zeros_like(u_old)
        t_old = 1.0

        for k in range(N_LAYERS):
            tf_ref, tb_ref, lam_ref = layer_refs[k]

            if tb_ref is None:
                resid = y2                                         # Bu == 0 at layer 0
            else:
                Bu = jnp.dot(u_tmp, tb_ref[...],                   # conv_transpose2d
                             preferred_element_type=jnp.float32)   # (B, 1024)
                resid = y2 - Bu

            conv = jnp.dot(resid, tf_ref[...],                     # conv2d
                           preferred_element_type=jnp.float32)     # (B, 324)

            t_new = (1.0 + float(np.sqrt(1.0 + 4.0 * t_old * t_old))) / 2.0
            coef = (t_old - 1.0) / t_new

            # ISTA activation: relu(u_tmp + eta*conv - lmbd*eta)
            u_new = jnp.maximum(u_tmp + ETA * conv - lam_ref[...], 0.0)
            # FISTA momentum
            u_tmp = u_new if coef == 0.0 else u_new + coef * (u_new - u_old)

            if k < N_LAYERS - 1:
                # BatchNorm2d, training mode (batch stats, weight=1, bias=0).
                # One pass: per-channel sum and sum-of-squares via segment matmuls.
                seg = seg_ref[...]                                  # (324, GDIM)
                s1 = jnp.dot(u_tmp, seg, preferred_element_type=jnp.float32)
                s2 = jnp.dot(u_tmp * u_tmp, seg, preferred_element_type=jnp.float32)
                mean = jnp.sum(s1, axis=0, keepdims=True) * inv_n           # (1, GDIM)
                var = jnp.sum(s2, axis=0, keepdims=True) * inv_n - mean * mean
                inv_std = jax.lax.rsqrt(var + BN_EPS)                       # EUP
                mean_row = jnp.dot(mean, segT_ref[...],
                                   preferred_element_type=jnp.float32)      # (1, 324)
                inv_row = jnp.dot(inv_std, segT_ref[...],
                                  preferred_element_type=jnp.float32)       # (1, 324)
                u_tmp = (u_tmp - mean_row) * inv_row

            u_old = u_new
            t_old = t_new

        u_hat = u_old                                               # (B, 324)
        uhat_ref[...] = u_hat
        # AdaptiveAvgPool2d + Linear folded into one matmul.
        logits_ref[...] = (jnp.dot(u_hat, mfc_ref[...],
                                   preferred_element_type=jnp.float32)
                           + fcb_ref[...])

    return kernel


# ----------------------------------------------------------------------------
# Forward pass: parameter-only folding in XLA, one pallas_call on the data path.
# ----------------------------------------------------------------------------
def _gen_dictionary(Bk, Ak):
    """gen_b = cat([B, A@B, A^2@B, ...], dim=0) -> (GDIM, C, k, k)."""
    res = Bk
    parts = [Bk]
    for _ in range(1, GROUP_SIZE):
        res = jnp.einsum(
            "gcpq,gcq->gcp", Ak,
            res.reshape(N_GROUPS, N_CHANNELS, KERNEL_SIZE * KERNEL_SIZE)
        ).reshape(Bk.shape)
        parts.append(res)
    return jnp.concatenate(parts, axis=0)


@jax.jit
def forward(y, params, consts):
    B = y.shape[0]
    G = consts["G"]

    # --- parameter-only preprocessing (data-independent): fold each conv into a
    #     dense Toeplitz matrix, the pool+fc into one matrix, lmbd*eta into a row.
    tf_list, tb_list, lam_list = [], [], []
    for k in range(N_LAYERS):
        gen_b = _gen_dictionary(params["B"][k], params["A"][k])
        gb = gen_b.reshape(GDIM, N_CHANNELS, KERNEL_SIZE * KERNEL_SIZE)
        # T[c*HW + q, g*hw + p] = sum_kk gen_b[g,c,kk] * G[q,kk,p]
        tf = jnp.einsum("gck,qkp->cqgp", gb, G).reshape(NSPAT_IN, NSPAT_U)
        tf_list.append(tf)
        tb_list.append(tf.T if k > 0 else None)       # adjoint == conv_transpose2d
        lam = jnp.broadcast_to(
            params["lmbd"][k].reshape(GDIM, 1) * ETA, (GDIM, H_OUT * W_OUT)
        ).reshape(1, NSPAT_U)
        lam_list.append(lam)

    Wfc = params["fc_w"].reshape(N_CLASSES, GDIM, POOL_SIZE * POOL_SIZE)
    m_fc = jnp.einsum("pq,ngq->gpn", consts["P2"], Wfc).reshape(NSPAT_U, N_CLASSES)
    fcb = params["fc_b"].reshape(1, N_CLASSES)

    y2 = y.reshape(B, NSPAT_IN)

    kernel_args = [y2]
    for k in range(N_LAYERS):
        kernel_args.append(tf_list[k])
        if k > 0:
            kernel_args.append(tb_list[k])
        kernel_args.append(lam_list[k])
    kernel_args += [consts["Seg"], consts["SegT"], m_fc, fcb]

    logits, uhat_flat = pl.pallas_call(
        _make_fused_kernel(B),
        out_shape=(jax.ShapeDtypeStruct((B, N_CLASSES), jnp.float32),
                   jax.ShapeDtypeStruct((B, NSPAT_U), jnp.float32)),
    )(*kernel_args)

    return logits, uhat_flat.reshape(B, GDIM, H_OUT, W_OUT)


# ----------------------------------------------------------------------------
# Deterministic parameter / input construction and run
# ----------------------------------------------------------------------------
def frob_normalize(x):
    n = jnp.sqrt(jnp.sum(x * x, axis=(-2, -1), keepdims=True))
    return x / jnp.maximum(n, 1e-12)


def make_params(key):
    keys = jax.random.split(key, 2 * N_LAYERS + 2)
    B_list, A_list, lmbd_list = [], [], []
    for l in range(N_LAYERS):
        B_i = jax.random.normal(keys[2 * l],
                                (N_GROUPS, N_CHANNELS, KERNEL_SIZE, KERNEL_SIZE),
                                jnp.float32)
        A_i = jax.random.normal(keys[2 * l + 1],
                                (N_GROUPS, N_CHANNELS, KERNEL_SIZE ** 2, KERNEL_SIZE ** 2),
                                jnp.float32)
        B_list.append(frob_normalize(B_i))
        A_list.append(frob_normalize(A_i))
        lmbd_list.append(jnp.ones((1, GDIM, 1, 1), jnp.float32))
    fc_in = GDIM * POOL_SIZE * POOL_SIZE
    bound = 1.0 / np.sqrt(fc_in)
    fc_w = jax.random.uniform(keys[-2], (N_CLASSES, fc_in), jnp.float32, -bound, bound)
    fc_b = jax.random.uniform(keys[-1], (N_CLASSES,), jnp.float32, -bound, bound)
    return {"B": B_list, "A": A_list, "lmbd": lmbd_list, "fc_w": fc_w, "fc_b": fc_b}


if __name__ == "__main__":
    root = jax.random.PRNGKey(0)
    k_params, k_input = jax.random.split(root)
    params = make_params(k_params)
    consts = make_consts()
    y = jax.random.normal(k_input, (BATCH, N_CHANNELS, IN_H, IN_W), jnp.float32)

    logits, u_hat = forward(y, params, consts)
    jax.block_until_ready((logits, u_hat))

    assert logits.shape == (BATCH, N_CLASSES)
    assert u_hat.shape == (BATCH, GDIM, H_OUT, W_OUT)
    assert bool(jnp.all(jnp.isfinite(logits))) and bool(jnp.all(jnp.isfinite(u_hat)))
    print("KERNEL_OK")
</pallas_src>

<mosaic_0001>
module attributes {stable_mosaic.version = 11 : i64} {
  func.func @kernel(%arg0: memref<2x1024xf32, #tpu.memory_space<vmem>>, %arg1: memref<1024x324xf32, #tpu.memory_space<vmem>>, %arg2: memref<1x324xf32, #tpu.memory_space<vmem>>, %arg3: memref<1024x324xf32, #tpu.memory_space<vmem>>, %arg4: memref<324x1024xf32, #tpu.memory_space<vmem>>, %arg5: memref<1x324xf32, #tpu.memory_space<vmem>>, %arg6: memref<324x4xf32, #tpu.memory_space<vmem>>, %arg7: memref<4x324xf32, #tpu.memory_space<vmem>>, %arg8: memref<324x4xf32, #tpu.memory_space<vmem>>, %arg9: memref<1x4xf32, #tpu.memory_space<vmem>>, %arg10: memref<2x4xf32, #tpu.memory_space<vmem>>, %arg11: memref<2x324xf32, #tpu.memory_space<vmem>>) attributes {dimension_semantics = [], scalar_prefetch = 0 : i64, scratch_operands = 0 : i64, tpu.core_type = #tpu.core_type<tc>} {
    %c0 = arith.constant 0 : index
    %c0_0 = arith.constant 0 : index
    %0 = vector.load %arg0[%c0, %c0_0] : memref<2x1024xf32, #tpu.memory_space<vmem>>, vector<2x1024xf32>
    %cst = arith.constant 0.000000e+00 : f32
    %1 = vector.broadcast %cst : f32 to vector<2x324xf32>
    %c0_1 = arith.constant 0 : index
    %c0_2 = arith.constant 0 : index
    %2 = vector.load %arg1[%c0_1, %c0_2] : memref<1024x324xf32, #tpu.memory_space<vmem>>, vector<1024x324xf32>
    %cst_3 = arith.constant dense<0.000000e+00> : vector<2x324xf32>
    %3 = tpu.matmul %0, %2, %cst_3 {dimension_numbers = #tpu.dot_dimension_numbers<[1], [0], [0], [1], [0, 0, 1, 1], [], []>} : vector<2x1024xf32>, vector<1024x324xf32>, vector<2x324xf32> -> vector<2x324xf32>
    %cst_4 = arith.constant 1.000000e-01 : f32
    %4 = vector.broadcast %cst_4 : f32 to vector<2x324xf32>
    %5 = arith.mulf %4, %3 : vector<2x324xf32>
    %6 = arith.addf %1, %5 : vector<2x324xf32>
    %c0_5 = arith.constant 0 : index
    %c0_6 = arith.constant 0 : index
    %7 = vector.load %arg2[%c0_5, %c0_6] : memref<1x324xf32, #tpu.memory_space<vmem>>, vector<1x324xf32>
    %8 = vector.broadcast %7 : vector<1x324xf32> to vector<2x324xf32>
    %9 = arith.subf %6, %8 : vector<2x324xf32>
    %cst_7 = arith.constant 0.000000e+00 : f32
    %10 = vector.broadcast %cst_7 : f32 to vector<2x324xf32>
    %11 = arith.maximumf %9, %10 : vector<2x324xf32>
    %c0_8 = arith.constant 0 : index
    %c0_9 = arith.constant 0 : index
    %12 = vector.load %arg6[%c0_8, %c0_9] : memref<324x4xf32, #tpu.memory_space<vmem>>, vector<324x4xf32>
    %cst_10 = arith.constant dense<0.000000e+00> : vector<2x4xf32>
    %13 = tpu.matmul %11, %12, %cst_10 {dimension_numbers = #tpu.dot_dimension_numbers<[1], [0], [0], [1], [0, 0, 1, 1], [], []>} : vector<2x324xf32>, vector<324x4xf32>, vector<2x4xf32> -> vector<2x4xf32>
    %14 = arith.mulf %11, %11 : vector<2x324xf32>
    %cst_11 = arith.constant dense<0.000000e+00> : vector<2x4xf32>
    %15 = tpu.matmul %14, %12, %cst_11 {dimension_numbers = #tpu.dot_dimension_numbers<[1], [0], [0], [1], [0, 0, 1, 1], [], []>} : vector<2x324xf32>, vector<324x4xf32>, vector<2x4xf32> -> vector<2x4xf32>
    %cst_12 = arith.constant dense<0.000000e+00> : vector<4xf32>
    %16 = vector.multi_reduction <add>, %13, %cst_12 [0] : vector<2x4xf32> to vector<4xf32>
    %17 = vector.shape_cast %16 : vector<4xf32> to vector<1x4xf32>
    %cst_13 = arith.constant 0.00617283955 : f32
    %18 = vector.broadcast %cst_13 : f32 to vector<1x4xf32>
    %19 = arith.mulf %17, %18 : vector<1x4xf32>
    %cst_14 = arith.constant dense<0.000000e+00> : vector<4xf32>
    %20 = vector.multi_reduction <add>, %15, %cst_14 [0] : vector<2x4xf32> to vector<4xf32>
    %21 = vector.shape_cast %20 : vector<4xf32> to vector<1x4xf32>
    %cst_15 = arith.constant 0.00617283955 : f32
    %22 = vector.broadcast %cst_15 : f32 to vector<1x4xf32>
    %23 = arith.mulf %21, %22 : vector<1x4xf32>
    %24 = arith.mulf %19, %19 : vector<1x4xf32>
    %25 = arith.subf %23, %24 : vector<1x4xf32>
    %cst_16 = arith.constant 9.99999974E-6 : f32
    %26 = vector.broadcast %cst_16 : f32 to vector<1x4xf32>
    %27 = arith.addf %25, %26 : vector<1x4xf32>
    %28 = math.rsqrt %27 : vector<1x4xf32>
    %c0_17 = arith.constant 0 : index
    %c0_18 = arith.constant 0 : index
    %29 = vector.load %arg7[%c0_17, %c0_18] : memref<4x324xf32, #tpu.memory_space<vmem>>, vector<4x324xf32>
    %cst_19 = arith.constant dense<0.000000e+00> : vector<1x324xf32>
    %30 = tpu.matmul %19, %29, %cst_19 {dimension_numbers = #tpu.dot_dimension_numbers<[1], [0], [0], [1], [0, 0, 1, 1], [], []>} : vector<1x4xf32>, vector<4x324xf32>, vector<1x324xf32> -> vector<1x324xf32>
    %c0_20 = arith.constant 0 : index
    %c0_21 = arith.constant 0 : index
    %31 = vector.load %arg7[%c0_20, %c0_21] : memref<4x324xf32, #tpu.memory_space<vmem>>, vector<4x324xf32>
    %cst_22 = arith.constant dense<0.000000e+00> : vector<1x324xf32>
    %32 = tpu.matmul %28, %31, %cst_22 {dimension_numbers = #tpu.dot_dimension_numbers<[1], [0], [0], [1], [0, 0, 1, 1], [], []>} : vector<1x4xf32>, vector<4x324xf32>, vector<1x324xf32> -> vector<1x324xf32>
    %33 = vector.broadcast %30 : vector<1x324xf32> to vector<2x324xf32>
    %34 = arith.subf %11, %33 : vector<2x324xf32>
    %35 = vector.broadcast %32 : vector<1x324xf32> to vector<2x324xf32>
    %36 = arith.mulf %34, %35 : vector<2x324xf32>
    %c0_23 = arith.constant 0 : index
    %c0_24 = arith.constant 0 : index
    %37 = vector.load %arg4[%c0_23, %c0_24] : memref<324x1024xf32, #tpu.memory_space<vmem>>, vector<324x1024xf32>
    %cst_25 = arith.constant dense<0.000000e+00> : vector<2x1024xf32>
    %38 = tpu.matmul %36, %37, %cst_25 {dimension_numbers = #tpu.dot_dimension_numbers<[1], [0], [0], [1], [0, 0, 1, 1], [], []>} : vector<2x324xf32>, vector<324x1024xf32>, vector<2x1024xf32> -> vector<2x1024xf32>
    %39 = arith.subf %0, %38 : vector<2x1024xf32>
    %c0_26 = arith.constant 0 : index
    %c0_27 = arith.constant 0 : index
    %40 = vector.load %arg3[%c0_26, %c0_27] : memref<1024x324xf32, #tpu.memory_space<vmem>>, vector<1024x324xf32>
    %cst_28 = arith.constant dense<0.000000e+00> : vector<2x324xf32>
    %41 = tpu.matmul %39, %40, %cst_28 {dimension_numbers = #tpu.dot_dimension_numbers<[1], [0], [0], [1], [0, 0, 1, 1], [], []>} : vector<2x1024xf32>, vector<1024x324xf32>, vector<2x324xf32> -> vector<2x324xf32>
    %cst_29 = arith.constant 1.000000e-01 : f32
    %42 = vector.broadcast %cst_29 : f32 to vector<2x324xf32>
    %43 = arith.mulf %42, %41 : vector<2x324xf32>
    %44 = arith.addf %36, %43 : vector<2x324xf32>
    %c0_30 = arith.constant 0 : index
    %c0_31 = arith.constant 0 : index
    %45 = vector.load %arg5[%c0_30, %c0_31] : memref<1x324xf32, #tpu.memory_space<vmem>>, vector<1x324xf32>
    %46 = vector.broadcast %45 : vector<1x324xf32> to vector<2x324xf32>
    %47 = arith.subf %44, %46 : vector<2x324xf32>
    %cst_32 = arith.constant 0.000000e+00 : f32
    %48 = vector.broadcast %cst_32 : f32 to vector<2x324xf32>
    %49 = arith.maximumf %47, %48 : vector<2x324xf32>
    %c0_33 = arith.constant 0 : index
    %c0_34 = arith.constant 0 : index
    %50 = vector.load %arg11[%c0_33, %c0_34] : memref<2x324xf32, #tpu.memory_space<vmem>>, vector<2x324xf32>
    tpu.vector_store %arg11[%c0_33, %c0_34], %49 {strides = array<i32>} : memref<2x324xf32, #tpu.memory_space<vmem>>, vector<2x324xf32>,
    %c0_35 = arith.constant 0 : index
    %c0_36 = arith.constant 0 : index
    %51 = vector.load %arg8[%c0_35, %c0_36] : memref<324x4xf32, #tpu.memory_space<vmem>>, vector<324x4xf32>
    %cst_37 = arith.constant dense<0.000000e+00> : vector<2x4xf32>
    %52 = tpu.matmul %49, %51, %cst_37 {dimension_numbers = #tpu.dot_dimension_numbers<[1], [0], [0], [1], [0, 0, 1, 1], [], []>} : vector<2x324xf32>, vector<324x4xf32>, vector<2x4xf32> -> vector<2x4xf32>
    %c0_38 = arith.constant 0 : index
    %c0_39 = arith.constant 0 : index
    %53 = vector.load %arg9[%c0_38, %c0_39] : memref<1x4xf32, #tpu.memory_space<vmem>>, vector<1x4xf32>
    %54 = vector.broadcast %53 : vector<1x4xf32> to vector<2x4xf32>
    %55 = arith.addf %52, %54 : vector<2x4xf32>
    %c0_40 = arith.constant 0 : index
    %c0_41 = arith.constant 0 : index
    %56 = vector.load %arg10[%c0_40, %c0_41] : memref<2x4xf32, #tpu.memory_space<vmem>>, vector<2x4xf32>
    tpu.vector_store %arg10[%c0_40, %c0_41], %55 {strides = array<i32>} : memref<2x4xf32, #tpu.memory_space<vmem>>, vector<2x4xf32>,
    return
  }
}

</mosaic_0001>

<llo_original>
// kernel: forward.1
$region0: #{forward.1}
  #allocation0 [shape = 'u32[]', space=smem, size = 0x4, offset = 0x4, fixed_abs, tag = 'smem constant byte address 0x4 - core index']
  #allocation1 [shape = 'u32[144,128]{1,0:T(1,128)}', space=vmem, size = 0x12000, scoped, tag = 'internal scratch']
  %s0 = inlined_call_operand.vmem [shape: f32[2,1024], index: 0, kind: input, shape index: {}]
  %s1 = inlined_call_operand.vmem [shape: f32[1024,324], index: 1, kind: input, shape index: {}]
  %s2 = inlined_call_operand.vmem [shape: f32[1,324], index: 2, kind: input, shape index: {}]
  %s3 = inlined_call_operand.vmem [shape: f32[1024,324], index: 3, kind: input, shape index: {}]
  %s4 = inlined_call_operand.vmem [shape: f32[324,1024], index: 4, kind: input, shape index: {}]
  %s5 = inlined_call_operand.vmem [shape: f32[1,324], index: 5, kind: input, shape index: {}]
  %s6 = inlined_call_operand.vmem [shape: f32[324,4], index: 6, kind: input, shape index: {}]
  %s7 = inlined_call_operand.vmem [shape: f32[4,324], index: 7, kind: input, shape index: {}]
  %s8 = inlined_call_operand.vmem [shape: f32[324,4], index: 8, kind: input, shape index: {}]
  %s9 = inlined_call_operand.vmem [shape: f32[1,4], index: 9, kind: input, shape index: {}]
  %s10 = inlined_call_operand.hbm [shape: f32[2,4], index: 10, kind: output, shape index: {0}]
  %s11 = inlined_call_operand.vmem [shape: f32[2,324], index: 11, kind: output, shape index: {1}]
  %12 = xla_tuple %s10, %s11
  %s13 = sld [smem:[#allocation0]]
  $region58: #{forward.1} parent=0
    _
  %s15 = ssub.s32 1, %s13
  %s16 = scalar_select 0, %s15, %s13
  $region1: #{forward.1} parent=0
    #allocation2 [shape = 'u8[1024]{0}', space=vmem, size = 0x400, scoped, tag = 'output window, operand 0, single buffered']
    #allocation3 [shape = 's32[1]{0}', space=sflag, size = 0x4, scoped, tag = 'scoped memory for forward.1']
    %17 = vsyncpa [#allocation3], 0
    // Predicated region
    $region2: #{forward.1} parent=1 // pred_check
      _
    $region3: #{forward.1} parent=1 // pred_check_branch
      %19 = sbr.rel (0) target = $region5
    $region4: #{forward.1} parent=1 // pred_region
      _
    $region5: #{forward.1} parent=1 // pred_fallthru
      _
    // Predicated region
    $region6: #{forward.1} parent=1 // pred_check
      _
    $region7: #{forward.1} parent=1 // pred_check_branch
      %21 = sbr.rel (0) target = $region9
    $region8: #{forward.1} parent=1 // pred_region
      _
    $region9: #{forward.1} parent=1 // pred_fallthru
      _
    // Predicated region
    $region10: #{forward.1} parent=1 // pred_check
      _
    $region11: #{forward.1} parent=1 // pred_check_branch
      %23 = sbr.rel (0) target = $region13
    $region12: #{forward.1} parent=1 // pred_region
      _
    $region13: #{forward.1} parent=1 // pred_fallthru
      _
    // Predicated region
    $region14: #{forward.1} parent=1 // pred_check
      _
    $region15: #{forward.1} parent=1 // pred_check_branch
      %25 = sbr.rel (0) target = $region17
    $region16: #{forward.1} parent=1 // pred_region
      _
    $region17: #{forward.1} parent=1 // pred_fallthru
      _
    // Predicated region
    $region18: #{forward.1} parent=1 // pred_check
      _
    $region19: #{forward.1} parent=1 // pred_check_branch
      %27 = sbr.rel (0) target = $region21
    $region20: #{forward.1} parent=1 // pred_region
      _
    $region21: #{forward.1} parent=1 // pred_fallthru
      _
    // Predicated region
    $region22: #{forward.1} parent=1 // pred_check
      _
    $region23: #{forward.1} parent=1 // pred_check_branch
      %29 = sbr.rel (0) target = $region25
    $region24: #{forward.1} parent=1 // pred_region
      _
    $region25: #{forward.1} parent=1 // pred_fallthru
      _
    // Predicated region
    $region26: #{forward.1} parent=1 // pred_check
      _
    $region27: #{forward.1} parent=1 // pred_check_branch
      %31 = sbr.rel (0) target = $region29
    $region28: #{forward.1} parent=1 // pred_region
      _
    $region29: #{forward.1} parent=1 // pred_fallthru
      _
    // Predicated region
    $region30: #{forward.1} parent=1 // pred_check
      _
    $region31: #{forward.1} parent=1 // pred_check_branch
      %33 = sbr.rel (0) target = $region33
    $region32: #{forward.1} parent=1 // pred_region
      _
    $region33: #{forward.1} parent=1 // pred_fallthru
      _
    // Predicated region
    $region34: #{forward.1} parent=1 // pred_check
      _
    $region35: #{forward.1} parent=1 // pred_check_branch
      %35 = sbr.rel (0) target = $region37
    $region36: #{forward.1} parent=1 // pred_region
      _
    $region37: #{forward.1} parent=1 // pred_fallthru
      _
    // Predicated region
    $region38: #{forward.1} parent=1 // pred_check
      _
    $region39: #{forward.1} parent=1 // pred_check_branch
      %37 = sbr.rel (0) target = $region41
    $region40: #{forward.1} parent=1 // pred_region
      _
    $region41: #{forward.1} parent=1 // pred_fallthru
      _
    %v38 = vld [vmem:[%s0] sm:$0xff]
    %v39 = vld [vmem:[%s0 + $0x8] sm:$0xff]
    %v40 = vld [vmem:[%s1] sm:$0xff]
    %v41 = vld [vmem:[%s1 + $0x8] sm:$0xff]
    %v42 = vld [vmem:[%s1 + $0x10] sm:$0xff]
    %v43 = vld [vmem:[%s1 + $0x18] sm:$0xff]
    %v44 = vld [vmem:[%s1 + $0x20] sm:$0xff]
    %v45 = vld [vmem:[%s1 + $0x28] sm:$0xff]
    %v46 = vld [vmem:[%s1 + $0x30] sm:$0xff]
    %v47 = vld [vmem:[%s1 + $0x38] sm:$0xff]
    %v48 = vld [vmem:[%s1 + $0x40] sm:$0xff]
    %v49 = vld [vmem:[%s1 + $0x48] sm:$0xff]
    %v50 = vld [vmem:[%s1 + $0x50] sm:$0xff]
    %v51 = vld [vmem:[%s1 + $0x58] sm:$0xff]
    %v52 = vld [vmem:[%s1 + $0x60] sm:$0xff]
    %v53 = vld [vmem:[%s1 + $0x68] sm:$0xff]
    %v54 = vld [vmem:[%s1 + $0x70] sm:$0xff]
    %v55 = vld [vmem:[%s1 + $0x78] sm:$0xff]
    %v56 = vld [vmem:[%s1 + $0x80] sm:$0xff]
    %v57 = vld [vmem:[%s1 + $0x88] sm:$0xff]
    %v58 = vld [vmem:[%s1 + $0x90] sm:$0xff]
    %v59 = vld [vmem:[%s1 + $0x98] sm:$0xff]
    %v60 = vld [vmem:[%s1 + $0xa0] sm:$0xff]
    %v61 = vld [vmem:[%s1 + $0xa8] sm:$0xff]
    %v62 = vld [vmem:[%s1 + $0xb0] sm:$0xff]
    %v63 = vld [vmem:[%s1 + $0xb8] sm:$0xff]
    %v64 = vld [vmem:[%s1 + $0xc0] sm:$0xff]
    %v65 = vld [vmem:[%s1 + $0xc8] sm:$0xff]
    %v66 = vld [vmem:[%s1 + $0xd0] sm:$0xff]
    %v67 = vld [vmem:[%s1 + $0xd8] sm:$0xff]
    %v68 = vld [vmem:[%s1 + $0xe0] sm:$0xff]
    %v69 = vld [vmem:[%s1 + $0xe8] sm:$0xff]
    %v70 = vld [vmem:[%s1 + $0xf0] sm:$0xff]
    %v71 = vld [vmem:[%s1 + $0xf8] sm:$0xff]
    %v72 = vld [vmem:[%s1 + $0x100] sm:$0xff]
    %v73 = vld [vmem:[%s1 + $0x108] sm:$0xff]
    %v74 = vld [vmem:[%s1 + $0x110] sm:$0xff]
    %v75 = vld [vmem:[%s1 + $0x118] sm:$0xff]
    %v76 = vld [vmem:[%s1 + $0x120] sm:$0xff]
    %v77 = vld [vmem:[%s1 + $0x128] sm:$0xff]
    %v78 = vld [vmem:[%s1 + $0x130] sm:$0xff]
    %v79 = vld [vmem:[%s1 + $0x138] sm:$0xff]
    %v80 = vld [vmem:[%s1 + $0x140] sm:$0xff]
    %v81 = vld [vmem:[%s1 + $0x148] sm:$0xff]
    %v82 = vld [vmem:[%s1 + $0x150] sm:$0xff]
    %v83 = vld [vmem:[%s1 + $0x158] sm:$0xff]
    %v84 = vld [vmem:[%s1 + $0x160] sm:$0xff]
    %v85 = vld [vmem:[%s1 + $0x168] sm:$0xff]
    %v86 = vld [vmem:[%s1 + $0x170] sm:$0xff]
    %v87 = vld [vmem:[%s1 + $0x178] sm:$0xff]
    %v88 = vld [vmem:[%s1 + $0x180] sm:$0xff]
    %v89 = vld [vmem:[%s1 + $0x188] sm:$0xff]
    %v90 = vld [vmem:[%s1 + $0x190] sm:$0xff]
    %v91 = vld [vmem:[%s1 + $0x198] sm:$0xff]
    %v92 = vld [vmem:[%s1 + $0x1a0] sm:$0xff]
    %v93 = vld [vmem:[%s1 + $0x1a8] sm:$0xff]
    %v94 = vld [vmem:[%s1 + $0x1b0] sm:$0xff]
    %v95 = vld [vmem:[%s1 + $0x1b8] sm:$0xff]
    %v96 = vld [vmem:[%s1 + $0x1c0] sm:$0xff]
    %v97 = vld [vmem:[%s1 + $0x1c8] sm:$0xff]
    %v98 = vld [vmem:[%s1 + $0x1d0] sm:$0xff]
    %v99 = vld [vmem:[%s1 + $0x1d8] sm:$0xff]
    %v100 = vld [vmem:[%s1 + $0x1e0] sm:$0xff]
    %v101 = vld [vmem:[%s1 + $0x1e8] sm:$0xff]
    %v102 = vld [vmem:[%s1 + $0x1f0] sm:$0xff]
    %v103 = vld [vmem:[%s1 + $0x1f8] sm:$0xff]
    %v104 = vld [vmem:[%s1 + $0x200] sm:$0xff]
    %v105 = vld [vmem:[%s1 + $0x208] sm:$0xff]
    %v106 = vld [vmem:[%s1 + $0x210] sm:$0xff]
    %v107 = vld [vmem:[%s1 + $0x218] sm:$0xff]
    %v108 = vld [vmem:[%s1 + $0x220] sm:$0xff]
    %v109 = vld [vmem:[%s1 + $0x228] sm:$0xff]
    %v110 = vld [vmem:[%s1 + $0x230] sm:$0xff]
    %v111 = vld [vmem:[%s1 + $0x238] sm:$0xff]
    %v112 = vld [vmem:[%s1 + $0x240] sm:$0xff]
    %v113 = vld [vmem:[%s1 + $0x248] sm:$0xff]
    %v114 = vld [vmem:[%s1 + $0x250] sm:$0xff]
    %v115 = vld [vmem:[%s1 + $0x258] sm:$0xff]
    %v116 = vld [vmem:[%s1 + $0x260] sm:$0xff]
    %v117 = vld [vmem:[%s1 + $0x268] sm:$0xff]
    %v118 = vld [vmem:[%s1 + $0x270] sm:$0xff]
    %v119 = vld [vmem:[%s1 + $0x278] sm:$0xff]
    %v120 = vld [vmem:[%s1 + $0x280] sm:$0xff]
    %v121 = vld [vmem:[%s1 + $0x288] sm:$0xff]
    %v122 = vld [vmem:[%s1 + $0x290] sm:$0xff]
    %v123 = vld [vmem:[%s1 + $0x298] sm:$0xff]
    %v124 = vld [vmem:[%s1 + $0x2a0] sm:$0xff]
    %v125 = vld [vmem:[%s1 + $0x2a8] sm:$0xff]
    %v126 = vld [vmem:[%s1 + $0x2b0] sm:$0xff]
    %v127 = vld [vmem:[%s1 + $0x2b8] sm:$0xff]
    %v128 = vld [vmem:[%s1 + $0x2c0] sm:$0xff]
    %v129 = vld [vmem:[%s1 + $0x2c8] sm:$0xff]
    %v130 = vld [vmem:[%s1 + $0x2d0] sm:$0xff]
    %v131 = vld [vmem:[%s1 + $0x2d8] sm:$0xff]
    %v132 = vld [vmem:[%s1 + $0x2e0] sm:$0xff]
    %v133 = vld [vmem:[%s1 + $0x2e8] sm:$0xff]
    %v134 = vld [vmem:[%s1 + $0x2f0] sm:$0xff]
    %v135 = vld [vmem:[%s1 + $0x2f8] sm:$0xff]
    %v136 = vld [vmem:[%s1 + $0x300] sm:$0xff]
    %v137 = vld [vmem:[%s1 + $0x308] sm:$0xff]
    %v138 = vld [vmem:[%s1 + $0x310] sm:$0xff]
    %v139 = vld [vmem:[%s1 + $0x318] sm:$0xff]
    %v140 = vld [vmem:[%s1 + $0x320] sm:$0xff]
    %v141 = vld [vmem:[%s1 + $0x328] sm:$0xff]
    %v142 = vld [vmem:[%s1 + $0x330] sm:$0xff]
    %v143 = vld [vmem:[%s1 + $0x338] sm:$0xff]
    %v144 = vld [vmem:[%s1 + $0x340] sm:$0xff]
    %v145 = vld [vmem:[%s1 + $0x348] sm:$0xff]
    %v146 = vld [vmem:[%s1 + $0x350] sm:$0xff]
    %v147 = vld [vmem:[%s1 + $0x358] sm:$0xff]
    %v148 = vld [vmem:[%s1 + $0x360] sm:$0xff]
    %v149 = vld [vmem:[%s1 + $0x368] sm:$0xff]
    %v150 = vld [vmem:[%s1 + $0x370] sm:$0xff]
    %v151 = vld [vmem:[%s1 + $0x378] sm:$0xff]
    %v152 = vld [vmem:[%s1 + $0x380] sm:$0xff]
    %v153 = vld [vmem:[%s1 + $0x388] sm:$0xff]
    %v154 = vld [vmem:[%s1 + $0x390] sm:$0xff]
    %v155 = vld [vmem:[%s1 + $0x398] sm:$0xff]
    %v156 = vld [vmem:[%s1 + $0x3a0] sm:$0xff]
    %v157 = vld [vmem:[%s1 + $0x3a8] sm:$0xff]
    %v158 = vld [vmem:[%s1 + $0x3b0] sm:$0xff]
    %v159 = vld [vmem:[%s1 + $0x3b8] sm:$0xff]
    %v160 = vld [vmem:[%s1 + $0x3c0] sm:$0xff]
    %v161 = vld [vmem:[%s1 + $0x3c8] sm:$0xff]
    %v162 = vld [vmem:[%s1 + $0x3d0] sm:$0xff]
    %v163 = vld [vmem:[%s1 + $0x3d8] sm:$0xff]
    %v164 = vld [vmem:[%s1 + $0x3e0] sm:$0xff]
    %v165 = vld [vmem:[%s1 + $0x3e8] sm:$0xff]
    %v166 = vld [vmem:[%s1 + $0x3f0] sm:$0xff]
    %v167 = vld [vmem:[%s1 + $0x3f8] sm:$0xff]
    %v168 = vld [vmem:[%s1 + $0x400] sm:$0xff]
    %v169 = vld [vmem:[%s1 + $0x408] sm:$0xff]
    %v170 = vld [vmem:[%s1 + $0x410] sm:$0xff]
    %v171 = vld [vmem:[%s1 + $0x418] sm:$0xff]
    %v172 = vld [vmem:[%s1 + $0x420] sm:$0xff]
    %v173 = vld [vmem:[%s1 + $0x428] sm:$0xff]
    %v174 = vld [vmem:[%s1 + $0x430] sm:$0xff]
    %v175 = vld [vmem:[%s1 + $0x438] sm:$0xff]
    %v176 = vld [vmem:[%s1 + $0x440] sm:$0xff]
    %v177 = vld [vmem:[%s1 + $0x448] sm:$0xff]
    %v178 = vld [vmem:[%s1 + $0x450] sm:$0xff]
    %v179 = vld [vmem:[%s1 + $0x458] sm:$0xff]
    %v180 = vld [vmem:[%s1 + $0x460] sm:$0xff]
    %v181 = vld [vmem:[%s1 + $0x468] sm:$0xff]
    %v182 = vld [vmem:[%s1 + $0x470] sm:$0xff]
    %v183 = vld [vmem:[%s1 + $0x478] sm:$0xff]
    %v184 = vld [vmem:[%s1 + $0x480] sm:$0xff]
    %v185 = vld [vmem:[%s1 + $0x488] sm:$0xff]
    %v186 = vld [vmem:[%s1 + $0x490] sm:$0xff]
    %v187 = vld [vmem:[%s1 + $0x498] sm:$0xff]
    %v188 = vld [vmem:[%s1 + $0x4a0] sm:$0xff]
    %v189 = vld [vmem:[%s1 + $0x4a8] sm:$0xff]
    %v190 = vld [vmem:[%s1 + $0x4b0] sm:$0xff]
    %v191 = vld [vmem:[%s1 + $0x4b8] sm:$0xff]
    %v192 = vld [vmem:[%s1 + $0x4c0] sm:$0xff]
    %v193 = vld [vmem:[%s1 + $0x4c8] sm:$0xff]
    %v194 = vld [vmem:[%s1 + $0x4d0] sm:$0xff]
    %v195 = vld [vmem:[%s1 + $0x4d8] sm:$0xff]
    %v196 = vld [vmem:[%s1 + $0x4e0] sm:$0xff]
    %v197 = vld [vmem:[%s1 + $0x4e8] sm:$0xff]
    %v198 = vld [vmem:[%s1 + $0x4f0] sm:$0xff]
    %v199 = vld [vmem:[%s1 + $0x4f8] sm:$0xff]
    %v200 = vld [vmem:[%s1 + $0x500] sm:$0xff]
    %v201 = vld [vmem:[%s1 + $0x508] sm:$0xff]
    %v202 = vld [vmem:[%s1 + $0x510] sm:$0xff]
    %v203 = vld [vmem:[%s1 + $0x518] sm:$0xff]
    %v204 = vld [vmem:[%s1 + $0x520] sm:$0xff]
    %v205 = vld [vmem:[%s1 + $0x528] sm:$0xff]
    %v206 = vld [vmem:[%s1 + $0x530] sm:$0xff]
    %v207 = vld [vmem:[%s1 + $0x538] sm:$0xff]
    %v208 = vld [vmem:[%s1 + $0x540] sm:$0xff]
    %v209 = vld [vmem:[%s1 + $0x548] sm:$0xff]
    %v210 = vld [vmem:[%s1 + $0x550] sm:$0xff]
    %v211 = vld [vmem:[%s1 + $0x558] sm:$0xff]
    %v212 = vld [vmem:[%s1 + $0x560] sm:$0xff]
    %v213 = vld [vmem:[%s1 + $0x568] sm:$0xff]
    %v214 = vld [vmem:[%s1 + $0x570] sm:$0xff]
    %v215 = vld [vmem:[%s1 + $0x578] sm:$0xff]
    %v216 = vld [vmem:[%s1 + $0x580] sm:$0xff]
    %v217 = vld [vmem:[%s1 + $0x588] sm:$0xff]
    %v218 = vld [vmem:[%s1 + $0x590] sm:$0xff]
    %v219 = vld [vmem:[%s1 + $0x598] sm:$0xff]
    %v220 = vld [vmem:[%s1 + $0x5a0] sm:$0xff]
    %v221 = vld [vmem:[%s1 + $0x5a8] sm:$0xff]
    %v222 = vld [vmem:[%s1 + $0x5b0] sm:$0xff]
    %v223 = vld [vmem:[%s1 + $0x5b8] sm:$0xff]
    %v224 = vld [vmem:[%s1 + $0x5c0] sm:$0xff]
    %v225 = vld [vmem:[%s1 + $0x5c8] sm:$0xff]
    %v226 = vld [vmem:[%s1 + $0x5d0] sm:$0xff]
    %v227 = vld [vmem:[%s1 + $0x5d8] sm:$0xff]
    %v228 = vld [vmem:[%s1 + $0x5e0] sm:$0xff]
    %v229 = vld [vmem:[%s1 + $0x5e8] sm:$0xff]
    %v230 = vld [vmem:[%s1 + $0x5f0] sm:$0xff]
    %v231 = vld [vmem:[%s1 + $0x5f8] sm:$0xff]
    %v232 = vld [vmem:[%s1 + $0x600] sm:$0xff]
    %v233 = vld [vmem:[%s1 + $0x608] sm:$0xff]
    %v234 = vld [vmem:[%s1 + $0x610] sm:$0xff]
    %v235 = vld [vmem:[%s1 + $0x618] sm:$0xff]
    %v236 = vld [vmem:[%s1 + $0x620] sm:$0xff]
    %v237 = vld [vmem:[%s1 + $0x628] sm:$0xff]
    %v238 = vld [vmem:[%s1 + $0x630] sm:$0xff]
    %v239 = vld [vmem:[%s1 + $0x638] sm:$0xff]
    %v240 = vld [vmem:[%s1 + $0x640] sm:$0xff]
    %v241 = vld [vmem:[%s1 + $0x648] sm:$0xff]
    %v242 = vld [vmem:[%s1 + $0x650] sm:$0xff]
    %v243 = vld [vmem:[%s1 + $0x658] sm:$0xff]
    %v244 = vld [vmem:[%s1 + $0x660] sm:$0xff]
    %v245 = vld [vmem:[%s1 + $0x668] sm:$0xff]
    %v246 = vld [vmem:[%s1 + $0x670] sm:$0xff]
    %v247 = vld [vmem:[%s1 + $0x678] sm:$0xff]
    %v248 = vld [vmem:[%s1 + $0x680] sm:$0xff]
    %v249 = vld [vmem:[%s1 + $0x688] sm:$0xff]
    %v250 = vld [vmem:[%s1 + $0x690] sm:$0xff]
    %v251 = vld [vmem:[%s1 + $0x698] sm:$0xff]
    %v252 = vld [vmem:[%s1 + $0x6a0] sm:$0xff]
    %v253 = vld [vmem:[%s1 + $0x6a8] sm:$0xff]
    %v254 = vld [vmem:[%s1 + $0x6b0] sm:$0xff]
    %v255 = vld [vmem:[%s1 + $0x6b8] sm:$0xff]
    %v256 = vld [vmem:[%s1 + $0x6c0] sm:$0xff]
    %v257 = vld [vmem:[%s1 + $0x6c8] sm:$0xff]
    %v258 = vld [vmem:[%s1 + $0x6d0] sm:$0xff]
    %v259 = vld [vmem:[%s1 + $0x6d8] sm:$0xff]
    %v260 = vld [vmem:[%s1 + $0x6e0] sm:$0xff]
    %v261 = vld [vmem:[%s1 + $0x6e8] sm:$0xff]
    %v262 = vld [vmem:[%s1 + $0x6f0] sm:$0xff]
    %v263 = vld [vmem:[%s1 + $0x6f8] sm:$0xff]
    %v264 = vld [vmem:[%s1 + $0x700] sm:$0xff]
    %v265 = vld [vmem:[%s1 + $0x708] sm:$0xff]
    %v266 = vld [vmem:[%s1 + $0x710] sm:$0xff]
    %v267 = vld [vmem:[%s1 + $0x718] sm:$0xff]
    %v268 = vld [vmem:[%s1 + $0x720] sm:$0xff]
    %v269 = vld [vmem:[%s1 + $0x728] sm:$0xff]
    %v270 = vld [vmem:[%s1 + $0x730] sm:$0xff]
    %v271 = vld [vmem:[%s1 + $0x738] sm:$0xff]
    %v272 = vld [vmem:[%s1 + $0x740] sm:$0xff]
    %v273 = vld [vmem:[%s1 + $0x748] sm:$0xff]
    %v274 = vld [vmem:[%s1 + $0x750] sm:$0xff]
    %v275 = vld [vmem:[%s1 + $0x758] sm:$0xff]
    %v276 = vld [vmem:[%s1 + $0x760] sm:$0xff]
    %v277 = vld [vmem:[%s1 + $0x768] sm:$0xff]
    %v278 = vld [vmem:[%s1 + $0x770] sm:$0xff]
    %v279 = vld [vmem:[%s1 + $0x778] sm:$0xff]
    %v280 = vld [vmem:[%s1 + $0x780] sm:$0xff]
    %v281 = vld [vmem:[%s1 + $0x788] sm:$0xff]
    %v282 = vld [vmem:[%s1 + $0x790] sm:$0xff]
    %v283 = vld [vmem:[%s1 + $0x798] sm:$0xff]
    %v284 = vld [vmem:[%s1 + $0x7a0] sm:$0xff]
    %v285 = vld [vmem:[%s1 + $0x7a8] sm:$0xff]
    %v286 = vld [vmem:[%s1 + $0x7b0] sm:$0xff]
    %v287 = vld [vmem:[%s1 + $0x7b8] sm:$0xff]
    %v288 = vld [vmem:[%s1 + $0x7c0] sm:$0xff]
    %v289 = vld [vmem:[%s1 + $0x7c8] sm:$0xff]
    %v290 = vld [vmem:[%s1 + $0x7d0] sm:$0xff]
    %v291 = vld [vmem:[%s1 + $0x7d8] sm:$0xff]
    %v292 = vld [vmem:[%s1 + $0x7e0] sm:$0xff]
    %v293 = vld [vmem:[%s1 + $0x7e8] sm:$0xff]
    %v294 = vld [vmem:[%s1 + $0x7f0] sm:$0xff]
    %v295 = vld [vmem:[%s1 + $0x7f8] sm:$0xff]
    %v296 = vld [vmem:[%s1 + $0x800] sm:$0xff]
    %v297 = vld [vmem:[%s1 + $0x808] sm:$0xff]
    %v298 = vld [vmem:[%s1 + $0x810] sm:$0xff]
    %v299 = vld [vmem:[%s1 + $0x818] sm:$0xff]
    %v300 = vld [vmem:[%s1 + $0x820] sm:$0xff]
    %v301 = vld [vmem:[%s1 + $0x828] sm:$0xff]
    %v302 = vld [vmem:[%s1 + $0x830] sm:$0xff]
    %v303 = vld [vmem:[%s1 + $0x838] sm:$0xff]
    %v304 = vld [vmem:[%s1 + $0x840] sm:$0xff]
    %v305 = vld [vmem:[%s1 + $0x848] sm:$0xff]
    %v306 = vld [vmem:[%s1 + $0x850] sm:$0xff]
    %v307 = vld [vmem:[%s1 + $0x858] sm:$0xff]
    %v308 = vld [vmem:[%s1 + $0x860] sm:$0xff]
    %v309 = vld [vmem:[%s1 + $0x868] sm:$0xff]
    %v310 = vld [vmem:[%s1 + $0x870] sm:$0xff]
    %v311 = vld [vmem:[%s1 + $0x878] sm:$0xff]
    %v312 = vld [vmem:[%s1 + $0x880] sm:$0xff]
    %v313 = vld [vmem:[%s1 + $0x888] sm:$0xff]
    %v314 = vld [vmem:[%s1 + $0x890] sm:$0xff]
    %v315 = vld [vmem:[%s1 + $0x898] sm:$0xff]
    %v316 = vld [vmem:[%s1 + $0x8a0] sm:$0xff]
    %v317 = vld [vmem:[%s1 + $0x8a8] sm:$0xff]
    %v318 = vld [vmem:[%s1 + $0x8b0] sm:$0xff]
    %v319 = vld [vmem:[%s1 + $0x8b8] sm:$0xff]
    %v320 = vld [vmem:[%s1 + $0x8c0] sm:$0xff]
    %v321 = vld [vmem:[%s1 + $0x8c8] sm:$0xff]
    %v322 = vld [vmem:[%s1 + $0x8d0] sm:$0xff]
    %v323 = vld [vmem:[%s1 + $0x8d8] sm:$0xff]
    %v324 = vld [vmem:[%s1 + $0x8e0] sm:$0xff]
    %v325 = vld [vmem:[%s1 + $0x8e8] sm:$0xff]
    %v326 = vld [vmem:[%s1 + $0x8f0] sm:$0xff]
    %v327 = vld [vmem:[%s1 + $0x8f8] sm:$0xff]
    %v328 = vld [vmem:[%s1 + $0x900] sm:$0xff]
    %v329 = vld [vmem:[%s1 + $0x908] sm:$0xff]
    %v330 = vld [vmem:[%s1 + $0x910] sm:$0xff]
    %v331 = vld [vmem:[%s1 + $0x918] sm:$0xff]
    %v332 = vld [vmem:[%s1 + $0x920] sm:$0xff]
    %v333 = vld [vmem:[%s1 + $0x928] sm:$0xff]
    %v334 = vld [vmem:[%s1 + $0x930] sm:$0xff]
    %v335 = vld [vmem:[%s1 + $0x938] sm:$0xff]
    %v336 = vld [vmem:[%s1 + $0x940] sm:$0xff]
    %v337 = vld [vmem:[%s1 + $0x948] sm:$0xff]
    %v338 = vld [vmem:[%s1 + $0x950] sm:$0xff]
    %v339 = vld [vmem:[%s1 + $0x958] sm:$0xff]
    %v340 = vld [vmem:[%s1 + $0x960] sm:$0xff]
    %v341 = vld [vmem:[%s1 + $0x968] sm:$0xff]
    %v342 = vld [vmem:[%s1 + $0x970] sm:$0xff]
    %v343 = vld [vmem:[%s1 + $0x978] sm:$0xff]
    %v344 = vld [vmem:[%s1 + $0x980] sm:$0xff]
    %v345 = vld [vmem:[%s1 + $0x988] sm:$0xff]
    %v346 = vld [vmem:[%s1 + $0x990] sm:$0xff]
    %v347 = vld [vmem:[%s1 + $0x998] sm:$0xff]
    %v348 = vld [vmem:[%s1 + $0x9a0] sm:$0xff]
    %v349 = vld [vmem:[%s1 + $0x9a8] sm:$0xff]
    %v350 = vld [vmem:[%s1 + $0x9b0] sm:$0xff]
    %v351 = vld [vmem:[%s1 + $0x9b8] sm:$0xff]
    %v352 = vld [vmem:[%s1 + $0x9c0] sm:$0xff]
    %v353 = vld [vmem:[%s1 + $0x9c8] sm:$0xff]
    %v354 = vld [vmem:[%s1 + $0x9d0] sm:$0xff]
    %v355 = vld [vmem:[%s1 + $0x9d8] sm:$0xff]
    %v356 = vld [vmem:[%s1 + $0x9e0] sm:$0xff]
    %v357 = vld [vmem:[%s1 + $0x9e8] sm:$0xff]
    %v358 = vld [vmem:[%s1 + $0x9f0] sm:$0xff]
    %v359 = vld [vmem:[%s1 + $0x9f8] sm:$0xff]
    %v360 = vld [vmem:[%s1 + $0xa00] sm:$0xff]
    %v361 = vld [vmem:[%s1 + $0xa08] sm:$0xff]
    %v362 = vld [vmem:[%s1 + $0xa10] sm:$0xff]
    %v363 = vld [vmem:[%s1 + $0xa18] sm:$0xff]
    %v364 = vld [vmem:[%s1 + $0xa20] sm:$0xff]
    %v365 = vld [vmem:[%s1 + $0xa28] sm:$0xff]
    %v366 = vld [vmem:[%s1 + $0xa30] sm:$0xff]
    %v367 = vld [vmem:[%s1 + $0xa38] sm:$0xff]
    %v368 = vld [vmem:[%s1 + $0xa40] sm:$0xff]
    %v369 = vld [vmem:[%s1 + $0xa48] sm:$0xff]
    %v370 = vld [vmem:[%s1 + $0xa50] sm:$0xff]
    %v371 = vld [vmem:[%s1 + $0xa58] sm:$0xff]
    %v372 = vld [vmem:[%s1 + $0xa60] sm:$0xff]
    %v373 = vld [vmem:[%s1 + $0xa68] sm:$0xff]
    %v374 = vld [vmem:[%s1 + $0xa70] sm:$0xff]
    %v375 = vld [vmem:[%s1 + $0xa78] sm:$0xff]
    %v376 = vld [vmem:[%s1 + $0xa80] sm:$0xff]
    %v377 = vld [vmem:[%s1 + $0xa88] sm:$0xff]
    %v378 = vld [vmem:[%s1 + $0xa90] sm:$0xff]
    %v379 = vld [vmem:[%s1 + $0xa98] sm:$0xff]
    %v380 = vld [vmem:[%s1 + $0xaa0] sm:$0xff]
    %v381 = vld [vmem:[%s1 + $0xaa8] sm:$0xff]
    %v382 = vld [vmem:[%s1 + $0xab0] sm:$0xff]
    %v383 = vld [vmem:[%s1 + $0xab8] sm:$0xff]
    %v384 = vld [vmem:[%s1 + $0xac0] sm:$0xff]
    %v385 = vld [vmem:[%s1 + $0xac8] sm:$0xff]
    %v386 = vld [vmem:[%s1 + $0xad0] sm:$0xff]
    %v387 = vld [vmem:[%s1 + $0xad8] sm:$0xff]
    %v388 = vld [vmem:[%s1 + $0xae0] sm:$0xff]
    %v389 = vld [vmem:[%s1 + $0xae8] sm:$0xff]
    %v390 = vld [vmem:[%s1 + $0xaf0] sm:$0xff]
    %v391 = vld [vmem:[%s1 + $0xaf8] sm:$0xff]
    %v392 = vld [vmem:[%s1 + $0xb00] sm:$0xff]
    %v393 = vld [vmem:[%s1 + $0xb08] sm:$0xff]
    %v394 = vld [vmem:[%s1 + $0xb10] sm:$0xff]
    %v395 = vld [vmem:[%s1 + $0xb18] sm:$0xff]
    %v396 = vld [vmem:[%s1 + $0xb20] sm:$0xff]
    %v397 = vld [vmem:[%s1 + $0xb28] sm:$0xff]
    %v398 = vld [vmem:[%s1 + $0xb30] sm:$0xff]
    %v399 = vld [vmem:[%s1 + $0xb38] sm:$0xff]
    %v400 = vld [vmem:[%s1 + $0xb40] sm:$0xff]
    %v401 = vld [vmem:[%s1 + $0xb48] sm:$0xff]
    %v402 = vld [vmem:[%s1 + $0xb50] sm:$0xff]
    %v403 = vld [vmem:[%s1 + $0xb58] sm:$0xff]
    %v404 = vld [vmem:[%s1 + $0xb60] sm:$0xff]
    %v405 = vld [vmem:[%s1 + $0xb68] sm:$0xff]
    %v406 = vld [vmem:[%s1 + $0xb70] sm:$0xff]
    %v407 = vld [vmem:[%s1 + $0xb78] sm:$0xff]
    %v408 = vld [vmem:[%s1 + $0xb80] sm:$0xff]
    %v409 = vld [vmem:[%s1 + $0xb88] sm:$0xff]
    %v410 = vld [vmem:[%s1 + $0xb90] sm:$0xff]
    %v411 = vld [vmem:[%s1 + $0xb98] sm:$0xff]
    %v412 = vld [vmem:[%s1 + $0xba0] sm:$0xff]
    %v413 = vld [vmem:[%s1 + $0xba8] sm:$0xff]
    %v414 = vld [vmem:[%s1 + $0xbb0] sm:$0xff]
    %v415 = vld [vmem:[%s1 + $0xbb8] sm:$0xff]
    %v416 = vld [vmem:[%s1 + $0xbc0] sm:$0xff]
    %v417 = vld [vmem:[%s1 + $0xbc8] sm:$0xff]
    %v418 = vld [vmem:[%s1 + $0xbd0] sm:$0xff]
    %v419 = vld [vmem:[%s1 + $0xbd8] sm:$0xff]
    %v420 = vld [vmem:[%s1 + $0xbe0] sm:$0xff]
    %v421 = vld [vmem:[%s1 + $0xbe8] sm:$0xff]
    %v422 = vld [vmem:[%s1 + $0xbf0] sm:$0xff]
    %v423 = vld [vmem:[%s1 + $0xbf8] sm:$0xff]
    %v426 = vcombine.high %v38, %v38
    %v428 = vunpack.c.l.s4 1983009808
    %v429 = vunpack.c.0.s8 %v428
    %v430 = vlaneseq
    %v431 = vshrl.u32 %v430, 7
    %v432 = vsub.s32 %v429, %v431
    %v433 = vrot.slane %v38, %v432
    %v435 = vunpack.c.l.s4 1983009808
    %v436 = vunpack.c.0.s8 %v435
    %v437 = vlaneseq
    %v438 = vshrl.u32 %v437, 7
    %v439 = vsub.s32 %v436, %v438
    %v440 = vrot.slane %v426, %v439
    %v441 = vcombine.high %v433, %v433
    %v442 = vcombine.high %v440, %v440
    %v443 = vcombine.high %v39, %v39
    %v445 = vunpack.c.l.s4 1983009808
    %v446 = vunpack.c.0.s8 %v445
    %v447 = vlaneseq
    %v448 = vshrl.u32 %v447, 7
    %v449 = vsub.s32 %v446, %v448
    %v450 = vrot.slane %v39, %v449
    %v452 = vunpack.c.l.s4 1983009808
    %v453 = vunpack.c.0.s8 %v452
    %v454 = vlaneseq
    %v455 = vshrl.u32 %v454, 7
    %v456 = vsub.s32 %v453, %v455
    %v457 = vrot.slane %v443, %v456
    %v458 = vcombine.high %v450, %v450
    %v459 = vcombine.high %v457, %v457
    %468 = vmatprep.subr.mxu0 %v41
    %469 = vmatpush1.msra.mxu0 %v40
    %470 = vmatprep.subr.mxu0 %v44
    %471 = vmatpush1.msra.mxu0 %v43
    %472 = vmatprep.subr.mxu0 %v47
    %473 = vmatpush1.msra.mxu0 %v46
    %474 = vmatprep.subr.mxu0 %v50
    %475 = vmatpush1.msra.mxu0 %v49
    %476 = vmatprep.subr.mxu0 %v53
    %477 = vmatpush1.msra.mxu0 %v52
    %478 = vmatprep.subr.mxu0 %v56
    %479 = vmatpush1.msra.mxu0 %v55
    %480 = vmatprep.subr.mxu0 %v59
    %481 = vmatpush1.msra.mxu0 %v58
    %482 = vmatprep.subr.mxu0 %v62
    %483 = vmatpush1.msra.mxu0 %v61
    %484 = vmatprep.subr.mxu0 %v65
    %485 = vmatpush1.msra.mxu0 %v64
    %486 = vmatprep.subr.mxu0 %v68
    %487 = vmatpush1.msra.mxu0 %v67
    %488 = vmatprep.subr.mxu0 %v71
    %489 = vmatpush1.msra.mxu0 %v70
    %490 = vmatprep.subr.mxu0 %v74
    %491 = vmatpush1.msra.mxu0 %v73
    %492 = vmatprep.subr.mxu0 %v77
    %493 = vmatpush1.msra.mxu0 %v76
    %494 = vmatprep.subr.mxu0 %v80
    %495 = vmatpush1.msra.mxu0 %v79
    %496 = vmatprep.subr.mxu0 %v83
    %497 = vmatpush1.msra.mxu0 %v82
    %498 = vmatprep.subr.mxu0 %v86
    %499 = vmatpush1.msra.mxu0 %v85
    %500 = vmatprep.subr.mxu0 %v89
    %501 = vmatpush1.msra.mxu0 %v88
    %502 = vmatprep.subr.mxu0 %v92
    %503 = vmatpush1.msra.mxu0 %v91
    %504 = vmatprep.subr.mxu0 %v95
    %505 = vmatpush1.msra.mxu0 %v94
    %506 = vmatprep.subr.mxu0 %v98
    %507 = vmatpush1.msra.mxu0 %v97
    %508 = vmatprep.subr.mxu0 %v101
    %509 = vmatpush1.msra.mxu0 %v100
    %510 = vmatprep.subr.mxu0 %v104
    %511 = vmatpush1.msra.mxu0 %v103
    %512 = vmatprep.subr.mxu0 %v107
    %513 = vmatpush1.msra.mxu0 %v106
    %514 = vmatprep.subr.mxu0 %v110
    %515 = vmatpush1.msra.mxu0 %v109
    %516 = vmatprep.subr.mxu0 %v113
    %517 = vmatpush1.msra.mxu0 %v112
    %518 = vmatprep.subr.mxu0 %v116
    %519 = vmatpush1.msra.mxu0 %v115
    %520 = vmatprep.subr.mxu0 %v119
    %521 = vmatpush1.msra.mxu0 %v118
    %522 = vmatprep.subr.mxu0 %v122
    %523 = vmatpush1.msra.mxu0 %v121
    %524 = vmatprep.subr.mxu0 %v125
    %525 = vmatpush1.msra.mxu0 %v124
    %526 = vmatprep.subr.mxu0 %v128
    %527 = vmatpush1.msra.mxu0 %v127
    %528 = vmatprep.subr.mxu0 %v131
    %529 = vmatpush1.msra.mxu0 %v130
    %530 = vmatprep.subr.mxu0 %v134
    %531 = vmatpush1.msra.mxu0 %v133
    %532 = vmatprep.mubr.f32.mxu0 %v441
    %533 = vmatmul.mubr.f32.gmra.mrb[0].mxu0 %v433
    %v534 = vpop.f32.mrb[0].mxu0
    %v535 = vadd.f32 0.0, %v534
    %v536 = vpop.f32.mrb[0].mxu0
    %v537 = vadd.f32 0.0, %v536
    %538 = vdwg.mxu0
    %539 = vmatprep.subr.mxu0 %v137
    %540 = vmatpush1.msra.mxu0 %v136
    %541 = vmatprep.subr.mxu0 %v140
    %542 = vmatpush1.msra.mxu0 %v139
    %543 = vmatprep.subr.mxu0 %v143
    %544 = vmatpush1.msra.mxu0 %v142
    %545 = vmatprep.subr.mxu0 %v146
    %546 = vmatpush1.msra.mxu0 %v145
    %547 = vmatprep.subr.mxu0 %v149
    %548 = vmatpush1.msra.mxu0 %v148
    %549 = vmatprep.subr.mxu0 %v152
    %550 = vmatpush1.msra.mxu0 %v151
    %551 = vmatprep.subr.mxu0 %v155
    %552 = vmatpush1.msra.mxu0 %v154
    %553 = vmatprep.subr.mxu0 %v158
    %554 = vmatpush1.msra.mxu0 %v157
    %555 = vmatprep.subr.mxu0 %v161
    %556 = vmatpush1.msra.mxu0 %v160
    %557 = vmatprep.subr.mxu0 %v164
    %558 = vmatpush1.msra.mxu0 %v163
    %559 = vmatprep.subr.mxu0 %v167
    %560 = vmatpush1.msra.mxu0 %v166
    %561 = vmatprep.subr.mxu0 %v170
    %562 = vmatpush1.msra.mxu0 %v169
    %563 = vmatprep.subr.mxu0 %v173
    %564 = vmatpush1.msra.mxu0 %v172
    %565 = vmatprep.subr.mxu0 %v176
    %566 = vmatpush1.msra.mxu0 %v175
    %567 = vmatprep.subr.mxu0 %v179
    %568 = vmatpush1.msra.mxu0 %v178
    %569 = vmatprep.subr.mxu0 %v182
    %570 = vmatpush1.msra.mxu0 %v181
    %571 = vmatprep.subr.mxu0 %v185
    %572 = vmatpush1.msra.mxu0 %v184
    %573 = vmatprep.subr.mxu0 %v188
    %574 = vmatpush1.msra.mxu0 %v187
    %575 = vmatprep.subr.mxu0 %v191
    %576 = vmatpush1.msra.mxu0 %v190
    %577 = vmatprep.subr.mxu0 %v194
    %578 = vmatpush1.msra.mxu0 %v193
    %579 = vmatprep.subr.mxu0 %v197
    %580 = vmatpush1.msra.mxu0 %v196
    %581 = vmatprep.subr.mxu0 %v200
    %582 = vmatpush1.msra.mxu0 %v199
    %583 = vmatprep.subr.mxu0 %v203
    %584 = vmatpush1.msra.mxu0 %v202
    %585 = vmatprep.subr.mxu0 %v206
    %586 = vmatpush1.msra.mxu0 %v205
    %587 = vmatprep.subr.mxu0 %v209
    %588 = vmatpush1.msra.mxu0 %v208
    %589 = vmatprep.subr.mxu0 %v212
    %590 = vmatpush1.msra.mxu0 %v211
    %591 = vmatprep.subr.mxu0 %v215
    %592 = vmatpush1.msra.mxu0 %v214
    %593 = vmatprep.subr.mxu0 %v218
    %594 = vmatpush1.msra.mxu0 %v217
    %595 = vmatprep.subr.mxu0 %v221
    %596 = vmatpush1.msra.mxu0 %v220
    %597 = vmatprep.subr.mxu0 %v224
    %598 = vmatpush1.msra.mxu0 %v223
    %599 = vmatprep.subr.mxu0 %v227
    %600 = vmatpush1.msra.mxu0 %v226
    %601 = vmatprep.subr.mxu0 %v230
    %602 = vmatpush1.msra.mxu0 %v229
    %603 = vmatprep.mubr.f32.mxu0 %v442
    %604 = vmatmul.mubr.f32.gmra.mrb[0].mxu0 %v440
    %v605 = vpop.f32.mrb[0].mxu0
    %v606 = vadd.f32 %v535, %v605
    %v607 = vpop.f32.mrb[0].mxu0
    %v608 = vadd.f32 %v537, %v607
    %609 = vdwg.mxu0
    %610 = vmatprep.subr.mxu0 %v233
    %611 = vmatpush1.msra.mxu0 %v232
    %612 = vmatprep.subr.mxu0 %v236
    %613 = vmatpush1.msra.mxu0 %v235
    %614 = vmatprep.subr.mxu0 %v239
    %615 = vmatpush1.msra.mxu0 %v238
    %616 = vmatprep.subr.mxu0 %v242
    %617 = vmatpush1.msra.mxu0 %v241
    %618 = vmatprep.subr.mxu0 %v245
    %619 = vmatpush1.msra.mxu0 %v244
    %620 = vmatprep.subr.mxu0 %v248
    %621 = vmatpush1.msra.mxu0 %v247
    %622 = vmatprep.subr.mxu0 %v251
    %623 = vmatpush1.msra.mxu0 %v250
    %624 = vmatprep.subr.mxu0 %v254
    %625 = vmatpush1.msra.mxu0 %v253
    %626 = vmatprep.subr.mxu0 %v257
    %627 = vmatpush1.msra.mxu0 %v256
    %628 = vmatprep.subr.mxu0 %v260
    %629 = vmatpush1.msra.mxu0 %v259
    %630 = vmatprep.subr.mxu0 %v263
    %631 = vmatpush1.msra.mxu0 %v262
    %632 = vmatprep.subr.mxu0 %v266
    %633 = vmatpush1.msra.mxu0 %v265
    %634 = vmatprep.subr.mxu0 %v269
    %635 = vmatpush1.msra.mxu0 %v268
    %636 = vmatprep.subr.mxu0 %v272
    %637 = vmatpush1.msra.mxu0 %v271
    %638 = vmatprep.subr.mxu0 %v275
    %639 = vmatpush1.msra.mxu0 %v274
    %640 = vmatprep.subr.mxu0 %v278
    %641 = vmatpush1.msra.mxu0 %v277
    %642 = vmatprep.subr.mxu0 %v281
    %643 = vmatpush1.msra.mxu0 %v280
    %644 = vmatprep.subr.mxu0 %v284
    %645 = vmatpush1.msra.mxu0 %v283
    %646 = vmatprep.subr.mxu0 %v287
    %647 = vmatpush1.msra.mxu0 %v286
    %648 = vmatprep.subr.mxu0 %v290
    %649 = vmatpush1.msra.mxu0 %v289
    %650 = vmatprep.subr.mxu0 %v293
    %651 = vmatpush1.msra.mxu0 %v292
    %652 = vmatprep.subr.mxu0 %v296
    %653 = vmatpush1.msra.mxu0 %v295
    %654 = vmatprep.subr.mxu0 %v299
    %655 = vmatpush1.msra.mxu0 %v298
    %656 = vmatprep.subr.mxu0 %v302
    %657 = vmatpush1.msra.mxu0 %v301
    %658 = vmatprep.subr.mxu0 %v305
    %659 = vmatpush1.msra.mxu0 %v304
    %660 = vmatprep.subr.mxu0 %v308
    %661 = vmatpush1.msra.mxu0 %v307
    %662 = vmatprep.subr.mxu0 %v311
    %663 = vmatpush1.msra.mxu0 %v310
    %664 = vmatprep.subr.mxu0 %v314
    %665 = vmatpush1.msra.mxu0 %v313
    %666 = vmatprep.subr.mxu0 %v317
    %667 = vmatpush1.msra.mxu0 %v316
    %668 = vmatprep.subr.mxu0 %v320
    %669 = vmatpush1.msra.mxu0 %v319
    %670 = vmatprep.subr.mxu0 %v323
    %671 = vmatpush1.msra.mxu0 %v322
    %672 = vmatprep.subr.mxu0 %v326
    %673 = vmatpush1.msra.mxu0 %v325
    %674 = vmatprep.mubr.f32.mxu0 %v458
    %675 = vmatmul.mubr.f32.gmra.mrb[0].mxu0 %v450
    %v676 = vpop.f32.mrb[0].mxu0
    %v677 = vadd.f32 %v606, %v676
    %v678 = vpop.f32.mrb[0].mxu0
    %v679 = vadd.f32 %v608, %v678
    %680 = vdwg.mxu0
    %681 = vmatprep.subr.mxu0 %v329
    %682 = vmatpush1.msra.mxu0 %v328
    %683 = vmatprep.subr.mxu0 %v332
    %684 = vmatpush1.msra.mxu0 %v331
    %685 = vmatprep.subr.mxu0 %v335
    %686 = vmatpush1.msra.mxu0 %v334
    %687 = vmatprep.subr.mxu0 %v338
    %688 = vmatpush1.msra.mxu0 %v337
    %689 = vmatprep.subr.mxu0 %v341
    %690 = vmatpush1.msra.mxu0 %v340
    %691 = vmatprep.subr.mxu0 %v344
    %692 = vmatpush1.msra.mxu0 %v343
    %693 = vmatprep.subr.mxu0 %v347
    %694 = vmatpush1.msra.mxu0 %v346
    %695 = vmatprep.subr.mxu0 %v350
    %696 = vmatpush1.msra.mxu0 %v349
    %697 = vmatprep.subr.mxu0 %v353
    %698 = vmatpush1.msra.mxu0 %v352
    %699 = vmatprep.subr.mxu0 %v356
    %700 = vmatpush1.msra.mxu0 %v355
    %701 = vmatprep.subr.mxu0 %v359
    %702 = vmatpush1.msra.mxu0 %v358
    %703 = vmatprep.subr.mxu0 %v362
    %704 = vmatpush1.msra.mxu0 %v361
    %705 = vmatprep.subr.mxu0 %v365
    %706 = vmatpush1.msra.mxu0 %v364
    %707 = vmatprep.subr.mxu0 %v368
    %708 = vmatpush1.msra.mxu0 %v367
    %709 = vmatprep.subr.mxu0 %v371
    %710 = vmatpush1.msra.mxu0 %v370
    %711 = vmatprep.subr.mxu0 %v374
    %712 = vmatpush1.msra.mxu0 %v373
    %713 = vmatprep.subr.mxu0 %v377
    %714 = vmatpush1.msra.mxu0 %v376
    %715 = vmatprep.subr.mxu0 %v380
    %716 = vmatpush1.msra.mxu0 %v379
    %717 = vmatprep.subr.mxu0 %v383
    %718 = vmatpush1.msra.mxu0 %v382
    %719 = vmatprep.subr.mxu0 %v386
    %720 = vmatpush1.msra.mxu0 %v385
    %721 = vmatprep.subr.mxu0 %v389
    %722 = vmatpush1.msra.mxu0 %v388
    %723 = vmatprep.subr.mxu0 %v392
    %724 = vmatpush1.msra.mxu0 %v391
    %725 = vmatprep.subr.mxu0 %v395
    %726 = vmatpush1.msra.mxu0 %v394
    %727 = vmatprep.subr.mxu0 %v398
    %728 = vmatpush1.msra.mxu0 %v397
    %729 = vmatprep.subr.mxu0 %v401
    %730 = vmatpush1.msra.mxu0 %v400
    %731 = vmatprep.subr.mxu0 %v404
    %732 = vmatpush1.msra.mxu0 %v403
    %733 = vmatprep.subr.mxu0 %v407
    %734 = vmatpush1.msra.mxu0 %v406
    %735 = vmatprep.subr.mxu0 %v410
    %736 = vmatpush1.msra.mxu0 %v409
    %737 = vmatprep.subr.mxu0 %v413
    %738 = vmatpush1.msra.mxu0 %v412
    %739 = vmatprep.subr.mxu0 %v416
    %740 = vmatpush1.msra.mxu0 %v415
    %741 = vmatprep.subr.mxu0 %v419
    %742 = vmatpush1.msra.mxu0 %v418
    %743 = vmatprep.subr.mxu0 %v422
    %744 = vmatpush1.msra.mxu0 %v421
    %745 = vmatprep.mubr.f32.mxu0 %v459
    %746 = vmatmul.mubr.f32.gmra.mrb[0].mxu0 %v457
    %v747 = vpop.f32.mrb[0].mxu0
    %v748 = vadd.f32 %v677, %v747
    %v749 = vpop.f32.mrb[0].mxu0
    %v750 = vadd.f32 %v679, %v749
    %751 = vdwg.mxu0
    %752 = vmatprep.subr.mxu0 0.0
    %753 = vmatpush1.msra.mxu0 %v42
    %754 = vmatprep.subr.mxu0 0.0
    %755 = vmatpush1.msra.mxu0 %v45
    %756 = vmatprep.subr.mxu0 0.0
    %757 = vmatpush1.msra.mxu0 %v48
    %758 = vmatprep.subr.mxu0 0.0
    %759 = vmatpush1.msra.mxu0 %v51
    %760 = vmatprep.subr.mxu0 0.0
    %761 = vmatpush1.msra.mxu0 %v54
    %762 = vmatprep.subr.mxu0 0.0
    %763 = vmatpush1.msra.mxu0 %v57
    %764 = vmatprep.subr.mxu0 0.0
    %765 = vmatpush1.msra.mxu0 %v60
    %766 = vmatprep.subr.mxu0 0.0
    %767 = vmatpush1.msra.mxu0 %v63
    %768 = vmatprep.subr.mxu0 0.0
    %769 = vmatpush1.msra.mxu0 %v66
    %770 = vmatprep.subr.mxu0 0.0
    %771 = vmatpush1.msra.mxu0 %v69
    %772 = vmatprep.subr.mxu0 0.0
    %773 = vmatpush1.msra.mxu0 %v72
    %774 = vmatprep.subr.mxu0 0.0
    %775 = vmatpush1.msra.mxu0 %v75
    %776 = vmatprep.subr.mxu0 0.0
    %777 = vmatpush1.msra.mxu0 %v78
    %778 = vmatprep.subr.mxu0 0.0
    %779 = vmatpush1.msra.mxu0 %v81
    %780 = vmatprep.subr.mxu0 0.0
    %781 = vmatpush1.msra.mxu0 %v84
    %782 = vmatprep.subr.mxu0 0.0
    %783 = vmatpush1.msra.mxu0 %v87
    %784 = vmatprep.subr.mxu0 0.0
    %785 = vmatpush1.msra.mxu0 %v90
    %786 = vmatprep.subr.mxu0 0.0
    %787 = vmatpush1.msra.mxu0 %v93
    %788 = vmatprep.subr.mxu0 0.0
    %789 = vmatpush1.msra.mxu0 %v96
    %790 = vmatprep.subr.mxu0 0.0
    %791 = vmatpush1.msra.mxu0 %v99
    %792 = vmatprep.subr.mxu0 0.0
    %793 = vmatpush1.msra.mxu0 %v102
    %794 = vmatprep.subr.mxu0 0.0
    %795 = vmatpush1.msra.mxu0 %v105
    %796 = vmatprep.subr.mxu0 0.0
    %797 = vmatpush1.msra.mxu0 %v108
    %798 = vmatprep.subr.mxu0 0.0
    %799 = vmatpush1.msra.mxu0 %v111
    %800 = vmatprep.subr.mxu0 0.0
    %801 = vmatpush1.msra.mxu0 %v114
    %802 = vmatprep.subr.mxu0 0.0
    %803 = vmatpush1.msra.mxu0 %v117
    %804 = vmatprep.subr.mxu0 0.0
    %805 = vmatpush1.msra.mxu0 %v120
    %806 = vmatprep.subr.mxu0 0.0
    %807 = vmatpush1.msra.mxu0 %v123
    %808 = vmatprep.subr.mxu0 0.0
    %809 = vmatpush1.msra.mxu0 %v126
    %810 = vmatprep.subr.mxu0 0.0
    %811 = vmatpush1.msra.mxu0 %v129
    %812 = vmatprep.subr.mxu0 0.0
    %813 = vmatpush1.msra.mxu0 %v132
    %814 = vmatprep.subr.mxu0 0.0
    %815 = vmatpush1.msra.mxu0 %v135
    %816 = vmatprep.mubr.f32.mxu0 %v441
    %817 = vmatmul.mubr.f32.gmra.mrb[0].mxu0 %v433
    %v818 = vpop.f32.mrb[0].mxu0
    %v819 = vadd.f32 0.0, %v818
    %v820 = vpop.f32.mrb[0].mxu0
    %821 = vdwg.mxu0
    %822 = vmatprep.subr.mxu0 0.0
    %823 = vmatpush1.msra.mxu0 %v138
    %824 = vmatprep.subr.mxu0 0.0
    %825 = vmatpush1.msra.mxu0 %v141
    %826 = vmatprep.subr.mxu0 0.0
    %827 = vmatpush1.msra.mxu0 %v144
    %828 = vmatprep.subr.mxu0 0.0
    %829 = vmatpush1.msra.mxu0 %v147
    %830 = vmatprep.subr.mxu0 0.0
    %831 = vmatpush1.msra.mxu0 %v150
    %832 = vmatprep.subr.mxu0 0.0
    %833 = vmatpush1.msra.mxu0 %v153
    %834 = vmatprep.subr.mxu0 0.0
    %835 = vmatpush1.msra.mxu0 %v156
    %836 = vmatprep.subr.mxu0 0.0
    %837 = vmatpush1.msra.mxu0 %v159
    %838 = vmatprep.subr.mxu0 0.0
    %839 = vmatpush1.msra.mxu0 %v162
    %840 = vmatprep.subr.mxu0 0.0
    %841 = vmatpush1.msra.mxu0 %v165
    %842 = vmatprep.subr.mxu0 0.0
    %843 = vmatpush1.msra.mxu0 %v168
    %844 = vmatprep.subr.mxu0 0.0
    %845 = vmatpush1.msra.mxu0 %v171
    %846 = vmatprep.subr.mxu0 0.0
    %847 = vmatpush1.msra.mxu0 %v174
    %848 = vmatprep.subr.mxu0 0.0
    %849 = vmatpush1.msra.mxu0 %v177
    %850 = vmatprep.subr.mxu0 0.0
    %851 = vmatpush1.msra.mxu0 %v180
    %852 = vmatprep.subr.mxu0 0.0
    %853 = vmatpush1.msra.mxu0 %v183
    %854 = vmatprep.subr.mxu0 0.0
    %855 = vmatpush1.msra.mxu0 %v186
    %856 = vmatprep.subr.mxu0 0.0
    %857 = vmatpush1.msra.mxu0 %v189
    %858 = vmatprep.subr.mxu0 0.0
    %859 = vmatpush1.msra.mxu0 %v192
    %860 = vmatprep.subr.mxu0 0.0
    %861 = vmatpush1.msra.mxu0 %v195
    %862 = vmatprep.subr.mxu0 0.0
    %863 = vmatpush1.msra.mxu0 %v198
    %864 = vmatprep.subr.mxu0 0.0
    %865 = vmatpush1.msra.mxu0 %v201
    %866 = vmatprep.subr.mxu0 0.0
    %867 = vmatpush1.msra.mxu0 %v204
    %868 = vmatprep.subr.mxu0 0.0
    %869 = vmatpush1.msra.mxu0 %v207
    %870 = vmatprep.subr.mxu0 0.0
    %871 = vmatpush1.msra.mxu0 %v210
    %872 = vmatprep.subr.mxu0 0.0
    %873 = vmatpush1.msra.mxu0 %v213
    %874 = vmatprep.subr.mxu0 0.0
    %875 = vmatpush1.msra.mxu0 %v216
    %876 = vmatprep.subr.mxu0 0.0
    %877 = vmatpush1.msra.mxu0 %v219
    %878 = vmatprep.subr.mxu0 0.0
    %879 = vmatpush1.msra.mxu0 %v222
    %880 = vmatprep.subr.mxu0 0.0
    %881 = vmatpush1.msra.mxu0 %v225
    %882 = vmatprep.subr.mxu0 0.0
    %883 = vmatpush1.msra.mxu0 %v228
    %884 = vmatprep.subr.mxu0 0.0
    %885 = vmatpush1.msra.mxu0 %v231
    %886 = vmatprep.mubr.f32.mxu0 %v442
    %887 = vmatmul.mubr.f32.gmra.mrb[0].mxu0 %v440
    %v888 = vpop.f32.mrb[0].mxu0
    %v889 = vadd.f32 %v819, %v888
    %v890 = vpop.f32.mrb[0].mxu0
    %891 = vdwg.mxu0
    %892 = vmatprep.subr.mxu0 0.0
    %893 = vmatpush1.msra.mxu0 %v234
    %894 = vmatprep.subr.mxu0 0.0
    %895 = vmatpush1.msra.mxu0 %v237
    %896 = vmatprep.subr.mxu0 0.0
    %897 = vmatpush1.msra.mxu0 %v240
    %898 = vmatprep.subr.mxu0 0.0
    %899 = vmatpush1.msra.mxu0 %v243
    %900 = vmatprep.subr.mxu0 0.0
    %901 = vmatpush1.msra.mxu0 %v246
    %902 = vmatprep.subr.mxu0 0.0
    %903 = vmatpush1.msra.mxu0 %v249
    %904 = vmatprep.subr.mxu0 0.0
    %905 = vmatpush1.msra.mxu0 %v252
    %906 = vmatprep.subr.mxu0 0.0
    %907 = vmatpush1.msra.mxu0 %v255
    %908 = vmatprep.subr.mxu0 0.0
    %909 = vmatpush1.msra.mxu0 %v258
    %910 = vmatprep.subr.mxu0 0.0
    %911 = vmatpush1.msra.mxu0 %v261
    %912 = vmatprep.subr.mxu0 0.0
    %913 = vmatpush1.msra.mxu0 %v264
    %914 = vmatprep.subr.mxu0 0.0
    %915 = vmatpush1.msra.mxu0 %v267
    %916 = vmatprep.subr.mxu0 0.0
    %917 = vmatpush1.msra.mxu0 %v270
    %918 = vmatprep.subr.mxu0 0.0
    %919 = vmatpush1.msra.mxu0 %v273
    %920 = vmatprep.subr.mxu0 0.0
    %921 = vmatpush1.msra.mxu0 %v276
    %922 = vmatprep.subr.mxu0 0.0
    %923 = vmatpush1.msra.mxu0 %v279
    %924 = vmatprep.subr.mxu0 0.0
    %925 = vmatpush1.msra.mxu0 %v282
    %926 = vmatprep.subr.mxu0 0.0
    %927 = vmatpush1.msra.mxu0 %v285
    %928 = vmatprep.subr.mxu0 0.0
    %929 = vmatpush1.msra.mxu0 %v288
    %930 = vmatprep.subr.mxu0 0.0
    %931 = vmatpush1.msra.mxu0 %v291
    %932 = vmatprep.subr.mxu0 0.0
    %933 = vmatpush1.msra.mxu0 %v294
    %934 = vmatprep.subr.mxu0 0.0
    %935 = vmatpush1.msra.mxu0 %v297
    %936 = vmatprep.subr.mxu0 0.0
    %937 = vmatpush1.msra.mxu0 %v300
    %938 = vmatprep.subr.mxu0 0.0
    %939 = vmatpush1.msra.mxu0 %v303
    %940 = vmatprep.subr.mxu0 0.0
    %941 = vmatpush1.msra.mxu0 %v306
    %942 = vmatprep.subr.mxu0 0.0
    %943 = vmatpush1.msra.mxu0 %v309
    %944 = vmatprep.subr.mxu0 0.0
    %945 = vmatpush1.msra.mxu0 %v312
    %946 = vmatprep.subr.mxu0 0.0
    %947 = vmatpush1.msra.mxu0 %v315
    %948 = vmatprep.subr.mxu0 0.0
    %949 = vmatpush1.msra.mxu0 %v318
    %950 = vmatprep.subr.mxu0 0.0
    %951 = vmatpush1.msra.mxu0 %v321
    %952 = vmatprep.subr.mxu0 0.0
    %953 = vmatpush1.msra.mxu0 %v324
    %954 = vmatprep.subr.mxu0 0.0
    %955 = vmatpush1.msra.mxu0 %v327
    %956 = vmatprep.mubr.f32.mxu0 %v458
    %957 = vmatmul.mubr.f32.gmra.mrb[0].mxu0 %v450
    %v958 = vpop.f32.mrb[0].mxu0
    %v959 = vadd.f32 %v889, %v958
    %v960 = vpop.f32.mrb[0].mxu0
    %961 = vdwg.mxu0
    %962 = vmatprep.subr.mxu0 0.0
    %963 = vmatpush1.msra.mxu0 %v330
    %964 = vmatprep.subr.mxu0 0.0
    %965 = vmatpush1.msra.mxu0 %v333
    %966 = vmatprep.subr.mxu0 0.0
    %967 = vmatpush1.msra.mxu0 %v336
    %968 = vmatprep.subr.mxu0 0.0
    %969 = vmatpush1.msra.mxu0 %v339
    %970 = vmatprep.subr.mxu0 0.0
    %971 = vmatpush1.msra.mxu0 %v342
    %972 = vmatprep.subr.mxu0 0.0
    %973 = vmatpush1.msra.mxu0 %v345
    %974 = vmatprep.subr.mxu0 0.0
    %975 = vmatpush1.msra.mxu0 %v348
    %976 = vmatprep.subr.mxu0 0.0
    %977 = vmatpush1.msra.mxu0 %v351
    %978 = vmatprep.subr.mxu0 0.0
    %979 = vmatpush1.msra.mxu0 %v354
    %980 = vmatprep.subr.mxu0 0.0
    %981 = vmatpush1.msra.mxu0 %v357
    %982 = vmatprep.subr.mxu0 0.0
    %983 = vmatpush1.msra.mxu0 %v360
    %984 = vmatprep.subr.mxu0 0.0
    %985 = vmatpush1.msra.mxu0 %v363
    %986 = vmatprep.subr.mxu0 0.0
    %987 = vmatpush1.msra.mxu0 %v366
    %988 = vmatprep.subr.mxu0 0.0
    %989 = vmatpush1.msra.mxu0 %v369
    %990 = vmatprep.subr.mxu0 0.0
    %991 = vmatpush1.msra.mxu0 %v372
    %992 = vmatprep.subr.mxu0 0.0
    %993 = vmatpush1.msra.mxu0 %v375
    %994 = vmatprep.subr.mxu0 0.0
    %995 = vmatpush1.msra.mxu0 %v378
    %996 = vmatprep.subr.mxu0 0.0
    %997 = vmatpush1.msra.mxu0 %v381
    %998 = vmatprep.subr.mxu0 0.0
    %999 = vmatpush1.msra.mxu0 %v384
    %1000 = vmatprep.subr.mxu0 0.0
    %1001 = vmatpush1.msra.mxu0 %v387
    %1002 = vmatprep.subr.mxu0 0.0
    %1003 = vmatpush1.msra.mxu0 %v390
    %1004 = vmatprep.subr.mxu0 0.0
    %1005 = vmatpush1.msra.mxu0 %v393
    %1006 = vmatprep.subr.mxu0 0.0
    %1007 = vmatpush1.msra.mxu0 %v396
    %1008 = vmatprep.subr.mxu0 0.0
    %1009 = vmatpush1.msra.mxu0 %v399
    %1010 = vmatprep.subr.mxu0 0.0
    %1011 = vmatpush1.msra.mxu0 %v402
    %1012 = vmatprep.subr.mxu0 0.0
    %1013 = vmatpush1.msra.mxu0 %v405
    %1014 = vmatprep.subr.mxu0 0.0
    %1015 = vmatpush1.msra.mxu0 %v408
    %1016 = vmatprep.subr.mxu0 0.0
    %1017 = vmatpush1.msra.mxu0 %v411
    %1018 = vmatprep.subr.mxu0 0.0
    %1019 = vmatpush1.msra.mxu0 %v414
    %1020 = vmatprep.subr.mxu0 0.0
    %1021 = vmatpush1.msra.mxu0 %v417
    %1022 = vmatprep.subr.mxu0 0.0
    %1023 = vmatpush1.msra.mxu0 %v420
    %1024 = vmatprep.subr.mxu0 0.0
    %1025 = vmatpush1.msra.mxu0 %v423
    %1026 = vmatprep.mubr.f32.mxu0 %v459
    %1027 = vmatmul.mubr.f32.gmra.mrb[0].mxu0 %v457
    %v1028 = vpop.f32.mrb[0].mxu0
    %v1029 = vadd.f32 %v959, %v1028
    %v1030 = vpop.f32.mrb[0].mxu0
    %1031 = vdwg.mxu0
    %v1032 = vmul.f32 %v748, 0.1
    %v1033 = vmul.f32 %v750, 0.1
    %v1034 = vmul.f32 %v1029, 0.1
    %v1035 = vadd.f32 %v1032, 0.0
    %v1036 = vadd.f32 %v1033, 0.0
    %v1037 = vadd.f32 %v1034, 0.0
    %v1038 = vld [vmem:[%s2] sm:$0x7]
    %v1040 = vlaneseq
    %v1041 = vshrl.u32 %v1040, 7
    %v1042 = vsub.s32 0, %v1041
    %v1043 = vrot.slane %v1038, %v1042
    %v1044 = vlaneseq
    %v1045 = vshrl.u32 %v1044, 7
    %v1046 = vsub.s32 1, %v1045
    %v1047 = vrot.slane %v1038, %v1046
    %v1048 = vlaneseq
    %v1049 = vshrl.u32 %v1048, 7
    %v1050 = vsub.s32 2, %v1049
    %v1051 = vrot.slane %v1038, %v1050
    %v1055 = vsub.f32 %v1035, %v1043
    %v1056 = vsub.f32 %v1036, %v1047
    %v1057 = vsub.f32 %v1037, %v1051
    %v1058 = vmax.f32 %v1055, 0.0
    %v1059 = vmax.f32 %v1056, 0.0
    %v1060 = vmax.f32 %v1057, 0.0
    %v1061 = vld [vmem:[%s6] sm:$0xff]
    %v1062 = vld [vmem:[%s6 + $0x8] sm:$0xff]
    %v1063 = vld [vmem:[%s6 + $0x10] sm:$0xff]
    %v1064 = vld [vmem:[%s6 + $0x18] sm:$0xff]
    %v1065 = vld [vmem:[%s6 + $0x20] sm:$0xff]
    %v1066 = vld [vmem:[%s6 + $0x28] sm:$0xff]
    %v1067 = vld [vmem:[%s6 + $0x30] sm:$0xff]
    %v1068 = vld [vmem:[%s6 + $0x38] sm:$0xff]
    %v1069 = vld [vmem:[%s6 + $0x40] sm:$0xff]
    %v1070 = vld [vmem:[%s6 + $0x48] sm:$0xff]
    %v1071 = vld [vmem:[%s6 + $0x50] sm:$0xff]
    %v1072 = vld [vmem:[%s6 + $0x58] sm:$0xff]
    %v1073 = vld [vmem:[%s6 + $0x60] sm:$0xff]
    %v1074 = vld [vmem:[%s6 + $0x68] sm:$0xff]
    %v1075 = vld [vmem:[%s6 + $0x70] sm:$0xff]
    %v1076 = vld [vmem:[%s6 + $0x78] sm:$0xff]
    %v1077 = vld [vmem:[%s6 + $0x80] sm:$0xff]
    %v1078 = vld [vmem:[%s6 + $0x88] sm:$0xff]
    %v1079 = vld [vmem:[%s6 + $0x90] sm:$0xff]
    %v1080 = vld [vmem:[%s6 + $0x98] sm:$0xff]
    %v1081 = vld [vmem:[%s6 + $0xa0] sm:$0xff]
    %v1082 = vld [vmem:[%s6 + $0xa8] sm:$0xff]
    %v1083 = vld [vmem:[%s6 + $0xb0] sm:$0xff]
    %v1084 = vld [vmem:[%s6 + $0xb8] sm:$0xff]
    %v1085 = vld [vmem:[%s6 + $0xc0] sm:$0xff]
    %v1086 = vld [vmem:[%s6 + $0xc8] sm:$0xff]
    %v1087 = vld [vmem:[%s6 + $0xd0] sm:$0xff]
    %v1088 = vld [vmem:[%s6 + $0xd8] sm:$0xff]
    %v1089 = vld [vmem:[%s6 + $0xe0] sm:$0xff]
    %v1090 = vld [vmem:[%s6 + $0xe8] sm:$0xff]
    %v1091 = vld [vmem:[%s6 + $0xf0] sm:$0xff]
    %v1092 = vld [vmem:[%s6 + $0xf8] sm:$0xff]
    %v1093 = vld [vmem:[%s6 + $0x100] sm:$0xff]
    %v1094 = vld [vmem:[%s6 + $0x108] sm:$0xff]
    %v1095 = vld [vmem:[%s6 + $0x110] sm:$0xff]
    %v1096 = vld [vmem:[%s6 + $0x118] sm:$0xff]
    %v1097 = vld [vmem:[%s6 + $0x120] sm:$0xff]
    %v1098 = vld [vmem:[%s6 + $0x128] sm:$0xff]
    %v1099 = vld [vmem:[%s6 + $0x130] sm:$0xff]
    %v1100 = vld [vmem:[%s6 + $0x138] sm:$0xff]
    %v1101 = vld [vmem:[%s6 + $0x140] sm:$0xf]
    %vm1102 = vcmask 556032
    %v1104 = vsel %vm1102, %v1060, 0
    %vm1106 = vcmask 1043456
    %v1108 = vsel %vm1106, %v1101, 0
    %1110 = vmatprep.subr.mxu0 0.0
    %1111 = vmatpush1.msra.mxu0 %v1061
    %1112 = vmatprep.subr.mxu0 0.0
    %1113 = vmatpush1.msra.mxu0 %v1062
    %1114 = vmatprep.subr.mxu0 0.0
    %1115 = vmatpush1.msra.mxu0 %v1063
    %1116 = vmatprep.subr.mxu0 0.0
    %1117 = vmatpush1.msra.mxu0 %v1064
    %1118 = vmatprep.subr.mxu0 0.0
    %1119 = vmatpush1.msra.mxu0 %v1065
    %1120 = vmatprep.subr.mxu0 0.0
    %1121 = vmatpush1.msra.mxu0 %v1066
    %1122 = vmatprep.subr.mxu0 0.0
    %1123 = vmatpush1.msra.mxu0 %v1067
    %1124 = vmatprep.subr.mxu0 0.0
    %1125 = vmatpush1.msra.mxu0 %v1068
    %1126 = vmatprep.subr.mxu0 0.0
    %1127 = vmatpush1.msra.mxu0 %v1069
    %1128 = vmatprep.subr.mxu0 0.0
    %1129 = vmatpush1.msra.mxu0 %v1070
    %1130 = vmatprep.subr.mxu0 0.0
    %1131 = vmatpush1.msra.mxu0 %v1071
    %1132 = vmatprep.subr.mxu0 0.0
    %1133 = vmatpush1.msra.mxu0 %v1072
    %1134 = vmatprep.subr.mxu0 0.0
    %1135 = vmatpush1.msra.mxu0 %v1073
    %1136 = vmatprep.subr.mxu0 0.0
    %1137 = vmatpush1.msra.mxu0 %v1074
    %1138 = vmatprep.subr.mxu0 0.0
    %1139 = vmatpush1.msra.mxu0 %v1075
    %1140 = vmatprep.subr.mxu0 0.0
    %1141 = vmatpush1.msra.mxu0 %v1076
    %1142 = vmatprep.subr.mxu0 0.0
    %1143 = vmatpush1.msra.mxu0 %v1077
    %1144 = vmatprep.subr.mxu0 0.0
    %1145 = vmatpush1.msra.mxu0 %v1078
    %1146 = vmatprep.subr.mxu0 0.0
    %1147 = vmatpush1.msra.mxu0 %v1079
    %1148 = vmatprep.subr.mxu0 0.0
    %1149 = vmatpush1.msra.mxu0 %v1080
    %1150 = vmatprep.subr.mxu0 0.0
    %1151 = vmatpush1.msra.mxu0 %v1081
    %1152 = vmatprep.subr.mxu0 0.0
    %1153 = vmatpush1.msra.mxu0 %v1082
    %1154 = vmatprep.subr.mxu0 0.0
    %1155 = vmatpush1.msra.mxu0 %v1083
    %1156 = vmatprep.subr.mxu0 0.0
    %1157 = vmatpush1.msra.mxu0 %v1084
    %1158 = vmatprep.subr.mxu0 0.0
    %1159 = vmatpush1.msra.mxu0 %v1085
    %1160 = vmatprep.subr.mxu0 0.0
    %1161 = vmatpush1.msra.mxu0 %v1086
    %1162 = vmatprep.subr.mxu0 0.0
    %1163 = vmatpush1.msra.mxu0 %v1087
    %1164 = vmatprep.subr.mxu0 0.0
    %1165 = vmatpush1.msra.mxu0 %v1088
    %1166 = vmatprep.subr.mxu0 0.0
    %1167 = vmatpush1.msra.mxu0 %v1089
    %1168 = vmatprep.subr.mxu0 0.0
    %1169 = vmatpush1.msra.mxu0 %v1090
    %1170 = vmatprep.subr.mxu0 0.0
    %1171 = vmatpush1.msra.mxu0 %v1091
    %1172 = vmatprep.subr.mxu0 0.0
    %1173 = vmatpush1.msra.mxu0 %v1092
    %1174 = vmatprep.mubr.f32.mxu0 %v1059
    %1175 = vmatmul.mubr.f32.gmra.mrb[0].mxu0 %v1058
    %v1176 = vpop.f32.mrb[0].mxu0
    %v1177 = vadd.f32 0.0, %v1176
    %v1178 = vpop.f32.mrb[0].mxu0
    %1179 = vdwg.mxu0
    %1180 = vmatprep.subr.mxu0 0.0
    %1181 = vmatpush1.msra.mxu0 %v1093
    %1182 = vmatprep.subr.mxu0 0.0
    %1183 = vmatpush1.msra.mxu0 %v1094
    %1184 = vmatprep.subr.mxu0 0.0
    %1185 = vmatpush1.msra.mxu0 %v1095
    %1186 = vmatprep.subr.mxu0 0.0
    %1187 = vmatpush1.msra.mxu0 %v1096
    %1188 = vmatprep.subr.mxu0 0.0
    %1189 = vmatpush1.msra.mxu0 %v1097
    %1190 = vmatprep.subr.mxu0 0.0
    %1191 = vmatpush1.msra.mxu0 %v1098
    %1192 = vmatprep.subr.mxu0 0.0
    %1193 = vmatpush1.msra.mxu0 %v1099
    %1194 = vmatprep.subr.mxu0 0.0
    %1195 = vmatpush1.msra.mxu0 %v1100
    %1196 = vmatprep.subr.mxu0 0.0
    %1197 = vmatpush1.msra.mxu0 %v1108
    %1198 = vmatprep.subr.mxu0 0.0
    %1199 = vmatpush1.msra.mxu0 0.0
    %1200 = vmatprep.subr.mxu0 0.0
    %1201 = vmatpush1.msra.mxu0 0.0
    %1202 = vmatprep.subr.mxu0 0.0
    %1203 = vmatpush1.msra.mxu0 0.0
    %1204 = vmatprep.subr.mxu0 0.0
    %1205 = vmatpush1.msra.mxu0 0.0
    %1206 = vmatprep.subr.mxu0 0.0
    %1207 = vmatpush1.msra.mxu0 0.0
    %1208 = vmatprep.subr.mxu0 0.0
    %1209 = vmatpush1.msra.mxu0 0.0
    %1210 = vmatprep.subr.mxu0 0.0
    %1211 = vmatpush1.msra.mxu0 0.0
    %1212 = vmatprep.subr.mxu0 0.0
    %1213 = vmatpush1.msra.mxu0 0.0
    %1214 = vmatprep.subr.mxu0 0.0
    %1215 = vmatpush1.msra.mxu0 0.0
    %1216 = vmatprep.subr.mxu0 0.0
    %1217 = vmatpush1.msra.mxu0 0.0
    %1218 = vmatprep.subr.mxu0 0.0
    %1219 = vmatpush1.msra.mxu0 0.0
    %1220 = vmatprep.subr.mxu0 0.0
    %1221 = vmatpush1.msra.mxu0 0.0
    %1222 = vmatprep.subr.mxu0 0.0
    %1223 = vmatpush1.msra.mxu0 0.0
    %1224 = vmatprep.subr.mxu0 0.0
    %1225 = vmatpush1.msra.mxu0 0.0
    %1226 = vmatprep.subr.mxu0 0.0
    %1227 = vmatpush1.msra.mxu0 0.0
    %1228 = vmatprep.subr.mxu0 0.0
    %1229 = vmatpush1.msra.mxu0 0.0
    %1230 = vmatprep.subr.mxu0 0.0
    %1231 = vmatpush1.msra.mxu0 0.0
    %1232 = vmatprep.subr.mxu0 0.0
    %1233 = vmatpush1.msra.mxu0 0.0
    %1234 = vmatprep.subr.mxu0 0.0
    %1235 = vmatpush1.msra.mxu0 0.0
    %1236 = vmatprep.subr.mxu0 0.0
    %1237 = vmatpush1.msra.mxu0 0.0
    %1238 = vmatprep.subr.mxu0 0.0
    %1239 = vmatpush1.msra.mxu0 0.0
    %1240 = vmatprep.subr.mxu0 0.0
    %1241 = vmatpush1.msra.mxu0 0.0
    %1242 = vmatprep.subr.mxu0 0.0
    %1243 = vmatpush1.msra.mxu0 0.0
    %1244 = vmatprep.mubr.f32.mxu0 0.0
    %1245 = vmatmul.mubr.f32.gmra.mrb[0].mxu0 %v1104
    %v1246 = vpop.f32.mrb[0].mxu0
    %v1247 = vadd.f32 %v1177, %v1246
    %v1248 = vpop.f32.mrb[0].mxu0
    %1249 = vdwg.mxu0
    %v1250 = vmul.f32 %v1058, %v1058
    %v1251 = vmul.f32 %v1059, %v1059
    %v1252 = vmul.f32 %v1060, %v1060
    %v1254 = vsel %vm1102, %v1252, 0
    %1256 = vmatprep.subr.mxu0 0.0
    %1257 = vmatpush1.msra.mxu0 %v1061
    %1258 = vmatprep.subr.mxu0 0.0
    %1259 = vmatpush1.msra.mxu0 %v1062
    %1260 = vmatprep.subr.mxu0 0.0
    %1261 = vmatpush1.msra.mxu0 %v1063
    %1262 = vmatprep.subr.mxu0 0.0
    %1263 = vmatpush1.msra.mxu0 %v1064
    %1264 = vmatprep.subr.mxu0 0.0
    %1265 = vmatpush1.msra.mxu0 %v1065
    %1266 = vmatprep.subr.mxu0 0.0
    %1267 = vmatpush1.msra.mxu0 %v1066
    %1268 = vmatprep.subr.mxu0 0.0
    %1269 = vmatpush1.msra.mxu0 %v1067
    %1270 = vmatprep.subr.mxu0 0.0
    %1271 = vmatpush1.msra.mxu0 %v1068
    %1272 = vmatprep.subr.mxu0 0.0
    %1273 = vmatpush1.msra.mxu0 %v1069
    %1274 = vmatprep.subr.mxu0 0.0
    %1275 = vmatpush1.msra.mxu0 %v1070
    %1276 = vmatprep.subr.mxu0 0.0
    %1277 = vmatpush1.msra.mxu0 %v1071
    %1278 = vmatprep.subr.mxu0 0.0
    %1279 = vmatpush1.msra.mxu0 %v1072
    %1280 = vmatprep.subr.mxu0 0.0
    %1281 = vmatpush1.msra.mxu0 %v1073
    %1282 = vmatprep.subr.mxu0 0.0
    %1283 = vmatpush1.msra.mxu0 %v1074
    %1284 = vmatprep.subr.mxu0 0.0
    %1285 = vmatpush1.msra.mxu0 %v1075
    %1286 = vmatprep.subr.mxu0 0.0
    %1287 = vmatpush1.msra.mxu0 %v1076
    %1288 = vmatprep.subr.mxu0 0.0
    %1289 = vmatpush1.msra.mxu0 %v1077
    %1290 = vmatprep.subr.mxu0 0.0
    %1291 = vmatpush1.msra.mxu0 %v1078
    %1292 = vmatprep.subr.mxu0 0.0
    %1293 = vmatpush1.msra.mxu0 %v1079
    %1294 = vmatprep.subr.mxu0 0.0
    %1295 = vmatpush1.msra.mxu0 %v1080
    %1296 = vmatprep.subr.mxu0 0.0
    %1297 = vmatpush1.msra.mxu0 %v1081
    %1298 = vmatprep.subr.mxu0 0.0
    %1299 = vmatpush1.msra.mxu0 %v1082
    %1300 = vmatprep.subr.mxu0 0.0
    %1301 = vmatpush1.msra.mxu0 %v1083
    %1302 = vmatprep.subr.mxu0 0.0
    %1303 = vmatpush1.msra.mxu0 %v1084
    %1304 = vmatprep.subr.mxu0 0.0
    %1305 = vmatpush1.msra.mxu0 %v1085
    %1306 = vmatprep.subr.mxu0 0.0
    %1307 = vmatpush1.msra.mxu0 %v1086
    %1308 = vmatprep.subr.mxu0 0.0
    %1309 = vmatpush1.msra.mxu0 %v1087
    %1310 = vmatprep.subr.mxu0 0.0
    %1311 = vmatpush1.msra.mxu0 %v1088
    %1312 = vmatprep.subr.mxu0 0.0
    %1313 = vmatpush1.msra.mxu0 %v1089
    %1314 = vmatprep.subr.mxu0 0.0
    %1315 = vmatpush1.msra.mxu0 %v1090
    %1316 = vmatprep.subr.mxu0 0.0
    %1317 = vmatpush1.msra.mxu0 %v1091
    %1318 = vmatprep.subr.mxu0 0.0
    %1319 = vmatpush1.msra.mxu0 %v1092
    %1320 = vmatprep.mubr.f32.mxu0 %v1251
    %1321 = vmatmul.mubr.f32.gmra.mrb[0].mxu0 %v1250
    %v1322 = vpop.f32.mrb[0].mxu0
    %v1323 = vadd.f32 0.0, %v1322
    %v1324 = vpop.f32.mrb[0].mxu0
    %1325 = vdwg.mxu0
    %1326 = vmatprep.subr.mxu0 0.0
    %1327 = vmatpush1.msra.mxu0 %v1093
    %1328 = vmatprep.subr.mxu0 0.0
    %1329 = vmatpush1.msra.mxu0 %v1094
    %1330 = vmatprep.subr.mxu0 0.0
    %1331 = vmatpush1.msra.mxu0 %v1095
    %1332 = vmatprep.subr.mxu0 0.0
    %1333 = vmatpush1.msra.mxu0 %v1096
    %1334 = vmatprep.subr.mxu0 0.0
    %1335 = vmatpush1.msra.mxu0 %v1097
    %1336 = vmatprep.subr.mxu0 0.0
    %1337 = vmatpush1.msra.mxu0 %v1098
    %1338 = vmatprep.subr.mxu0 0.0
    %1339 = vmatpush1.msra.mxu0 %v1099
    %1340 = vmatprep.subr.mxu0 0.0
    %1341 = vmatpush1.msra.mxu0 %v1100
    %1342 = vmatprep.subr.mxu0 0.0
    %1343 = vmatpush1.msra.mxu0 %v1108
    %1344 = vmatprep.subr.mxu0 0.0
    %1345 = vmatpush1.msra.mxu0 0.0
    %1346 = vmatprep.subr.mxu0 0.0
    %1347 = vmatpush1.msra.mxu0 0.0
    %1348 = vmatprep.subr.mxu0 0.0
    %1349 = vmatpush1.msra.mxu0 0.0
    %1350 = vmatprep.subr.mxu0 0.0
    %1351 = vmatpush1.msra.mxu0 0.0
    %1352 = vmatprep.subr.mxu0 0.0
    %1353 = vmatpush1.msra.mxu0 0.0
    %1354 = vmatprep.subr.mxu0 0.0
    %1355 = vmatpush1.msra.mxu0 0.0
    %1356 = vmatprep.subr.mxu0 0.0
    %1357 = vmatpush1.msra.mxu0 0.0
    %1358 = vmatprep.subr.mxu0 0.0
    %1359 = vmatpush1.msra.mxu0 0.0
    %1360 = vmatprep.subr.mxu0 0.0
    %1361 = vmatpush1.msra.mxu0 0.0
    %1362 = vmatprep.subr.mxu0 0.0
    %1363 = vmatpush1.msra.mxu0 0.0
    %1364 = vmatprep.subr.mxu0 0.0
    %1365 = vmatpush1.msra.mxu0 0.0
    %1366 = vmatprep.subr.mxu0 0.0
    %1367 = vmatpush1.msra.mxu0 0.0
    %1368 = vmatprep.subr.mxu0 0.0
    %1369 = vmatpush1.msra.mxu0 0.0
    %1370 = vmatprep.subr.mxu0 0.0
    %1371 = vmatpush1.msra.mxu0 0.0
    %1372 = vmatprep.subr.mxu0 0.0
    %1373 = vmatpush1.msra.mxu0 0.0
    %1374 = vmatprep.subr.mxu0 0.0
    %1375 = vmatpush1.msra.mxu0 0.0
    %1376 = vmatprep.subr.mxu0 0.0
    %1377 = vmatpush1.msra.mxu0 0.0
    %1378 = vmatprep.subr.mxu0 0.0
    %1379 = vmatpush1.msra.mxu0 0.0
    %1380 = vmatprep.subr.mxu0 0.0
    %1381 = vmatpush1.msra.mxu0 0.0
    %1382 = vmatprep.subr.mxu0 0.0
    %1383 = vmatpush1.msra.mxu0 0.0
    %1384 = vmatprep.subr.mxu0 0.0
    %1385 = vmatpush1.msra.mxu0 0.0
    %1386 = vmatprep.subr.mxu0 0.0
    %1387 = vmatpush1.msra.mxu0 0.0
    %1388 = vmatprep.subr.mxu0 0.0
    %1389 = vmatpush1.msra.mxu0 0.0
    %1390 = vmatprep.mubr.f32.mxu0 0.0
    %1391 = vmatmul.mubr.f32.gmra.mrb[0].mxu0 %v1254
    %v1392 = vpop.f32.mrb[0].mxu0
    %v1393 = vadd.f32 %v1323, %v1392
    %v1394 = vpop.f32.mrb[0].mxu0
    %1395 = vdwg.mxu0
    %vm1396 = vcmask 25600
    %v1397 = vsel %vm1396, %v1247, 0.0
    %v1398 = vrot.slane %v1397, 4
    %v1399 = vadd.f32 %v1397, %v1398
    %v1400 = vrot.slane %v1399, 2
    %v1401 = vadd.f32 %v1399, %v1400
    %v1402 = vrot.slane %v1401, 1
    %v1403 = vadd.f32 %v1401, %v1402
    %v1404 = vmul.f32 %v1403, 0.0061728396
    %v1405 = vsel %vm1396, %v1393, 0.0
    %v1406 = vrot.slane %v1405, 4
    %v1407 = vadd.f32 %v1405, %v1406
    %v1408 = vrot.slane %v1407, 2
    %v1409 = vadd.f32 %v1407, %v1408
    %v1410 = vrot.slane %v1409, 1
    %v1411 = vadd.f32 %v1409, %v1410
    %v1412 = vmul.f32 %v1411, 0.0061728396
    %v1413 = vmul.f32 %v1404, %v1404
    %v1414 = vsub.f32 %v1412, %v1413
    %v1415 = vadd.f32 %v1414, 1e-05
    %v1416 = vrsqrt.pop %v1415
    %v1417 = vld [vmem:[%s7] sm:$0xff]
    %v1418 = vld [vmem:[%s7 + $0x8] sm:$0xf]
    %v1421 = vcombine.high %v1417, %v1417
    %vm1422 = vcmask 31744
    %v1424 = vsel %vm1422, %v1404, 0
    %v1426 = vsel %vm1106, %v1417, 0
    %v1428 = vsel %vm1106, %v1421, 0
    %v1430 = vsel %vm1106, %v1418, 0
    %1432 = vmatprep.subr.mxu0 %v1428
    %1433 = vmatpush1.msra.mxu0 %v1426
    %1434 = vmatprep.subr.mxu0 0.0
    %1435 = vmatpush1.msra.mxu0 0.0
    %1436 = vmatprep.subr.mxu0 0.0
    %1437 = vmatpush1.msra.mxu0 0.0
    %1438 = vmatprep.subr.mxu0 0.0
    %1439 = vmatpush1.msra.mxu0 0.0
    %1440 = vmatprep.subr.mxu0 0.0
    %1441 = vmatpush1.msra.mxu0 0.0
    %1442 = vmatprep.subr.mxu0 0.0
    %1443 = vmatpush1.msra.mxu0 0.0
    %1444 = vmatprep.subr.mxu0 0.0
    %1445 = vmatpush1.msra.mxu0 0.0
    %1446 = vmatprep.subr.mxu0 0.0
    %1447 = vmatpush1.msra.mxu0 0.0
    %1448 = vmatprep.subr.mxu0 0.0
    %1449 = vmatpush1.msra.mxu0 0.0
    %1450 = vmatprep.subr.mxu0 0.0
    %1451 = vmatpush1.msra.mxu0 0.0
    %1452 = vmatprep.subr.mxu0 0.0
    %1453 = vmatpush1.msra.mxu0 0.0
    %1454 = vmatprep.subr.mxu0 0.0
    %1455 = vmatpush1.msra.mxu0 0.0
    %1456 = vmatprep.subr.mxu0 0.0
    %1457 = vmatpush1.msra.mxu0 0.0
    %1458 = vmatprep.subr.mxu0 0.0
    %1459 = vmatpush1.msra.mxu0 0.0
    %1460 = vmatprep.subr.mxu0 0.0
    %1461 = vmatpush1.msra.mxu0 0.0
    %1462 = vmatprep.subr.mxu0 0.0
    %1463 = vmatpush1.msra.mxu0 0.0
    %1464 = vmatprep.subr.mxu0 0.0
    %1465 = vmatpush1.msra.mxu0 0.0
    %1466 = vmatprep.subr.mxu0 0.0
    %1467 = vmatpush1.msra.mxu0 0.0
    %1468 = vmatprep.subr.mxu0 0.0
    %1469 = vmatpush1.msra.mxu0 0.0
    %1470 = vmatprep.subr.mxu0 0.0
    %1471 = vmatpush1.msra.mxu0 0.0
    %1472 = vmatprep.subr.mxu0 0.0
    %1473 = vmatpush1.msra.mxu0 0.0
    %1474 = vmatprep.subr.mxu0 0.0
    %1475 = vmatpush1.msra.mxu0 0.0
    %1476 = vmatprep.subr.mxu0 0.0
    %1477 = vmatpush1.msra.mxu0 0.0
    %1478 = vmatprep.subr.mxu0 0.0
    %1479 = vmatpush1.msra.mxu0 0.0
    %1480 = vmatprep.subr.mxu0 0.0
    %1481 = vmatpush1.msra.mxu0 0.0
    %1482 = vmatprep.subr.mxu0 0.0
    %1483 = vmatpush1.msra.mxu0 0.0
    %1484 = vmatprep.subr.mxu0 0.0
    %1485 = vmatpush1.msra.mxu0 0.0
    %1486 = vmatprep.subr.mxu0 0.0
    %1487 = vmatpush1.msra.mxu0 0.0
    %1488 = vmatprep.subr.mxu0 0.0
    %1489 = vmatpush1.msra.mxu0 0.0
    %1490 = vmatprep.subr.mxu0 0.0
    %1491 = vmatpush1.msra.mxu0 0.0
    %1492 = vmatprep.subr.mxu0 0.0
    %1493 = vmatpush1.msra.mxu0 0.0
    %1494 = vmatprep.subr.mxu0 0.0
    %1495 = vmatpush1.msra.mxu0 0.0
    %1496 = vmatprep.mubr.f32.mxu0 0.0
    %1497 = vmatmul.mubr.f32.gmra.mrb[0].mxu0 %v1424
    %v1498 = vpop.f32.mrb[0].mxu0
    %v1499 = vadd.f32 0.0, %v1498
    %v1500 = vpop.f32.mrb[0].mxu0
    %v1501 = vadd.f32 0.0, %v1500
    %1502 = vdwg.mxu0
    %1503 = vmatprep.subr.mxu0 0.0
    %1504 = vmatpush1.msra.mxu0 %v1430
    %1505 = vmatprep.subr.mxu0 0.0
    %1506 = vmatpush1.msra.mxu0 0.0
    %1507 = vmatprep.subr.mxu0 0.0
    %1508 = vmatpush1.msra.mxu0 0.0
    %1509 = vmatprep.subr.mxu0 0.0
    %1510 = vmatpush1.msra.mxu0 0.0
    %1511 = vmatprep.subr.mxu0 0.0
    %1512 = vmatpush1.msra.mxu0 0.0
    %1513 = vmatprep.subr.mxu0 0.0
    %1514 = vmatpush1.msra.mxu0 0.0
    %1515 = vmatprep.subr.mxu0 0.0
    %1516 = vmatpush1.msra.mxu0 0.0
    %1517 = vmatprep.subr.mxu0 0.0
    %1518 = vmatpush1.msra.mxu0 0.0
    %1519 = vmatprep.subr.mxu0 0.0
    %1520 = vmatpush1.msra.mxu0 0.0
    %1521 = vmatprep.subr.mxu0 0.0
    %1522 = vmatpush1.msra.mxu0 0.0
    %1523 = vmatprep.subr.mxu0 0.0
    %1524 = vmatpush1.msra.mxu0 0.0
    %1525 = vmatprep.subr.mxu0 0.0
    %1526 = vmatpush1.msra.mxu0 0.0
    %1527 = vmatprep.subr.mxu0 0.0
    %1528 = vmatpush1.msra.mxu0 0.0
    %1529 = vmatprep.subr.mxu0 0.0
    %1530 = vmatpush1.msra.mxu0 0.0
    %1531 = vmatprep.subr.mxu0 0.0
    %1532 = vmatpush1.msra.mxu0 0.0
    %1533 = vmatprep.subr.mxu0 0.0
    %1534 = vmatpush1.msra.mxu0 0.0
    %1535 = vmatprep.subr.mxu0 0.0
    %1536 = vmatpush1.msra.mxu0 0.0
    %1537 = vmatprep.subr.mxu0 0.0
    %1538 = vmatpush1.msra.mxu0 0.0
    %1539 = vmatprep.subr.mxu0 0.0
    %1540 = vmatpush1.msra.mxu0 0.0
    %1541 = vmatprep.subr.mxu0 0.0
    %1542 = vmatpush1.msra.mxu0 0.0
    %1543 = vmatprep.subr.mxu0 0.0
    %1544 = vmatpush1.msra.mxu0 0.0
    %1545 = vmatprep.subr.mxu0 0.0
    %1546 = vmatpush1.msra.mxu0 0.0
    %1547 = vmatprep.subr.mxu0 0.0
    %1548 = vmatpush1.msra.mxu0 0.0
    %1549 = vmatprep.subr.mxu0 0.0
    %1550 = vmatpush1.msra.mxu0 0.0
    %1551 = vmatprep.subr.mxu0 0.0
    %1552 = vmatpush1.msra.mxu0 0.0
    %1553 = vmatprep.subr.mxu0 0.0
    %1554 = vmatpush1.msra.mxu0 0.0
    %1555 = vmatprep.subr.mxu0 0.0
    %1556 = vmatpush1.msra.mxu0 0.0
    %1557 = vmatprep.subr.mxu0 0.0
    %1558 = vmatpush1.msra.mxu0 0.0
    %1559 = vmatprep.subr.mxu0 0.0
    %1560 = vmatpush1.msra.mxu0 0.0
    %1561 = vmatprep.subr.mxu0 0.0
    %1562 = vmatpush1.msra.mxu0 0.0
    %1563 = vmatprep.subr.mxu0 0.0
    %1564 = vmatpush1.msra.mxu0 0.0
    %1565 = vmatprep.subr.mxu0 0.0
    %1566 = vmatpush1.msra.mxu0 0.0
    %1567 = vmatprep.mubr.f32.mxu0 0.0
    %1568 = vmatmul.mubr.f32.gmra.mrb[0].mxu0 %v1424
    %v1569 = vpop.f32.mrb[0].mxu0
    %v1570 = vadd.f32 0.0, %v1569
    %v1571 = vpop.f32.mrb[0].mxu0
    %1572 = vdwg.mxu0
    %v1574 = vsel %vm1422, %v1416, 0
    %1576 = vmatprep.subr.mxu0 %v1428
    %1577 = vmatpush1.msra.mxu0 %v1426
    %1578 = vmatprep.subr.mxu0 0.0
    %1579 = vmatpush1.msra.mxu0 0.0
    %1580 = vmatprep.subr.mxu0 0.0
    %1581 = vmatpush1.msra.mxu0 0.0
    %1582 = vmatprep.subr.mxu0 0.0
    %1583 = vmatpush1.msra.mxu0 0.0
    %1584 = vmatprep.subr.mxu0 0.0
    %1585 = vmatpush1.msra.mxu0 0.0
    %1586 = vmatprep.subr.mxu0 0.0
    %1587 = vmatpush1.msra.mxu0 0.0
    %1588 = vmatprep.subr.mxu0 0.0
    %1589 = vmatpush1.msra.mxu0 0.0
    %1590 = vmatprep.subr.mxu0 0.0
    %1591 = vmatpush1.msra.mxu0 0.0
    %1592 = vmatprep.subr.mxu0 0.0
    %1593 = vmatpush1.msra.mxu0 0.0
    %1594 = vmatprep.subr.mxu0 0.0
    %1595 = vmatpush1.msra.mxu0 0.0
    %1596 = vmatprep.subr.mxu0 0.0
    %1597 = vmatpush1.msra.mxu0 0.0
    %1598 = vmatprep.subr.mxu0 0.0
    %1599 = vmatpush1.msra.mxu0 0.0
    %1600 = vmatprep.subr.mxu0 0.0
    %1601 = vmatpush1.msra.mxu0 0.0
    %1602 = vmatprep.subr.mxu0 0.0
    %1603 = vmatpush1.msra.mxu0 0.0
    %1604 = vmatprep.subr.mxu0 0.0
    %1605 = vmatpush1.msra.mxu0 0.0
    %1606 = vmatprep.subr.mxu0 0.0
    %1607 = vmatpush1.msra.mxu0 0.0
    %1608 = vmatprep.subr.mxu0 0.0
    %1609 = vmatpush1.msra.mxu0 0.0
    %1610 = vmatprep.subr.mxu0 0.0
    %1611 = vmatpush1.msra.mxu0 0.0
    %1612 = vmatprep.subr.mxu0 0.0
    %1613 = vmatpush1.msra.mxu0 0.0
    %1614 = vmatprep.subr.mxu0 0.0
    %1615 = vmatpush1.msra.mxu0 0.0
    %1616 = vmatprep.subr.mxu0 0.0
    %1617 = vmatpush1.msra.mxu0 0.0
    %1618 = vmatprep.subr.mxu0 0.0
    %1619 = vmatpush1.msra.mxu0 0.0
    %1620 = vmatprep.subr.mxu0 0.0
    %1621 = vmatpush1.msra.mxu0 0.0
    %1622 = vmatprep.subr.mxu0 0.0
    %1623 = vmatpush1.msra.mxu0 0.0
    %1624 = vmatprep.subr.mxu0 0.0
    %1625 = vmatpush1.msra.mxu0 0.0
    %1626 = vmatprep.subr.mxu0 0.0
    %1627 = vmatpush1.msra.mxu0 0.0
    %1628 = vmatprep.subr.mxu0 0.0
    %1629 = vmatpush1.msra.mxu0 0.0
    %1630 = vmatprep.subr.mxu0 0.0
    %1631 = vmatpush1.msra.mxu0 0.0
    %1632 = vmatprep.subr.mxu0 0.0
    %1633 = vmatpush1.msra.mxu0 0.0
    %1634 = vmatprep.subr.mxu0 0.0
    %1635 = vmatpush1.msra.mxu0 0.0
    %1636 = vmatprep.subr.mxu0 0.0
    %1637 = vmatpush1.msra.mxu0 0.0
    %1638 = vmatprep.subr.mxu0 0.0
    %1639 = vmatpush1.msra.mxu0 0.0
    %1640 = vmatprep.mubr.f32.mxu0 0.0
    %1641 = vmatmul.mubr.f32.gmra.mrb[0].mxu0 %v1574
    %v1642 = vpop.f32.mrb[0].mxu0
    %v1643 = vadd.f32 0.0, %v1642
    %v1644 = vpop.f32.mrb[0].mxu0
    %v1645 = vadd.f32 0.0, %v1644
    %1646 = vdwg.mxu0
    %1647 = vmatprep.subr.mxu0 0.0
    %1648 = vmatpush1.msra.mxu0 %v1430
    %1649 = vmatprep.subr.mxu0 0.0
    %1650 = vmatpush1.msra.mxu0 0.0
    %1651 = vmatprep.subr.mxu0 0.0
    %1652 = vmatpush1.msra.mxu0 0.0
    %1653 = vmatprep.subr.mxu0 0.0
    %1654 = vmatpush1.msra.mxu0 0.0
    %1655 = vmatprep.subr.mxu0 0.0
    %1656 = vmatpush1.msra.mxu0 0.0
    %1657 = vmatprep.subr.mxu0 0.0
    %1658 = vmatpush1.msra.mxu0 0.0
    %1659 = vmatprep.subr.mxu0 0.0
    %1660 = vmatpush1.msra.mxu0 0.0
    %1661 = vmatprep.subr.mxu0 0.0
    %1662 = vmatpush1.msra.mxu0 0.0
    %1663 = vmatprep.subr.mxu0 0.0
    %1664 = vmatpush1.msra.mxu0 0.0
    %1665 = vmatprep.subr.mxu0 0.0
    %1666 = vmatpush1.msra.mxu0 0.0
    %1667 = vmatprep.subr.mxu0 0.0
    %1668 = vmatpush1.msra.mxu0 0.0
    %1669 = vmatprep.subr.mxu0 0.0
    %1670 = vmatpush1.msra.mxu0 0.0
    %1671 = vmatprep.subr.mxu0 0.0
    %1672 = vmatpush1.msra.mxu0 0.0
    %1673 = vmatprep.subr.mxu0 0.0
    %1674 = vmatpush1.msra.mxu0 0.0
    %1675 = vmatprep.subr.mxu0 0.0
    %1676 = vmatpush1.msra.mxu0 0.0
    %1677 = vmatprep.subr.mxu0 0.0
    %1678 = vmatpush1.msra.mxu0 0.0
    %1679 = vmatprep.subr.mxu0 0.0
    %1680 = vmatpush1.msra.mxu0 0.0
    %1681 = vmatprep.subr.mxu0 0.0
    %1682 = vmatpush1.msra.mxu0 0.0
    %1683 = vmatprep.subr.mxu0 0.0
    %1684 = vmatpush1.msra.mxu0 0.0
    %1685 = vmatprep.subr.mxu0 0.0
    %1686 = vmatpush1.msra.mxu0 0.0
    %1687 = vmatprep.subr.mxu0 0.0
    %1688 = vmatpush1.msra.mxu0 0.0
    %1689 = vmatprep.subr.mxu0 0.0
    %1690 = vmatpush1.msra.mxu0 0.0
    %1691 = vmatprep.subr.mxu0 0.0
    %1692 = vmatpush1.msra.mxu0 0.0
    %1693 = vmatprep.subr.mxu0 0.0
    %1694 = vmatpush1.msra.mxu0 0.0
    %1695 = vmatprep.subr.mxu0 0.0
    %1696 = vmatpush1.msra.mxu0 0.0
    %1697 = vmatprep.subr.mxu0 0.0
    %1698 = vmatpush1.msra.mxu0 0.0
    %1699 = vmatprep.subr.mxu0 0.0
    %1700 = vmatpush1.msra.mxu0 0.0
    %1701 = vmatprep.subr.mxu0 0.0
    %1702 = vmatpush1.msra.mxu0 0.0
    %1703 = vmatprep.subr.mxu0 0.0
    %1704 = vmatpush1.msra.mxu0 0.0
    %1705 = vmatprep.subr.mxu0 0.0
    %1706 = vmatpush1.msra.mxu0 0.0
    %1707 = vmatprep.subr.mxu0 0.0
    %1708 = vmatpush1.msra.mxu0 0.0
    %1709 = vmatprep.subr.mxu0 0.0
    %1710 = vmatpush1.msra.mxu0 0.0
    %1711 = vmatprep.mubr.f32.mxu0 0.0
    %1712 = vmatmul.mubr.f32.gmra.mrb[0].mxu0 %v1574
    %v1713 = vpop.f32.mrb[0].mxu0
    %v1714 = vadd.f32 0.0, %v1713
    %v1715 = vpop.f32.mrb[0].mxu0
    %1716 = vdwg.mxu0
    %v1717 = vlaneseq
    %v1718 = vshrl.u32 %v1717, 7
    %v1719 = vsub.s32 0, %v1718
    %v1720 = vrot.slane %v1499, %v1719
    %v1721 = vlaneseq
    %v1722 = vshrl.u32 %v1721, 7
    %v1723 = vsub.s32 0, %v1722
    %v1724 = vrot.slane %v1501, %v1723
    %v1725 = vlaneseq
    %v1726 = vshrl.u32 %v1725, 7
    %v1727 = vsub.s32 0, %v1726
    %v1728 = vrot.slane %v1570, %v1727
    %v1729 = vsub.f32 %v1058, %v1720
    %v1730 = vsub.f32 %v1059, %v1724
    %v1731 = vsub.f32 %v1060, %v1728
    %v1732 = vlaneseq
    %v1733 = vshrl.u32 %v1732, 7
    %v1734 = vsub.s32 0, %v1733
    %v1735 = vrot.slane %v1643, %v1734
    %v1736 = vlaneseq
    %v1737 = vshrl.u32 %v1736, 7
    %v1738 = vsub.s32 0, %v1737
    %v1739 = vrot.slane %v1645, %v1738
    %v1740 = vlaneseq
    %v1741 = vshrl.u32 %v1740, 7
    %v1742 = vsub.s32 0, %v1741
    %v1743 = vrot.slane %v1714, %v1742
    %v1744 = vmul.f32 %v1729, %v1735
    %v1745 = vmul.f32 %v1730, %v1739
    %v1746 = vmul.f32 %v1731, %v1743
    %v1747 = vld [vmem:[%s4] sm:$0xff]
    %v1748 = vld [vmem:[%s4 + $0x8] sm:$0xff]
    %v1749 = vld [vmem:[%s4 + $0x10] sm:$0xff]
    %v1750 = vld [vmem:[%s4 + $0x18] sm:$0xff]
    %v1751 = vld [vmem:[%s4 + $0x20] sm:$0xff]
    %v1752 = vld [vmem:[%s4 + $0x28] sm:$0xff]
    %v1753 = vld [vmem:[%s4 + $0x30] sm:$0xff]
    %v1754 = vld [vmem:[%s4 + $0x38] sm:$0xff]
    %v1755 = vld [vmem:[%s4 + $0x40] sm:$0xff]
    %v1756 = vld [vmem:[%s4 + $0x48] sm:$0xff]
    %v1757 = vld [vmem:[%s4 + $0x50] sm:$0xff]
    %v1758 = vld [vmem:[%s4 + $0x58] sm:$0xff]
    %v1759 = vld [vmem:[%s4 + $0x60] sm:$0xff]
    %v1760 = vld [vmem:[%s4 + $0x68] sm:$0xff]
    %v1761 = vld [vmem:[%s4 + $0x70] sm:$0xff]
    %v1762 = vld [vmem:[%s4 + $0x78] sm:$0xff]
    %v1763 = vld [vmem:[%s4 + $0x80] sm:$0xff]
    %v1764 = vld [vmem:[%s4 + $0x88] sm:$0xff]
    %v1765 = vld [vmem:[%s4 + $0x90] sm:$0xff]
    %v1766 = vld [vmem:[%s4 + $0x98] sm:$0xff]
    %v1767 = vld [vmem:[%s4 + $0xa0] sm:$0xff]
    %v1768 = vld [vmem:[%s4 + $0xa8] sm:$0xff]
    %v1769 = vld [vmem:[%s4 + $0xb0] sm:$0xff]
    %v1770 = vld [vmem:[%s4 + $0xb8] sm:$0xff]
    %v1771 = vld [vmem:[%s4 + $0xc0] sm:$0xff]
    %v1772 = vld [vmem:[%s4 + $0xc8] sm:$0xff]
    %v1773 = vld [vmem:[%s4 + $0xd0] sm:$0xff]
    %v1774 = vld [vmem:[%s4 + $0xd8] sm:$0xff]
    %v1775 = vld [vmem:[%s4 + $0xe0] sm:$0xff]
    %v1776 = vld [vmem:[%s4 + $0xe8] sm:$0xff]
    %v1777 = vld [vmem:[%s4 + $0xf0] sm:$0xff]
    %v1778 = vld [vmem:[%s4 + $0xf8] sm:$0xff]
    %v1779 = vld [vmem:[%s4 + $0x100] sm:$0xff]
    %v1780 = vld [vmem:[%s4 + $0x108] sm:$0xff]
    %v1781 = vld [vmem:[%s4 + $0x110] sm:$0xff]
    %v1782 = vld [vmem:[%s4 + $0x118] sm:$0xff]
    %v1783 = vld [vmem:[%s4 + $0x120] sm:$0xff]
    %v1784 = vld [vmem:[%s4 + $0x128] sm:$0xff]
    %v1785 = vld [vmem:[%s4 + $0x130] sm:$0xff]
    %v1786 = vld [vmem:[%s4 + $0x138] sm:$0xff]
    %v1787 = vld [vmem:[%s4 + $0x140] sm:$0xff]
    %v1788 = vld [vmem:[%s4 + $0x148] sm:$0xff]
    %v1789 = vld [vmem:[%s4 + $0x150] sm:$0xff]
    %v1790 = vld [vmem:[%s4 + $0x158] sm:$0xff]
    %v1791 = vld [vmem:[%s4 + $0x160] sm:$0xff]
    %v1792 = vld [vmem:[%s4 + $0x168] sm:$0xff]
    %v1793 = vld [vmem:[%s4 + $0x170] sm:$0xff]
    %v1794 = vld [vmem:[%s4 + $0x178] sm:$0xff]
    %v1795 = vld [vmem:[%s4 + $0x180] sm:$0xff]
    %v1796 = vld [vmem:[%s4 + $0x188] sm:$0xff]
    %v1797 = vld [vmem:[%s4 + $0x190] sm:$0xff]
    %v1798 = vld [vmem:[%s4 + $0x198] sm:$0xff]
    %v1799 = vld [vmem:[%s4 + $0x1a0] sm:$0xff]
    %v1800 = vld [vmem:[%s4 + $0x1a8] sm:$0xff]
    %v1801 = vld [vmem:[%s4 + $0x1b0] sm:$0xff]
    %v1802 = vld [vmem:[%s4 + $0x1b8] sm:$0xff]
    %v1803 = vld [vmem:[%s4 + $0x1c0] sm:$0xff]
    %v1804 = vld [vmem:[%s4 + $0x1c8] sm:$0xff]
    %v1805 = vld [vmem:[%s4 + $0x1d0] sm:$0xff]
    %v1806 = vld [vmem:[%s4 + $0x1d8] sm:$0xff]
    %v1807 = vld [vmem:[%s4 + $0x1e0] sm:$0xff]
    %v1808 = vld [vmem:[%s4 + $0x1e8] sm:$0xff]
    %v1809 = vld [vmem:[%s4 + $0x1f0] sm:$0xff]
    %v1810 = vld [vmem:[%s4 + $0x1f8] sm:$0xff]
    %v1811 = vld [vmem:[%s4 + $0x200] sm:$0xff]
    %v1812 = vld [vmem:[%s4 + $0x208] sm:$0xff]
    %v1813 = vld [vmem:[%s4 + $0x210] sm:$0xff]
    %v1814 = vld [vmem:[%s4 + $0x218] sm:$0xff]
    %v1815 = vld [vmem:[%s4 + $0x220] sm:$0xff]
    %v1816 = vld [vmem:[%s4 + $0x228] sm:$0xff]
    %v1817 = vld [vmem:[%s4 + $0x230] sm:$0xff]
    %v1818 = vld [vmem:[%s4 + $0x238] sm:$0xff]
    %v1819 = vld [vmem:[%s4 + $0x240] sm:$0xff]
    %v1820 = vld [vmem:[%s4 + $0x248] sm:$0xff]
    %v1821 = vld [vmem:[%s4 + $0x250] sm:$0xff]
    %v1822 = vld [vmem:[%s4 + $0x258] sm:$0xff]
    %v1823 = vld [vmem:[%s4 + $0x260] sm:$0xff]
    %v1824 = vld [vmem:[%s4 + $0x268] sm:$0xff]
    %v1825 = vld [vmem:[%s4 + $0x270] sm:$0xff]
    %v1826 = vld [vmem:[%s4 + $0x278] sm:$0xff]
    %v1827 = vld [vmem:[%s4 + $0x280] sm:$0xff]
    %v1828 = vld [vmem:[%s4 + $0x288] sm:$0xff]
    %v1829 = vld [vmem:[%s4 + $0x290] sm:$0xff]
    %v1830 = vld [vmem:[%s4 + $0x298] sm:$0xff]
    %v1831 = vld [vmem:[%s4 + $0x2a0] sm:$0xff]
    %v1832 = vld [vmem:[%s4 + $0x2a8] sm:$0xff]
    %v1833 = vld [vmem:[%s4 + $0x2b0] sm:$0xff]
    %v1834 = vld [vmem:[%s4 + $0x2b8] sm:$0xff]
    %v1835 = vld [vmem:[%s4 + $0x2c0] sm:$0xff]
    %v1836 = vld [vmem:[%s4 + $0x2c8] sm:$0xff]
    %v1837 = vld [vmem:[%s4 + $0x2d0] sm:$0xff]
    %v1838 = vld [vmem:[%s4 + $0x2d8] sm:$0xff]
    %v1839 = vld [vmem:[%s4 + $0x2e0] sm:$0xff]
    %v1840 = vld [vmem:[%s4 + $0x2e8] sm:$0xff]
    %v1841 = vld [vmem:[%s4 + $0x2f0] sm:$0xff]
    %v1842 = vld [vmem:[%s4 + $0x2f8] sm:$0xff]
    %v1843 = vld [vmem:[%s4 + $0x300] sm:$0xff]
    %v1844 = vld [vmem:[%s4 + $0x308] sm:$0xff]
    %v1845 = vld [vmem:[%s4 + $0x310] sm:$0xff]
    %v1846 = vld [vmem:[%s4 + $0x318] sm:$0xff]
    %v1847 = vld [vmem:[%s4 + $0x320] sm:$0xff]
    %v1848 = vld [vmem:[%s4 + $0x328] sm:$0xff]
    %v1849 = vld [vmem:[%s4 + $0x330] sm:$0xff]
    %v1850 = vld [vmem:[%s4 + $0x338] sm:$0xff]
    %v1851 = vld [vmem:[%s4 + $0x340] sm:$0xff]
    %v1852 = vld [vmem:[%s4 + $0x348] sm:$0xff]
    %v1853 = vld [vmem:[%s4 + $0x350] sm:$0xff]
    %v1854 = vld [vmem:[%s4 + $0x358] sm:$0xff]
    %v1855 = vld [vmem:[%s4 + $0x360] sm:$0xff]
    %v1856 = vld [vmem:[%s4 + $0x368] sm:$0xff]
    %v1857 = vld [vmem:[%s4 + $0x370] sm:$0xff]
    %v1858 = vld [vmem:[%s4 + $0x378] sm:$0xff]
    %v1859 = vld [vmem:[%s4 + $0x380] sm:$0xff]
    %v1860 = vld [vmem:[%s4 + $0x388] sm:$0xff]
    %v1861 = vld [vmem:[%s4 + $0x390] sm:$0xff]
    %v1862 = vld [vmem:[%s4 + $0x398] sm:$0xff]
    %v1863 = vld [vmem:[%s4 + $0x3a0] sm:$0xff]
    %v1864 = vld [vmem:[%s4 + $0x3a8] sm:$0xff]
    %v1865 = vld [vmem:[%s4 + $0x3b0] sm:$0xff]
    %v1866 = vld [vmem:[%s4 + $0x3b8] sm:$0xff]
    %v1867 = vld [vmem:[%s4 + $0x3c0] sm:$0xff]
    %v1868 = vld [vmem:[%s4 + $0x3c8] sm:$0xff]
    %v1869 = vld [vmem:[%s4 + $0x3d0] sm:$0xff]
    %v1870 = vld [vmem:[%s4 + $0x3d8] sm:$0xff]
    %v1871 = vld [vmem:[%s4 + $0x3e0] sm:$0xff]
    %v1872 = vld [vmem:[%s4 + $0x3e8] sm:$0xff]
    %v1873 = vld [vmem:[%s4 + $0x3f0] sm:$0xff]
    %v1874 = vld [vmem:[%s4 + $0x3f8] sm:$0xff]
    %v1875 = vld [vmem:[%s4 + $0x400] sm:$0xff]
    %v1876 = vld [vmem:[%s4 + $0x408] sm:$0xff]
    %v1877 = vld [vmem:[%s4 + $0x410] sm:$0xff]
    %v1878 = vld [vmem:[%s4 + $0x418] sm:$0xff]
    %v1879 = vld [vmem:[%s4 + $0x420] sm:$0xff]
    %v1880 = vld [vmem:[%s4 + $0x428] sm:$0xff]
    %v1881 = vld [vmem:[%s4 + $0x430] sm:$0xff]
    %v1882 = vld [vmem:[%s4 + $0x438] sm:$0xff]
    %v1883 = vld [vmem:[%s4 + $0x440] sm:$0xff]
    %v1884 = vld [vmem:[%s4 + $0x448] sm:$0xff]
    %v1885 = vld [vmem:[%s4 + $0x450] sm:$0xff]
    %v1886 = vld [vmem:[%s4 + $0x458] sm:$0xff]
    %v1887 = vld [vmem:[%s4 + $0x460] sm:$0xff]
    %v1888 = vld [vmem:[%s4 + $0x468] sm:$0xff]
    %v1889 = vld [vmem:[%s4 + $0x470] sm:$0xff]
    %v1890 = vld [vmem:[%s4 + $0x478] sm:$0xff]
    %v1891 = vld [vmem:[%s4 + $0x480] sm:$0xff]
    %v1892 = vld [vmem:[%s4 + $0x488] sm:$0xff]
    %v1893 = vld [vmem:[%s4 + $0x490] sm:$0xff]
    %v1894 = vld [vmem:[%s4 + $0x498] sm:$0xff]
    %v1895 = vld [vmem:[%s4 + $0x4a0] sm:$0xff]
    %v1896 = vld [vmem:[%s4 + $0x4a8] sm:$0xff]
    %v1897 = vld [vmem:[%s4 + $0x4b0] sm:$0xff]
    %v1898 = vld [vmem:[%s4 + $0x4b8] sm:$0xff]
    %v1899 = vld [vmem:[%s4 + $0x4c0] sm:$0xff]
    %v1900 = vld [vmem:[%s4 + $0x4c8] sm:$0xff]
    %v1901 = vld [vmem:[%s4 + $0x4d0] sm:$0xff]
    %v1902 = vld [vmem:[%s4 + $0x4d8] sm:$0xff]
    %v1903 = vld [vmem:[%s4 + $0x4e0] sm:$0xff]
    %v1904 = vld [vmem:[%s4 + $0x4e8] sm:$0xff]
    %v1905 = vld [vmem:[%s4 + $0x4f0] sm:$0xff]
    %v1906 = vld [vmem:[%s4 + $0x4f8] sm:$0xff]
    %v1907 = vld [vmem:[%s4 + $0x500] sm:$0xff]
    %v1908 = vld [vmem:[%s4 + $0x508] sm:$0xff]
    %v1909 = vld [vmem:[%s4 + $0x510] sm:$0xff]
    %v1910 = vld [vmem:[%s4 + $0x518] sm:$0xff]
    %v1911 = vld [vmem:[%s4 + $0x520] sm:$0xff]
    %v1912 = vld [vmem:[%s4 + $0x528] sm:$0xff]
    %v1913 = vld [vmem:[%s4 + $0x530] sm:$0xff]
    %v1914 = vld [vmem:[%s4 + $0x538] sm:$0xff]
    %v1915 = vld [vmem:[%s4 + $0x540] sm:$0xff]
    %v1916 = vld [vmem:[%s4 + $0x548] sm:$0xff]
    %v1917 = vld [vmem:[%s4 + $0x550] sm:$0xff]
    %v1918 = vld [vmem:[%s4 + $0x558] sm:$0xff]
    %v1919 = vld [vmem:[%s4 + $0x560] sm:$0xff]
    %v1920 = vld [vmem:[%s4 + $0x568] sm:$0xff]
    %v1921 = vld [vmem:[%s4 + $0x570] sm:$0xff]
    %v1922 = vld [vmem:[%s4 + $0x578] sm:$0xff]
    %v1923 = vld [vmem:[%s4 + $0x580] sm:$0xff]
    %v1924 = vld [vmem:[%s4 + $0x588] sm:$0xff]
    %v1925 = vld [vmem:[%s4 + $0x590] sm:$0xff]
    %v1926 = vld [vmem:[%s4 + $0x598] sm:$0xff]
    %v1927 = vld [vmem:[%s4 + $0x5a0] sm:$0xff]
    %v1928 = vld [vmem:[%s4 + $0x5a8] sm:$0xff]
    %v1929 = vld [vmem:[%s4 + $0x5b0] sm:$0xff]
    %v1930 = vld [vmem:[%s4 + $0x5b8] sm:$0xff]
    %v1931 = vld [vmem:[%s4 + $0x5c0] sm:$0xff]
    %v1932 = vld [vmem:[%s4 + $0x5c8] sm:$0xff]
    %v1933 = vld [vmem:[%s4 + $0x5d0] sm:$0xff]
    %v1934 = vld [vmem:[%s4 + $0x5d8] sm:$0xff]
    %v1935 = vld [vmem:[%s4 + $0x5e0] sm:$0xff]
    %v1936 = vld [vmem:[%s4 + $0x5e8] sm:$0xff]
    %v1937 = vld [vmem:[%s4 + $0x5f0] sm:$0xff]
    %v1938 = vld [vmem:[%s4 + $0x5f8] sm:$0xff]
    %v1939 = vld [vmem:[%s4 + $0x600] sm:$0xff]
    %v1940 = vld [vmem:[%s4 + $0x608] sm:$0xff]
    %v1941 = vld [vmem:[%s4 + $0x610] sm:$0xff]
    %v1942 = vld [vmem:[%s4 + $0x618] sm:$0xff]
    %v1943 = vld [vmem:[%s4 + $0x620] sm:$0xff]
    %v1944 = vld [vmem:[%s4 + $0x628] sm:$0xff]
    %v1945 = vld [vmem:[%s4 + $0x630] sm:$0xff]
    %v1946 = vld [vmem:[%s4 + $0x638] sm:$0xff]
    %v1947 = vld [vmem:[%s4 + $0x640] sm:$0xff]
    %v1948 = vld [vmem:[%s4 + $0x648] sm:$0xff]
    %v1949 = vld [vmem:[%s4 + $0x650] sm:$0xff]
    %v1950 = vld [vmem:[%s4 + $0x658] sm:$0xff]
    %v1951 = vld [vmem:[%s4 + $0x660] sm:$0xff]
    %v1952 = vld [vmem:[%s4 + $0x668] sm:$0xff]
    %v1953 = vld [vmem:[%s4 + $0x670] sm:$0xff]
    %v1954 = vld [vmem:[%s4 + $0x678] sm:$0xff]
    %v1955 = vld [vmem:[%s4 + $0x680] sm:$0xff]
    %v1956 = vld [vmem:[%s4 + $0x688] sm:$0xff]
    %v1957 = vld [vmem:[%s4 + $0x690] sm:$0xff]
    %v1958 = vld [vmem:[%s4 + $0x698] sm:$0xff]
    %v1959 = vld [vmem:[%s4 + $0x6a0] sm:$0xff]
    %v1960 = vld [vmem:[%s4 + $0x6a8] sm:$0xff]
    %v1961 = vld [vmem:[%s4 + $0x6b0] sm:$0xff]
    %v1962 = vld [vmem:[%s4 + $0x6b8] sm:$0xff]
    %v1963 = vld [vmem:[%s4 + $0x6c0] sm:$0xff]
    %v1964 = vld [vmem:[%s4 + $0x6c8] sm:$0xff]
    %v1965 = vld [vmem:[%s4 + $0x6d0] sm:$0xff]
    %v1966 = vld [vmem:[%s4 + $0x6d8] sm:$0xff]
    %v1967 = vld [vmem:[%s4 + $0x6e0] sm:$0xff]
    %v1968 = vld [vmem:[%s4 + $0x6e8] sm:$0xff]
    %v1969 = vld [vmem:[%s4 + $0x6f0] sm:$0xff]
    %v1970 = vld [vmem:[%s4 + $0x6f8] sm:$0xff]
    %v1971 = vld [vmem:[%s4 + $0x700] sm:$0xff]
    %v1972 = vld [vmem:[%s4 + $0x708] sm:$0xff]
    %v1973 = vld [vmem:[%s4 + $0x710] sm:$0xff]
    %v1974 = vld [vmem:[%s4 + $0x718] sm:$0xff]
    %v1975 = vld [vmem:[%s4 + $0x720] sm:$0xff]
    %v1976 = vld [vmem:[%s4 + $0x728] sm:$0xff]
    %v1977 = vld [vmem:[%s4 + $0x730] sm:$0xff]
    %v1978 = vld [vmem:[%s4 + $0x738] sm:$0xff]
    %v1979 = vld [vmem:[%s4 + $0x740] sm:$0xff]
    %v1980 = vld [vmem:[%s4 + $0x748] sm:$0xff]
    %v1981 = vld [vmem:[%s4 + $0x750] sm:$0xff]
    %v1982 = vld [vmem:[%s4 + $0x758] sm:$0xff]
    %v1983 = vld [vmem:[%s4 + $0x760] sm:$0xff]
    %v1984 = vld [vmem:[%s4 + $0x768] sm:$0xff]
    %v1985 = vld [vmem:[%s4 + $0x770] sm:$0xff]
    %v1986 = vld [vmem:[%s4 + $0x778] sm:$0xff]
    %v1987 = vld [vmem:[%s4 + $0x780] sm:$0xff]
    %v1988 = vld [vmem:[%s4 + $0x788] sm:$0xff]
    %v1989 = vld [vmem:[%s4 + $0x790] sm:$0xff]
    %v1990 = vld [vmem:[%s4 + $0x798] sm:$0xff]
    %v1991 = vld [vmem:[%s4 + $0x7a0] sm:$0xff]
    %v1992 = vld [vmem:[%s4 + $0x7a8] sm:$0xff]
    %v1993 = vld [vmem:[%s4 + $0x7b0] sm:$0xff]
    %v1994 = vld [vmem:[%s4 + $0x7b8] sm:$0xff]
    %v1995 = vld [vmem:[%s4 + $0x7c0] sm:$0xff]
    %v1996 = vld [vmem:[%s4 + $0x7c8] sm:$0xff]
    %v1997 = vld [vmem:[%s4 + $0x7d0] sm:$0xff]
    %v1998 = vld [vmem:[%s4 + $0x7d8] sm:$0xff]
    %v1999 = vld [vmem:[%s4 + $0x7e0] sm:$0xff]
    %v2000 = vld [vmem:[%s4 + $0x7e8] sm:$0xff]
    %v2001 = vld [vmem:[%s4 + $0x7f0] sm:$0xff]
    %v2002 = vld [vmem:[%s4 + $0x7f8] sm:$0xff]
    %v2003 = vld [vmem:[%s4 + $0x800] sm:$0xff]
    %v2004 = vld [vmem:[%s4 + $0x808] sm:$0xff]
    %v2005 = vld [vmem:[%s4 + $0x810] sm:$0xff]
    %v2006 = vld [vmem:[%s4 + $0x818] sm:$0xff]
    %v2007 = vld [vmem:[%s4 + $0x820] sm:$0xff]
    %v2008 = vld [vmem:[%s4 + $0x828] sm:$0xff]
    %v2009 = vld [vmem:[%s4 + $0x830] sm:$0xff]
    %v2010 = vld [vmem:[%s4 + $0x838] sm:$0xff]
    %v2011 = vld [vmem:[%s4 + $0x840] sm:$0xff]
    %v2012 = vld [vmem:[%s4 + $0x848] sm:$0xff]
    %v2013 = vld [vmem:[%s4 + $0x850] sm:$0xff]
    %v2014 = vld [vmem:[%s4 + $0x858] sm:$0xff]
    %v2015 = vld [vmem:[%s4 + $0x860] sm:$0xff]
    %v2016 = vld [vmem:[%s4 + $0x868] sm:$0xff]
    %v2017 = vld [vmem:[%s4 + $0x870] sm:$0xff]
    %v2018 = vld [vmem:[%s4 + $0x878] sm:$0xff]
    %v2019 = vld [vmem:[%s4 + $0x880] sm:$0xff]
    %v2020 = vld [vmem:[%s4 + $0x888] sm:$0xff]
    %v2021 = vld [vmem:[%s4 + $0x890] sm:$0xff]
    %v2022 = vld [vmem:[%s4 + $0x898] sm:$0xff]
    %v2023 = vld [vmem:[%s4 + $0x8a0] sm:$0xff]
    %v2024 = vld [vmem:[%s4 + $0x8a8] sm:$0xff]
    %v2025 = vld [vmem:[%s4 + $0x8b0] sm:$0xff]
    %v2026 = vld [vmem:[%s4 + $0x8b8] sm:$0xff]
    %v2027 = vld [vmem:[%s4 + $0x8c0] sm:$0xff]
    %v2028 = vld [vmem:[%s4 + $0x8c8] sm:$0xff]
    %v2029 = vld [vmem:[%s4 + $0x8d0] sm:$0xff]
    %v2030 = vld [vmem:[%s4 + $0x8d8] sm:$0xff]
    %v2031 = vld [vmem:[%s4 + $0x8e0] sm:$0xff]
    %v2032 = vld [vmem:[%s4 + $0x8e8] sm:$0xff]
    %v2033 = vld [vmem:[%s4 + $0x8f0] sm:$0xff]
    %v2034 = vld [vmem:[%s4 + $0x8f8] sm:$0xff]
    %v2035 = vld [vmem:[%s4 + $0x900] sm:$0xff]
    %v2036 = vld [vmem:[%s4 + $0x908] sm:$0xff]
    %v2037 = vld [vmem:[%s4 + $0x910] sm:$0xff]
    %v2038 = vld [vmem:[%s4 + $0x918] sm:$0xff]
    %v2039 = vld [vmem:[%s4 + $0x920] sm:$0xff]
    %v2040 = vld [vmem:[%s4 + $0x928] sm:$0xff]
    %v2041 = vld [vmem:[%s4 + $0x930] sm:$0xff]
    %v2042 = vld [vmem:[%s4 + $0x938] sm:$0xff]
    %v2043 = vld [vmem:[%s4 + $0x940] sm:$0xff]
    %v2044 = vld [vmem:[%s4 + $0x948] sm:$0xff]
    %v2045 = vld [vmem:[%s4 + $0x950] sm:$0xff]
    %v2046 = vld [vmem:[%s4 + $0x958] sm:$0xff]
    %v2047 = vld [vmem:[%s4 + $0x960] sm:$0xff]
    %v2048 = vld [vmem:[%s4 + $0x968] sm:$0xff]
    %v2049 = vld [vmem:[%s4 + $0x970] sm:$0xff]
    %v2050 = vld [vmem:[%s4 + $0x978] sm:$0xff]
    %v2051 = vld [vmem:[%s4 + $0x980] sm:$0xff]
    %v2052 = vld [vmem:[%s4 + $0x988] sm:$0xff]
    %v2053 = vld [vmem:[%s4 + $0x990] sm:$0xff]
    %v2054 = vld [vmem:[%s4 + $0x998] sm:$0xff]
    %v2055 = vld [vmem:[%s4 + $0x9a0] sm:$0xff]
    %v2056 = vld [vmem:[%s4 + $0x9a8] sm:$0xff]
    %v2057 = vld [vmem:[%s4 + $0x9b0] sm:$0xff]
    %v2058 = vld [vmem:[%s4 + $0x9b8] sm:$0xff]
    %v2059 = vld [vmem:[%s4 + $0x9c0] sm:$0xff]
    %v2060 = vld [vmem:[%s4 + $0x9c8] sm:$0xff]
    %v2061 = vld [vmem:[%s4 + $0x9d0] sm:$0xff]
    %v2062 = vld [vmem:[%s4 + $0x9d8] sm:$0xff]
    %v2063 = vld [vmem:[%s4 + $0x9e0] sm:$0xff]
    %v2064 = vld [vmem:[%s4 + $0x9e8] sm:$0xff]
    %v2065 = vld [vmem:[%s4 + $0x9f0] sm:$0xff]
    %v2066 = vld [vmem:[%s4 + $0x9f8] sm:$0xff]
    %v2067 = vld [vmem:[%s4 + $0xa00] sm:$0xf]
    %v2068 = vld [vmem:[%s4 + $0xa08] sm:$0xf]
    %v2069 = vld [vmem:[%s4 + $0xa10] sm:$0xf]
    %v2070 = vld [vmem:[%s4 + $0xa18] sm:$0xf]
    %v2071 = vld [vmem:[%s4 + $0xa20] sm:$0xf]
    %v2072 = vld [vmem:[%s4 + $0xa28] sm:$0xf]
    %v2073 = vld [vmem:[%s4 + $0xa30] sm:$0xf]
    %v2074 = vld [vmem:[%s4 + $0xa38] sm:$0xf]
    %v2076 = vsel %vm1102, %v1746, 0
    %v2079 = vsel %vm1106, %v2067, 0
    %v2082 = vsel %vm1106, %v2068, 0
    %v2085 = vsel %vm1106, %v2069, 0
    %v2088 = vsel %vm1106, %v2070, 0
    %v2091 = vsel %vm1106, %v2071, 0
    %v2094 = vsel %vm1106, %v2072, 0
    %v2097 = vsel %vm1106, %v2073, 0
    %v2100 = vsel %vm1106, %v2074, 0
    %2102 = vmatprep.subr.mxu0 %v1748
    %2103 = vmatpush1.msra.mxu0 %v1747
    %2104 = vmatprep.subr.mxu0 %v1756
    %2105 = vmatpush1.msra.mxu0 %v1755
    %2106 = vmatprep.subr.mxu0 %v1764
    %2107 = vmatpush1.msra.mxu0 %v1763
    %2108 = vmatprep.subr.mxu0 %v1772
    %2109 = vmatpush1.msra.mxu0 %v1771
    %2110 = vmatprep.subr.mxu0 %v1780
    %2111 = vmatpush1.msra.mxu0 %v1779
    %2112 = vmatprep.subr.mxu0 %v1788
    %2113 = vmatpush1.msra.mxu0 %v1787
    %2114 = vmatprep.subr.mxu0 %v1796
    %2115 = vmatpush1.msra.mxu0 %v1795
    %2116 = vmatprep.subr.mxu0 %v1804
    %2117 = vmatpush1.msra.mxu0 %v1803
    %2118 = vmatprep.subr.mxu0 %v1812
    %2119 = vmatpush1.msra.mxu0 %v1811
    %2120 = vmatprep.subr.mxu0 %v1820
    %2121 = vmatpush1.msra.mxu0 %v1819
    %2122 = vmatprep.subr.mxu0 %v1828
    %2123 = vmatpush1.msra.mxu0 %v1827
    %2124 = vmatprep.subr.mxu0 %v1836
    %2125 = vmatpush1.msra.mxu0 %v1835
    %2126 = vmatprep.subr.mxu0 %v1844
    %2127 = vmatpush1.msra.mxu0 %v1843
    %2128 = vmatprep.subr.mxu0 %v1852
    %2129 = vmatpush1.msra.mxu0 %v1851
    %2130 = vmatprep.subr.mxu0 %v1860
    %2131 = vmatpush1.msra.mxu0 %v1859
    %2132 = vmatprep.subr.mxu0 %v1868
    %2133 = vmatpush1.msra.mxu0 %v1867
    %2134 = vmatprep.subr.mxu0 %v1876
    %2135 = vmatpush1.msra.mxu0 %v1875
    %2136 = vmatprep.subr.mxu0 %v1884
    %2137 = vmatpush1.msra.mxu0 %v1883
    %2138 = vmatprep.subr.mxu0 %v1892
    %2139 = vmatpush1.msra.mxu0 %v1891
    %2140 = vmatprep.subr.mxu0 %v1900
    %2141 = vmatpush1.msra.mxu0 %v1899
    %2142 = vmatprep.subr.mxu0 %v1908
    %2143 = vmatpush1.msra.mxu0 %v1907
    %2144 = vmatprep.subr.mxu0 %v1916
    %2145 = vmatpush1.msra.mxu0 %v1915
    %2146 = vmatprep.subr.mxu0 %v1924
    %2147 = vmatpush1.msra.mxu0 %v1923
    %2148 = vmatprep.subr.mxu0 %v1932
    %2149 = vmatpush1.msra.mxu0 %v1931
    %2150 = vmatprep.subr.mxu0 %v1940
    %2151 = vmatpush1.msra.mxu0 %v1939
    %2152 = vmatprep.subr.mxu0 %v1948
    %2153 = vmatpush1.msra.mxu0 %v1947
    %2154 = vmatprep.subr.mxu0 %v1956
    %2155 = vmatpush1.msra.mxu0 %v1955
    %2156 = vmatprep.subr.mxu0 %v1964
    %2157 = vmatpush1.msra.mxu0 %v1963
    %2158 = vmatprep.subr.mxu0 %v1972
    %2159 = vmatpush1.msra.mxu0 %v1971
    %2160 = vmatprep.subr.mxu0 %v1980
    %2161 = vmatpush1.msra.mxu0 %v1979
    %2162 = vmatprep.subr.mxu0 %v1988
    %2163 = vmatpush1.msra.mxu0 %v1987
    %2164 = vmatprep.subr.mxu0 %v1996
    %2165 = vmatpush1.msra.mxu0 %v1995
    %2166 = vmatprep.mubr.f32.mxu0 %v1745
    %2167 = vmatmul.mubr.f32.gmra.mrb[0].mxu0 %v1744
    %v2168 = vpop.f32.mrb[0].mxu0
    %v2169 = vadd.f32 0.0, %v2168
    %v2170 = vpop.f32.mrb[0].mxu0
    %v2171 = vadd.f32 0.0, %v2170
    %2172 = vdwg.mxu0
    %2173 = vmatprep.subr.mxu0 %v2004
    %2174 = vmatpush1.msra.mxu0 %v2003
    %2175 = vmatprep.subr.mxu0 %v2012
    %2176 = vmatpush1.msra.mxu0 %v2011
    %2177 = vmatprep.subr.mxu0 %v2020
    %2178 = vmatpush1.msra.mxu0 %v2019
    %2179 = vmatprep.subr.mxu0 %v2028
    %2180 = vmatpush1.msra.mxu0 %v2027
    %2181 = vmatprep.subr.mxu0 %v2036
    %2182 = vmatpush1.msra.mxu0 %v2035
    %2183 = vmatprep.subr.mxu0 %v2044
    %2184 = vmatpush1.msra.mxu0 %v2043
    %2185 = vmatprep.subr.mxu0 %v2052
    %2186 = vmatpush1.msra.mxu0 %v2051
    %2187 = vmatprep.subr.mxu0 %v2060
    %2188 = vmatpush1.msra.mxu0 %v2059
    %2189 = vmatprep.subr.mxu0 %v2082
    %2190 = vmatpush1.msra.mxu0 %v2079
    %2191 = vmatprep.subr.mxu0 0.0
    %2192 = vmatpush1.msra.mxu0 0.0
    %2193 = vmatprep.subr.mxu0 0.0
    %2194 = vmatpush1.msra.mxu0 0.0
    %2195 = vmatprep.subr.mxu0 0.0
    %2196 = vmatpush1.msra.mxu0 0.0
    %2197 = vmatprep.subr.mxu0 0.0
    %2198 = vmatpush1.msra.mxu0 0.0
    %2199 = vmatprep.subr.mxu0 0.0
    %2200 = vmatpush1.msra.mxu0 0.0
    %2201 = vmatprep.subr.mxu0 0.0
    %2202 = vmatpush1.msra.mxu0 0.0
    %2203 = vmatprep.subr.mxu0 0.0
    %2204 = vmatpush1.msra.mxu0 0.0
    %2205 = vmatprep.subr.mxu0 0.0
    %2206 = vmatpush1.msra.mxu0 0.0
    %2207 = vmatprep.subr.mxu0 0.0
    %2208 = vmatpush1.msra.mxu0 0.0
    %2209 = vmatprep.subr.mxu0 0.0
    %2210 = vmatpush1.msra.mxu0 0.0
    %2211 = vmatprep.subr.mxu0 0.0
    %2212 = vmatpush1.msra.mxu0 0.0
    %2213 = vmatprep.subr.mxu0 0.0
    %2214 = vmatpush1.msra.mxu0 0.0
    %2215 = vmatprep.subr.mxu0 0.0
    %2216 = vmatpush1.msra.mxu0 0.0
    %2217 = vmatprep.subr.mxu0 0.0
    %2218 = vmatpush1.msra.mxu0 0.0
    %2219 = vmatprep.subr.mxu0 0.0
    %2220 = vmatpush1.msra.mxu0 0.0
    %2221 = vmatprep.subr.mxu0 0.0
    %2222 = vmatpush1.msra.mxu0 0.0
    %2223 = vmatprep.subr.mxu0 0.0
    %2224 = vmatpush1.msra.mxu0 0.0
    %2225 = vmatprep.subr.mxu0 0.0
    %2226 = vmatpush1.msra.mxu0 0.0
    %2227 = vmatprep.subr.mxu0 0.0
    %2228 = vmatpush1.msra.mxu0 0.0
    %2229 = vmatprep.subr.mxu0 0.0
    %2230 = vmatpush1.msra.mxu0 0.0
    %2231 = vmatprep.subr.mxu0 0.0
    %2232 = vmatpush1.msra.mxu0 0.0
    %2233 = vmatprep.subr.mxu0 0.0
    %2234 = vmatpush1.msra.mxu0 0.0
    %2235 = vmatprep.subr.mxu0 0.0
    %2236 = vmatpush1.msra.mxu0 0.0
    %2237 = vmatprep.mubr.f32.mxu0 0.0
    %2238 = vmatmul.mubr.f32.gmra.mrb[0].mxu0 %v2076
    %v2239 = vpop.f32.mrb[0].mxu0
    %v2240 = vadd.f32 %v2169, %v2239
    %v2241 = vpop.f32.mrb[0].mxu0
    %v2242 = vadd.f32 %v2171, %v2241
    %2243 = vdwg.mxu0
    %2244 = vmatprep.subr.mxu0 %v1750
    %2245 = vmatpush1.msra.mxu0 %v1749
    %2246 = vmatprep.subr.mxu0 %v1758
    %2247 = vmatpush1.msra.mxu0 %v1757
    %2248 = vmatprep.subr.mxu0 %v1766
    %2249 = vmatpush1.msra.mxu0 %v1765
    %2250 = vmatprep.subr.mxu0 %v1774
    %2251 = vmatpush1.msra.mxu0 %v1773
    %2252 = vmatprep.subr.mxu0 %v1782
    %2253 = vmatpush1.msra.mxu0 %v1781
    %2254 = vmatprep.subr.mxu0 %v1790
    %2255 = vmatpush1.msra.mxu0 %v1789
    %2256 = vmatprep.subr.mxu0 %v1798
    %2257 = vmatpush1.msra.mxu0 %v1797
    %2258 = vmatprep.subr.mxu0 %v1806
    %2259 = vmatpush1.msra.mxu0 %v1805
    %2260 = vmatprep.subr.mxu0 %v1814
    %2261 = vmatpush1.msra.mxu0 %v1813
    %2262 = vmatprep.subr.mxu0 %v1822
    %2263 = vmatpush1.msra.mxu0 %v1821
    %2264 = vmatprep.subr.mxu0 %v1830
    %2265 = vmatpush1.msra.mxu0 %v1829
    %2266 = vmatprep.subr.mxu0 %v1838
    %2267 = vmatpush1.msra.mxu0 %v1837
    %2268 = vmatprep.subr.mxu0 %v1846
    %2269 = vmatpush1.msra.mxu0 %v1845
    %2270 = vmatprep.subr.mxu0 %v1854
    %2271 = vmatpush1.msra.mxu0 %v1853
    %2272 = vmatprep.subr.mxu0 %v1862
    %2273 = vmatpush1.msra.mxu0 %v1861
    %2274 = vmatprep.subr.mxu0 %v1870
    %2275 = vmatpush1.msra.mxu0 %v1869
    %2276 = vmatprep.subr.mxu0 %v1878
    %2277 = vmatpush1.msra.mxu0 %v1877
    %2278 = vmatprep.subr.mxu0 %v1886
    %2279 = vmatpush1.msra.mxu0 %v1885
    %2280 = vmatprep.subr.mxu0 %v1894
    %2281 = vmatpush1.msra.mxu0 %v1893
    %2282 = vmatprep.subr.mxu0 %v1902
    %2283 = vmatpush1.msra.mxu0 %v1901
    %2284 = vmatprep.subr.mxu0 %v1910
    %2285 = vmatpush1.msra.mxu0 %v1909
    %2286 = vmatprep.subr.mxu0 %v1918
    %2287 = vmatpush1.msra.mxu0 %v1917
    %2288 = vmatprep.subr.mxu0 %v1926
    %2289 = vmatpush1.msra.mxu0 %v1925
    %2290 = vmatprep.subr.mxu0 %v1934
    %2291 = vmatpush1.msra.mxu0 %v1933
    %2292 = vmatprep.subr.mxu0 %v1942
    %2293 = vmatpush1.msra.mxu0 %v1941
    %2294 = vmatprep.subr.mxu0 %v1950
    %2295 = vmatpush1.msra.mxu0 %v1949
    %2296 = vmatprep.subr.mxu0 %v1958
    %2297 = vmatpush1.msra.mxu0 %v1957
    %2298 = vmatprep.subr.mxu0 %v1966
    %2299 = vmatpush1.msra.mxu0 %v1965
    %2300 = vmatprep.subr.mxu0 %v1974
    %2301 = vmatpush1.msra.mxu0 %v1973
    %2302 = vmatprep.subr.mxu0 %v1982
    %2303 = vmatpush1.msra.mxu0 %v1981
    %2304 = vmatprep.subr.mxu0 %v1990
    %2305 = vmatpush1.msra.mxu0 %v1989
    %2306 = vmatprep.subr.mxu0 %v1998
    %2307 = vmatpush1.msra.mxu0 %v1997
    %2308 = vmatprep.mubr.f32.mxu0 %v1745
    %2309 = vmatmul.mubr.f32.gmra.mrb[0].mxu0 %v1744
    %v2310 = vpop.f32.mrb[0].mxu0
    %v2311 = vadd.f32 0.0, %v2310
    %v2312 = vpop.f32.mrb[0].mxu0
    %v2313 = vadd.f32 0.0, %v2312
    %2314 = vdwg.mxu0
    %2315 = vmatprep.subr.mxu0 %v2006
    %2316 = vmatpush1.msra.mxu0 %v2005
    %2317 = vmatprep.subr.mxu0 %v2014
    %2318 = vmatpush1.msra.mxu0 %v2013
    %2319 = vmatprep.subr.mxu0 %v2022
    %2320 = vmatpush1.msra.mxu0 %v2021
    %2321 = vmatprep.subr.mxu0 %v2030
    %2322 = vmatpush1.msra.mxu0 %v2029
    %2323 = vmatprep.subr.mxu0 %v2038
    %2324 = vmatpush1.msra.mxu0 %v2037
    %2325 = vmatprep.subr.mxu0 %v2046
    %2326 = vmatpush1.msra.mxu0 %v2045
    %2327 = vmatprep.subr.mxu0 %v2054
    %2328 = vmatpush1.msra.mxu0 %v2053
    %2329 = vmatprep.subr.mxu0 %v2062
    %2330 = vmatpush1.msra.mxu0 %v2061
    %2331 = vmatprep.subr.mxu0 %v2088
    %2332 = vmatpush1.msra.mxu0 %v2085
    %2333 = vmatprep.subr.mxu0 0.0
    %2334 = vmatpush1.msra.mxu0 0.0
    %2335 = vmatprep.subr.mxu0 0.0
    %2336 = vmatpush1.msra.mxu0 0.0
    %2337 = vmatprep.subr.mxu0 0.0
    %2338 = vmatpush1.msra.mxu0 0.0
    %2339 = vmatprep.subr.mxu0 0.0
    %2340 = vmatpush1.msra.mxu0 0.0
    %2341 = vmatprep.subr.mxu0 0.0
    %2342 = vmatpush1.msra.mxu0 0.0
    %2343 = vmatprep.subr.mxu0 0.0
    %2344 = vmatpush1.msra.mxu0 0.0
    %2345 = vmatprep.subr.mxu0 0.0
    %2346 = vmatpush1.msra.mxu0 0.0
    %2347 = vmatprep.subr.mxu0 0.0
    %2348 = vmatpush1.msra.mxu0 0.0
    %2349 = vmatprep.subr.mxu0 0.0
    %2350 = vmatpush1.msra.mxu0 0.0
    %2351 = vmatprep.subr.mxu0 0.0
    %2352 = vmatpush1.msra.mxu0 0.0
    %2353 = vmatprep.subr.mxu0 0.0
    %2354 = vmatpush1.msra.mxu0 0.0
    %2355 = vmatprep.subr.mxu0 0.0
    %2356 = vmatpush1.msra.mxu0 0.0
    %2357 = vmatprep.subr.mxu0 0.0
    %2358 = vmatpush1.msra.mxu0 0.0
    %2359 = vmatprep.subr.mxu0 0.0
    %2360 = vmatpush1.msra.mxu0 0.0
    %2361 = vmatprep.subr.mxu0 0.0
    %2362 = vmatpush1.msra.mxu0 0.0
    %2363 = vmatprep.subr.mxu0 0.0
    %2364 = vmatpush1.msra.mxu0 0.0
    %2365 = vmatprep.subr.mxu0 0.0
    %2366 = vmatpush1.msra.mxu0 0.0
    %2367 = vmatprep.subr.mxu0 0.0
    %2368 = vmatpush1.msra.mxu0 0.0
    %2369 = vmatprep.subr.mxu0 0.0
    %2370 = vmatpush1.msra.mxu0 0.0
    %2371 = vmatprep.subr.mxu0 0.0
    %2372 = vmatpush1.msra.mxu0 0.0
    %2373 = vmatprep.subr.mxu0 0.0
    %2374 = vmatpush1.msra.mxu0 0.0
    %2375 = vmatprep.subr.mxu0 0.0
    %2376 = vmatpush1.msra.mxu0 0.0
    %2377 = vmatprep.subr.mxu0 0.0
    %2378 = vmatpush1.msra.mxu0 0.0
    %2379 = vmatprep.mubr.f32.mxu0 0.0
    %2380 = vmatmul.mubr.f32.gmra.mrb[0].mxu0 %v2076
    %v2381 = vpop.f32.mrb[0].mxu0
    %v2382 = vadd.f32 %v2311, %v2381
    %v2383 = vpop.f32.mrb[0].mxu0
    %v2384 = vadd.f32 %v2313, %v2383
    %2385 = vdwg.mxu0
    %2386 = vmatprep.subr.mxu0 %v1752
    %2387 = vmatpush1.msra.mxu0 %v1751
    %2388 = vmatprep.subr.mxu0 %v1760
    %2389 = vmatpush1.msra.mxu0 %v1759
    %2390 = vmatprep.subr.mxu0 %v1768
    %2391 = vmatpush1.msra.mxu0 %v1767
    %2392 = vmatprep.subr.mxu0 %v1776
    %2393 = vmatpush1.msra.mxu0 %v1775
    %2394 = vmatprep.subr.mxu0 %v1784
    %2395 = vmatpush1.msra.mxu0 %v1783
    %2396 = vmatprep.subr.mxu0 %v1792
    %2397 = vmatpush1.msra.mxu0 %v1791
    %2398 = vmatprep.subr.mxu0 %v1800
    %2399 = vmatpush1.msra.mxu0 %v1799
    %2400 = vmatprep.subr.mxu0 %v1808
    %2401 = vmatpush1.msra.mxu0 %v1807
    %2402 = vmatprep.subr.mxu0 %v1816
    %2403 = vmatpush1.msra.mxu0 %v1815
    %2404 = vmatprep.subr.mxu0 %v1824
    %2405 = vmatpush1.msra.mxu0 %v1823
    %2406 = vmatprep.subr.mxu0 %v1832
    %2407 = vmatpush1.msra.mxu0 %v1831
    %2408 = vmatprep.subr.mxu0 %v1840
    %2409 = vmatpush1.msra.mxu0 %v1839
    %2410 = vmatprep.subr.mxu0 %v1848
    %2411 = vmatpush1.msra.mxu0 %v1847
    %2412 = vmatprep.subr.mxu0 %v1856
    %2413 = vmatpush1.msra.mxu0 %v1855
    %2414 = vmatprep.subr.mxu0 %v1864
    %2415 = vmatpush1.msra.mxu0 %v1863
    %2416 = vmatprep.subr.mxu0 %v1872
    %2417 = vmatpush1.msra.mxu0 %v1871
    %2418 = vmatprep.subr.mxu0 %v1880
    %2419 = vmatpush1.msra.mxu0 %v1879
    %2420 = vmatprep.subr.mxu0 %v1888
    %2421 = vmatpush1.msra.mxu0 %v1887
    %2422 = vmatprep.subr.mxu0 %v1896
    %2423 = vmatpush1.msra.mxu0 %v1895
    %2424 = vmatprep.subr.mxu0 %v1904
    %2425 = vmatpush1.msra.mxu0 %v1903
    %2426 = vmatprep.subr.mxu0 %v1912
    %2427 = vmatpush1.msra.mxu0 %v1911
    %2428 = vmatprep.subr.mxu0 %v1920
    %2429 = vmatpush1.msra.mxu0 %v1919
    %2430 = vmatprep.subr.mxu0 %v1928
    %2431 = vmatpush1.msra.mxu0 %v1927
    %2432 = vmatprep.subr.mxu0 %v1936
    %2433 = vmatpush1.msra.mxu0 %v1935
    %2434 = vmatprep.subr.mxu0 %v1944
    %2435 = vmatpush1.msra.mxu0 %v1943
    %2436 = vmatprep.subr.mxu0 %v1952
    %2437 = vmatpush1.msra.mxu0 %v1951
    %2438 = vmatprep.subr.mxu0 %v1960
    %2439 = vmatpush1.msra.mxu0 %v1959
    %2440 = vmatprep.subr.mxu0 %v1968
    %2441 = vmatpush1.msra.mxu0 %v1967
    %2442 = vmatprep.subr.mxu0 %v1976
    %2443 = vmatpush1.msra.mxu0 %v1975
    %2444 = vmatprep.subr.mxu0 %v1984
    %2445 = vmatpush1.msra.mxu0 %v1983
    %2446 = vmatprep.subr.mxu0 %v1992
    %2447 = vmatpush1.msra.mxu0 %v1991
    %2448 = vmatprep.subr.mxu0 %v2000
    %2449 = vmatpush1.msra.mxu0 %v1999
    %2450 = vmatprep.mubr.f32.mxu0 %v1745
    %2451 = vmatmul.mubr.f32.gmra.mrb[0].mxu0 %v1744
    %v2452 = vpop.f32.mrb[0].mxu0
    %v2453 = vadd.f32 0.0, %v2452
    %v2454 = vpop.f32.mrb[0].mxu0
    %v2455 = vadd.f32 0.0, %v2454
    %2456 = vdwg.mxu0
    %2457 = vmatprep.subr.mxu0 %v2008
    %2458 = vmatpush1.msra.mxu0 %v2007
    %2459 = vmatprep.subr.mxu0 %v2016
    %2460 = vmatpush1.msra.mxu0 %v2015
    %2461 = vmatprep.subr.mxu0 %v2024
    %2462 = vmatpush1.msra.mxu0 %v2023
    %2463 = vmatprep.subr.mxu0 %v2032
    %2464 = vmatpush1.msra.mxu0 %v2031
    %2465 = vmatprep.subr.mxu0 %v2040
    %2466 = vmatpush1.msra.mxu0 %v2039
    %2467 = vmatprep.subr.mxu0 %v2048
    %2468 = vmatpush1.msra.mxu0 %v2047
    %2469 = vmatprep.subr.mxu0 %v2056
    %2470 = vmatpush1.msra.mxu0 %v2055
    %2471 = vmatprep.subr.mxu0 %v2064
    %2472 = vmatpush1.msra.mxu0 %v2063
    %2473 = vmatprep.subr.mxu0 %v2094
    %2474 = vmatpush1.msra.mxu0 %v2091
    %2475 = vmatprep.subr.mxu0 0.0
    %2476 = vmatpush1.msra.mxu0 0.0
    %2477 = vmatprep.subr.mxu0 0.0
    %2478 = vmatpush1.msra.mxu0 0.0
    %2479 = vmatprep.subr.mxu0 0.0
    %2480 = vmatpush1.msra.mxu0 0.0
    %2481 = vmatprep.subr.mxu0 0.0
    %2482 = vmatpush1.msra.mxu0 0.0
    %2483 = vmatprep.subr.mxu0 0.0
    %2484 = vmatpush1.msra.mxu0 0.0
    %2485 = vmatprep.subr.mxu0 0.0
    %2486 = vmatpush1.msra.mxu0 0.0
    %2487 = vmatprep.subr.mxu0 0.0
    %2488 = vmatpush1.msra.mxu0 0.0
    %2489 = vmatprep.subr.mxu0 0.0
    %2490 = vmatpush1.msra.mxu0 0.0
    %2491 = vmatprep.subr.mxu0 0.0
    %2492 = vmatpush1.msra.mxu0 0.0
    %2493 = vmatprep.subr.mxu0 0.0
    %2494 = vmatpush1.msra.mxu0 0.0
    %2495 = vmatprep.subr.mxu0 0.0
    %2496 = vmatpush1.msra.mxu0 0.0
    %2497 = vmatprep.subr.mxu0 0.0
    %2498 = vmatpush1.msra.mxu0 0.0
    %2499 = vmatprep.subr.mxu0 0.0
    %2500 = vmatpush1.msra.mxu0 0.0
    %2501 = vmatprep.subr.mxu0 0.0
    %2502 = vmatpush1.msra.mxu0 0.0
    %2503 = vmatprep.subr.mxu0 0.0
    %2504 = vmatpush1.msra.mxu0 0.0
    %2505 = vmatprep.subr.mxu0 0.0
    %2506 = vmatpush1.msra.mxu0 0.0
    %2507 = vmatprep.subr.mxu0 0.0
    %2508 = vmatpush1.msra.mxu0 0.0
    %2509 = vmatprep.subr.mxu0 0.0
    %2510 = vmatpush1.msra.mxu0 0.0
    %2511 = vmatprep.subr.mxu0 0.0
    %2512 = vmatpush1.msra.mxu0 0.0
    %2513 = vmatprep.subr.mxu0 0.0
    %2514 = vmatpush1.msra.mxu0 0.0
    %2515 = vmatprep.subr.mxu0 0.0
    %2516 = vmatpush1.msra.mxu0 0.0
    %2517 = vmatprep.subr.mxu0 0.0
    %2518 = vmatpush1.msra.mxu0 0.0
    %2519 = vmatprep.subr.mxu0 0.0
    %2520 = vmatpush1.msra.mxu0 0.0
    %2521 = vmatprep.mubr.f32.mxu0 0.0
    %2522 = vmatmul.mubr.f32.gmra.mrb[0].mxu0 %v2076
    %v2523 = vpop.f32.mrb[0].mxu0
    %v2524 = vadd.f32 %v2453, %v2523
    %v2525 = vpop.f32.mrb[0].mxu0
    %v2526 = vadd.f32 %v2455, %v2525
    %2527 = vdwg.mxu0
    %2528 = vmatprep.subr.mxu0 %v1754
    %2529 = vmatpush1.msra.mxu0 %v1753
    %2530 = vmatprep.subr.mxu0 %v1762
    %2531 = vmatpush1.msra.mxu0 %v1761
    %2532 = vmatprep.subr.mxu0 %v1770
    %2533 = vmatpush1.msra.mxu0 %v1769
    %2534 = vmatprep.subr.mxu0 %v1778
    %2535 = vmatpush1.msra.mxu0 %v1777
    %2536 = vmatprep.subr.mxu0 %v1786
    %2537 = vmatpush1.msra.mxu0 %v1785
    %2538 = vmatprep.subr.mxu0 %v1794
    %2539 = vmatpush1.msra.mxu0 %v1793
    %2540 = vmatprep.subr.mxu0 %v1802
    %2541 = vmatpush1.msra.mxu0 %v1801
    %2542 = vmatprep.subr.mxu0 %v1810
    %2543 = vmatpush1.msra.mxu0 %v1809
    %2544 = vmatprep.subr.mxu0 %v1818
    %2545 = vmatpush1.msra.mxu0 %v1817
    %2546 = vmatprep.subr.mxu0 %v1826
    %2547 = vmatpush1.msra.mxu0 %v1825
    %2548 = vmatprep.subr.mxu0 %v1834
    %2549 = vmatpush1.msra.mxu0 %v1833
    %2550 = vmatprep.subr.mxu0 %v1842
    %2551 = vmatpush1.msra.mxu0 %v1841
    %2552 = vmatprep.subr.mxu0 %v1850
    %2553 = vmatpush1.msra.mxu0 %v1849
    %2554 = vmatprep.subr.mxu0 %v1858
    %2555 = vmatpush1.msra.mxu0 %v1857
    %2556 = vmatprep.subr.mxu0 %v1866
    %2557 = vmatpush1.msra.mxu0 %v1865
    %2558 = vmatprep.subr.mxu0 %v1874
    %2559 = vmatpush1.msra.mxu0 %v1873
    %2560 = vmatprep.subr.mxu0 %v1882
    %2561 = vmatpush1.msra.mxu0 %v1881
    %2562 = vmatprep.subr.mxu0 %v1890
    %2563 = vmatpush1.msra.mxu0 %v1889
    %2564 = vmatprep.subr.mxu0 %v1898
    %2565 = vmatpush1.msra.mxu0 %v1897
    %2566 = vmatprep.subr.mxu0 %v1906
    %2567 = vmatpush1.msra.mxu0 %v1905
    %2568 = vmatprep.subr.mxu0 %v1914
    %2569 = vmatpush1.msra.mxu0 %v1913
    %2570 = vmatprep.subr.mxu0 %v1922
    %2571 = vmatpush1.msra.mxu0 %v1921
    %2572 = vmatprep.subr.mxu0 %v1930
    %2573 = vmatpush1.msra.mxu0 %v1929
    %2574 = vmatprep.subr.mxu0 %v1938
    %2575 = vmatpush1.msra.mxu0 %v1937
    %2576 = vmatprep.subr.mxu0 %v1946
    %2577 = vmatpush1.msra.mxu0 %v1945
    %2578 = vmatprep.subr.mxu0 %v1954
    %2579 = vmatpush1.msra.mxu0 %v1953
    %2580 = vmatprep.subr.mxu0 %v1962
    %2581 = vmatpush1.msra.mxu0 %v1961
    %2582 = vmatprep.subr.mxu0 %v1970
    %2583 = vmatpush1.msra.mxu0 %v1969
    %2584 = vmatprep.subr.mxu0 %v1978
    %2585 = vmatpush1.msra.mxu0 %v1977
    %2586 = vmatprep.subr.mxu0 %v1986
    %2587 = vmatpush1.msra.mxu0 %v1985
    %2588 = vmatprep.subr.mxu0 %v1994
    %2589 = vmatpush1.msra.mxu0 %v1993
    %2590 = vmatprep.subr.mxu0 %v2002
    %2591 = vmatpush1.msra.mxu0 %v2001
    %2592 = vmatprep.mubr.f32.mxu0 %v1745
    %2593 = vmatmul.mubr.f32.gmra.mrb[0].mxu0 %v1744
    %v2594 = vpop.f32.mrb[0].mxu0
    %v2595 = vadd.f32 0.0, %v2594
    %v2596 = vpop.f32.mrb[0].mxu0
    %v2597 = vadd.f32 0.0, %v2596
    %2598 = vdwg.mxu0
    %2599 = vmatprep.subr.mxu0 %v2010
    %2600 = vmatpush1.msra.mxu0 %v2009
    %2601 = vmatprep.subr.mxu0 %v2018
    %2602 = vmatpush1.msra.mxu0 %v2017
    %2603 = vmatprep.subr.mxu0 %v2026
    %2604 = vmatpush1.msra.mxu0 %v2025
    %2605 = vmatprep.subr.mxu0 %v2034
    %2606 = vmatpush1.msra.mxu0 %v2033
    %2607 = vmatprep.subr.mxu0 %v2042
    %2608 = vmatpush1.msra.mxu0 %v2041
    %2609 = vmatprep.subr.mxu0 %v2050
    %2610 = vmatpush1.msra.mxu0 %v2049
    %2611 = vmatprep.subr.mxu0 %v2058
    %2612 = vmatpush1.msra.mxu0 %v2057
    %2613 = vmatprep.subr.mxu0 %v2066
    %2614 = vmatpush1.msra.mxu0 %v2065
    %2615 = vmatprep.subr.mxu0 %v2100
    %2616 = vmatpush1.msra.mxu0 %v2097
    %2617 = vmatprep.subr.mxu0 0.0
    %2618 = vmatpush1.msra.mxu0 0.0
    %2619 = vmatprep.subr.mxu0 0.0
    %2620 = vmatpush1.msra.mxu0 0.0
    %2621 = vmatprep.subr.mxu0 0.0
    %2622 = vmatpush1.msra.mxu0 0.0
    %2623 = vmatprep.subr.mxu0 0.0
    %2624 = vmatpush1.msra.mxu0 0.0
    %2625 = vmatprep.subr.mxu0 0.0
    %2626 = vmatpush1.msra.mxu0 0.0
    %2627 = vmatprep.subr.mxu0 0.0
    %2628 = vmatpush1.msra.mxu0 0.0
    %2629 = vmatprep.subr.mxu0 0.0
    %2630 = vmatpush1.msra.mxu0 0.0
    %2631 = vmatprep.subr.mxu0 0.0
    %2632 = vmatpush1.msra.mxu0 0.0
    %2633 = vmatprep.subr.mxu0 0.0
    %2634 = vmatpush1.msra.mxu0 0.0
    %2635 = vmatprep.subr.mxu0 0.0
    %2636 = vmatpush1.msra.mxu0 0.0
    %2637 = vmatprep.subr.mxu0 0.0
    %2638 = vmatpush1.msra.mxu0 0.0
    %2639 = vmatprep.subr.mxu0 0.0
    %2640 = vmatpush1.msra.mxu0 0.0
    %2641 = vmatprep.subr.mxu0 0.0
    %2642 = vmatpush1.msra.mxu0 0.0
    %2643 = vmatprep.subr.mxu0 0.0
    %2644 = vmatpush1.msra.mxu0 0.0
    %2645 = vmatprep.subr.mxu0 0.0
    %2646 = vmatpush1.msra.mxu0 0.0
    %2647 = vmatprep.subr.mxu0 0.0
    %2648 = vmatpush1.msra.mxu0 0.0
    %2649 = vmatprep.subr.mxu0 0.0
    %2650 = vmatpush1.msra.mxu0 0.0
    %2651 = vmatprep.subr.mxu0 0.0
    %2652 = vmatpush1.msra.mxu0 0.0
    %2653 = vmatprep.subr.mxu0 0.0
    %2654 = vmatpush1.msra.mxu0 0.0
    %2655 = vmatprep.subr.mxu0 0.0
    %2656 = vmatpush1.msra.mxu0 0.0
    %2657 = vmatprep.subr.mxu0 0.0
    %2658 = vmatpush1.msra.mxu0 0.0
    %2659 = vmatprep.subr.mxu0 0.0
    %2660 = vmatpush1.msra.mxu0 0.0
    %2661 = vmatprep.subr.mxu0 0.0
    %2662 = vmatpush1.msra.mxu0 0.0
    %2663 = vmatprep.mubr.f32.mxu0 0.0
    %2664 = vmatmul.mubr.f32.gmra.mrb[0].mxu0 %v2076
    %v2665 = vpop.f32.mrb[0].mxu0
    %v2666 = vadd.f32 %v2595, %v2665
    %v2667 = vpop.f32.mrb[0].mxu0
    %v2668 = vadd.f32 %v2597, %v2667
    %2669 = vdwg.mxu0
    %v2678 = vcombine.low %v2240, %v2242
    %v2679 = vcombine.low %v2382, %v2384
    %v2681 = vunpack.c.l.s4 1983009808
    %v2682 = vunpack.c.0.s8 %v2681
    %v2683 = vlaneseq
    %v2684 = vshrl.u32 %v2683, 7
    %v2685 = vsub.s32 %v2682, %v2684
    %v2686 = vrot.slane %v2678, %v2685
    %v2688 = vunpack.c.l.s4 1983009808
    %v2689 = vunpack.c.0.s8 %v2688
    %v2690 = vlaneseq
    %v2691 = vshrl.u32 %v2690, 7
    %v2692 = vsub.s32 %v2689, %v2691
    %v2693 = vrot.slane %v2679, %v2692
    %v2694 = vcombine.low %v2686, %v2693
    %v2695 = vcombine.low %v2524, %v2526
    %v2696 = vcombine.low %v2666, %v2668
    %v2698 = vunpack.c.l.s4 1983009808
    %v2699 = vunpack.c.0.s8 %v2698
    %v2700 = vlaneseq
    %v2701 = vshrl.u32 %v2700, 7
    %v2702 = vsub.s32 %v2699, %v2701
    %v2703 = vrot.slane %v2695, %v2702
    %v2705 = vunpack.c.l.s4 1983009808
    %v2706 = vunpack.c.0.s8 %v2705
    %v2707 = vlaneseq
    %v2708 = vshrl.u32 %v2707, 7
    %v2709 = vsub.s32 %v2706, %v2708
    %v2710 = vrot.slane %v2696, %v2709
    %v2711 = vcombine.low %v2703, %v2710
    %v2714 = vsub.f32 %v38, %v2694
    %v2715 = vsub.f32 %v39, %v2711
    %v2716 = vld [vmem:[%s3] sm:$0xff]
    %v2717 = vld [vmem:[%s3 + $0x8] sm:$0xff]
    %v2718 = vld [vmem:[%s3 + $0x10] sm:$0xff]
    %v2719 = vld [vmem:[%s3 + $0x18] sm:$0xff]
    %v2720 = vld [vmem:[%s3 + $0x20] sm:$0xff]
    %v2721 = vld [vmem:[%s3 + $0x28] sm:$0xff]
    %v2722 = vld [vmem:[%s3 + $0x30] sm:$0xff]
    %v2723 = vld [vmem:[%s3 + $0x38] sm:$0xff]
    %v2724 = vld [vmem:[%s3 + $0x40] sm:$0xff]
    %v2725 = vld [vmem:[%s3 + $0x48] sm:$0xff]
    %v2726 = vld [vmem:[%s3 + $0x50] sm:$0xff]
    %v2727 = vld [vmem:[%s3 + $0x58] sm:$0xff]
    %v2728 = vld [vmem:[%s3 + $0x60] sm:$0xff]
    %v2729 = vld [vmem:[%s3 + $0x68] sm:$0xff]
    %v2730 = vld [vmem:[%s3 + $0x70] sm:$0xff]
    %v2731 = vld [vmem:[%s3 + $0x78] sm:$0xff]
    %v2732 = vld [vmem:[%s3 + $0x80] sm:$0xff]
    %v2733 = vld [vmem:[%s3 + $0x88] sm:$0xff]
    %v2734 = vld [vmem:[%s3 + $0x90] sm:$0xff]
    %v2735 = vld [vmem:[%s3 + $0x98] sm:$0xff]
    %v2736 = vld [vmem:[%s3 + $0xa0] sm:$0xff]
    %v2737 = vld [vmem:[%s3 + $0xa8] sm:$0xff]
    %v2738 = vld [vmem:[%s3 + $0xb0] sm:$0xff]
    %v2739 = vld [vmem:[%s3 + $0xb8] sm:$0xff]
    %v2740 = vld [vmem:[%s3 + $0xc0] sm:$0xff]
    %v2741 = vld [vmem:[%s3 + $0xc8] sm:$0xff]
    %v2742 = vld [vmem:[%s3 + $0xd0] sm:$0xff]
    %v2743 = vld [vmem:[%s3 + $0xd8] sm:$0xff]
    %v2744 = vld [vmem:[%s3 + $0xe0] sm:$0xff]
    %v2745 = vld [vmem:[%s3 + $0xe8] sm:$0xff]
    %v2746 = vld [vmem:[%s3 + $0xf0] sm:$0xff]
    %v2747 = vld [vmem:[%s3 + $0xf8] sm:$0xff]
    %v2748 = vld [vmem:[%s3 + $0x100] sm:$0xff]
    %v2749 = vld [vmem:[%s3 + $0x108] sm:$0xff]
    %v2750 = vld [vmem:[%s3 + $0x110] sm:$0xff]
    %v2751 = vld [vmem:[%s3 + $0x118] sm:$0xff]
    %v2752 = vld [vmem:[%s3 + $0x120] sm:$0xff]
    %v2753 = vld [vmem:[%s3 + $0x128] sm:$0xff]
    %v2754 = vld [vmem:[%s3 + $0x130] sm:$0xff]
    %v2755 = vld [vmem:[%s3 + $0x138] sm:$0xff]
    %v2756 = vld [vmem:[%s3 + $0x140] sm:$0xff]
    %v2757 = vld [vmem:[%s3 + $0x148] sm:$0xff]
    %v2758 = vld [vmem:[%s3 + $0x150] sm:$0xff]
    %v2759 = vld [vmem:[%s3 + $0x158] sm:$0xff]
    %v2760 = vld [vmem:[%s3 + $0x160] sm:$0xff]
    %v2761 = vld [vmem:[%s3 + $0x168] sm:$0xff]
    %v2762 = vld [vmem:[%s3 + $0x170] sm:$0xff]
    %v2763 = vld [vmem:[%s3 + $0x178] sm:$0xff]
    %v2764 = vld [vmem:[%s3 + $0x180] sm:$0xff]
    %v2765 = vld [vmem:[%s3 + $0x188] sm:$0xff]
    %v2766 = vld [vmem:[%s3 + $0x190] sm:$0xff]
    %v2767 = vld [vmem:[%s3 + $0x198] sm:$0xff]
    %v2768 = vld [vmem:[%s3 + $0x1a0] sm:$0xff]
    %v2769 = vld [vmem:[%s3 + $0x1a8] sm:$0xff]
    %v2770 = vld [vmem:[%s3 + $0x1b0] sm:$0xff]
    %v2771 = vld [vmem:[%s3 + $0x1b8] sm:$0xff]
    %v2772 = vld [vmem:[%s3 + $0x1c0] sm:$0xff]
    %v2773 = vld [vmem:[%s3 + $0x1c8] sm:$0xff]
    %v2774 = vld [vmem:[%s3 + $0x1d0] sm:$0xff]
    %v2775 = vld [vmem:[%s3 + $0x1d8] sm:$0xff]
    %v2776 = vld [vmem:[%s3 + $0x1e0] sm:$0xff]
    %v2777 = vld [vmem:[%s3 + $0x1e8] sm:$0xff]
    %v2778 = vld [vmem:[%s3 + $0x1f0] sm:$0xff]
    %v2779 = vld [vmem:[%s3 + $0x1f8] sm:$0xff]
    %v2780 = vld [vmem:[%s3 + $0x200] sm:$0xff]
    %v2781 = vld [vmem:[%s3 + $0x208] sm:$0xff]
    %v2782 = vld [vmem:[%s3 + $0x210] sm:$0xff]
    %v2783 = vld [vmem:[%s3 + $0x218] sm:$0xff]
    %v2784 = vld [vmem:[%s3 + $0x220] sm:$0xff]
    %v2785 = vld [vmem:[%s3 + $0x228] sm:$0xff]
    %v2786 = vld [vmem:[%s3 + $0x230] sm:$0xff]
    %v2787 = vld [vmem:[%s3 + $0x238] sm:$0xff]
    %v2788 = vld [vmem:[%s3 + $0x240] sm:$0xff]
    %v2789 = vld [vmem:[%s3 + $0x248] sm:$0xff]
    %v2790 = vld [vmem:[%s3 + $0x250] sm:$0xff]
    %v2791 = vld [vmem:[%s3 + $0x258] sm:$0xff]
    %v2792 = vld [vmem:[%s3 + $0x260] sm:$0xff]
    %v2793 = vld [vmem:[%s3 + $0x268] sm:$0xff]
    %v2794 = vld [vmem:[%s3 + $0x270] sm:$0xff]
    %v2795 = vld [vmem:[%s3 + $0x278] sm:$0xff]
    %v2796 = vld [vmem:[%s3 + $0x280] sm:$0xff]
    %v2797 = vld [vmem:[%s3 + $0x288] sm:$0xff]
    %v2798 = vld [vmem:[%s3 + $0x290] sm:$0xff]
    %v2799 = vld [vmem:[%s3 + $0x298] sm:$0xff]
    %v2800 = vld [vmem:[%s3 + $0x2a0] sm:$0xff]
    %v2801 = vld [vmem:[%s3 + $0x2a8] sm:$0xff]
    %v2802 = vld [vmem:[%s3 + $0x2b0] sm:$0xff]
    %v2803 = vld [vmem:[%s3 + $0x2b8] sm:$0xff]
    %v2804 = vld [vmem:[%s3 + $0x2c0] sm:$0xff]
    %v2805 = vld [vmem:[%s3 + $0x2c8] sm:$0xff]
    %v2806 = vld [vmem:[%s3 + $0x2d0] sm:$0xff]
    %v2807 = vld [vmem:[%s3 + $0x2d8] sm:$0xff]
    %v2808 = vld [vmem:[%s3 + $0x2e0] sm:$0xff]
    %v2809 = vld [vmem:[%s3 + $0x2e8] sm:$0xff]
    %v2810 = vld [vmem:[%s3 + $0x2f0] sm:$0xff]
    %v2811 = vld [vmem:[%s3 + $0x2f8] sm:$0xff]
    %v2812 = vld [vmem:[%s3 + $0x300] sm:$0xff]
    %v2813 = vld [vmem:[%s3 + $0x308] sm:$0xff]
    %v2814 = vld [vmem:[%s3 + $0x310] sm:$0xff]
    %v2815 = vld [vmem:[%s3 + $0x318] sm:$0xff]
    %v2816 = vld [vmem:[%s3 + $0x320] sm:$0xff]
    %v2817 = vld [vmem:[%s3 + $0x328] sm:$0xff]
    %v2818 = vld [vmem:[%s3 + $0x330] sm:$0xff]
    %v2819 = vld [vmem:[%s3 + $0x338] sm:$0xff]
    %v2820 = vld [vmem:[%s3 + $0x340] sm:$0xff]
    %v2821 = vld [vmem:[%s3 + $0x348] sm:$0xff]
    %v2822 = vld [vmem:[%s3 + $0x350] sm:$0xff]
    %v2823 = vld [vmem:[%s3 + $0x358] sm:$0xff]
    %v2824 = vld [vmem:[%s3 + $0x360] sm:$0xff]
    %v2825 = vld [vmem:[%s3 + $0x368] sm:$0xff]
    %v2826 = vld [vmem:[%s3 + $0x370] sm:$0xff]
    %v2827 = vld [vmem:[%s3 + $0x378] sm:$0xff]
    %v2828 = vld [vmem:[%s3 + $0x380] sm:$0xff]
    %v2829 = vld [vmem:[%s3 + $0x388] sm:$0xff]
    %v2830 = vld [vmem:[%s3 + $0x390] sm:$0xff]
    %v2831 = vld [vmem:[%s3 + $0x398] sm:$0xff]
    %v2832 = vld [vmem:[%s3 + $0x3a0] sm:$0xff]
    %v2833 = vld [vmem:[%s3 + $0x3a8] sm:$0xff]
    %v2834 = vld [vmem:[%s3 + $0x3b0] sm:$0xff]
    %v2835 = vld [vmem:[%s3 + $0x3b8] sm:$0xff]
    %v2836 = vld [vmem:[%s3 + $0x3c0] sm:$0xff]
    %v2837 = vld [vmem:[%s3 + $0x3c8] sm:$0xff]
    %v2838 = vld [vmem:[%s3 + $0x3d0] sm:$0xff]
    %v2839 = vld [vmem:[%s3 + $0x3d8] sm:$0xff]
    %v2840 = vld [vmem:[%s3 + $0x3e0] sm:$0xff]
    %v2841 = vld [vmem:[%s3 + $0x3e8] sm:$0xff]
    %v2842 = vld [vmem:[%s3 + $0x3f0] sm:$0xff]
    %v2843 = vld [vmem:[%s3 + $0x3f8] sm:$0xff]
    %v2844 = vld [vmem:[%s3 + $0x400] sm:$0xff]
    %v2845 = vld [vmem:[%s3 + $0x408] sm:$0xff]
    %v2846 = vld [vmem:[%s3 + $0x410] sm:$0xff]
    %v2847 = vld [vmem:[%s3 + $0x418] sm:$0xff]
    %v2848 = vld [vmem:[%s3 + $0x420] sm:$0xff]
    %v2849 = vld [vmem:[%s3 + $0x428] sm:$0xff]
    %v2850 = vld [vmem:[%s3 + $0x430] sm:$0xff]
    %v2851 = vld [vmem:[%s3 + $0x438] sm:$0xff]
    %v2852 = vld [vmem:[%s3 + $0x440] sm:$0xff]
    %v2853 = vld [vmem:[%s3 + $0x448] sm:$0xff]
    %v2854 = vld [vmem:[%s3 + $0x450] sm:$0xff]
    %v2855 = vld [vmem:[%s3 + $0x458] sm:$0xff]
    %v2856 = vld [vmem:[%s3 + $0x460] sm:$0xff]
    %v2857 = vld [vmem:[%s3 + $0x468] sm:$0xff]
    %v2858 = vld [vmem:[%s3 + $0x470] sm:$0xff]
    %v2859 = vld [vmem:[%s3 + $0x478] sm:$0xff]
    %v2860 = vld [vmem:[%s3 + $0x480] sm:$0xff]
    %v2861 = vld [vmem:[%s3 + $0x488] sm:$0xff]
    %v2862 = vld [vmem:[%s3 + $0x490] sm:$0xff]
    %v2863 = vld [vmem:[%s3 + $0x498] sm:$0xff]
    %v2864 = vld [vmem:[%s3 + $0x4a0] sm:$0xff]
    %v2865 = vld [vmem:[%s3 + $0x4a8] sm:$0xff]
    %v2866 = vld [vmem:[%s3 + $0x4b0] sm:$0xff]
    %v2867 = vld [vmem:[%s3 + $0x4b8] sm:$0xff]
    %v2868 = vld [vmem:[%s3 + $0x4c0] sm:$0xff]
    %v2869 = vld [vmem:[%s3 + $0x4c8] sm:$0xff]
    %v2870 = vld [vmem:[%s3 + $0x4d0] sm:$0xff]
    %v2871 = vld [vmem:[%s3 + $0x4d8] sm:$0xff]
    %v2872 = vld [vmem:[%s3 + $0x4e0] sm:$0xff]
    %v2873 = vld [vmem:[%s3 + $0x4e8] sm:$0xff]
    %v2874 = vld [vmem:[%s3 + $0x4f0] sm:$0xff]
    %v2875 = vld [vmem:[%s3 + $0x4f8] sm:$0xff]
    %v2876 = vld [vmem:[%s3 + $0x500] sm:$0xff]
    %v2877 = vld [vmem:[%s3 + $0x508] sm:$0xff]
    %v2878 = vld [vmem:[%s3 + $0x510] sm:$0xff]
    %v2879 = vld [vmem:[%s3 + $0x518] sm:$0xff]
    %v2880 = vld [vmem:[%s3 + $0x520] sm:$0xff]
    %v2881 = vld [vmem:[%s3 + $0x528] sm:$0xff]
    %v2882 = vld [vmem:[%s3 + $0x530] sm:$0xff]
    %v2883 = vld [vmem:[%s3 + $0x538] sm:$0xff]
    %v2884 = vld [vmem:[%s3 + $0x540] sm:$0xff]
    %v2885 = vld [vmem:[%s3 + $0x548] sm:$0xff]
    %v2886 = vld [vmem:[%s3 + $0x550] sm:$0xff]
    %v2887 = vld [vmem:[%s3 + $0x558] sm:$0xff]
    %v2888 = vld [vmem:[%s3 + $0x560] sm:$0xff]
    %v2889 = vld [vmem:[%s3 + $0x568] sm:$0xff]
    %v2890 = vld [vmem:[%s3 + $0x570] sm:$0xff]
    %v2891 = vld [vmem:[%s3 + $0x578] sm:$0xff]
    %v2892 = vld [vmem:[%s3 + $0x580] sm:$0xff]
    %v2893 = vld [vmem:[%s3 + $0x588] sm:$0xff]
    %v2894 = vld [vmem:[%s3 + $0x590] sm:$0xff]
    %v2895 = vld [vmem:[%s3 + $0x598] sm:$0xff]
    %v2896 = vld [vmem:[%s3 + $0x5a0] sm:$0xff]
    %v2897 = vld [vmem:[%s3 + $0x5a8] sm:$0xff]
    %v2898 = vld [vmem:[%s3 + $0x5b0] sm:$0xff]
    %v2899 = vld [vmem:[%s3 + $0x5b8] sm:$0xff]
    %v2900 = vld [vmem:[%s3 + $0x5c0] sm:$0xff]
    %v2901 = vld [vmem:[%s3 + $0x5c8] sm:$0xff]
    %v2902 = vld [vmem:[%s3 + $0x5d0] sm:$0xff]
    %v2903 = vld [vmem:[%s3 + $0x5d8] sm:$0xff]
    %v2904 = vld [vmem:[%s3 + $0x5e0] sm:$0xff]
    %v2905 = vld [vmem:[%s3 + $0x5e8] sm:$0xff]
    %v2906 = vld [vmem:[%s3 + $0x5f0] sm:$0xff]
    %v2907 = vld [vmem:[%s3 + $0x5f8] sm:$0xff]
    %v2908 = vld [vmem:[%s3 + $0x600] sm:$0xff]
    %v2909 = vld [vmem:[%s3 + $0x608] sm:$0xff]
    %v2910 = vld [vmem:[%s3 + $0x610] sm:$0xff]
    %v2911 = vld [vmem:[%s3 + $0x618] sm:$0xff]
    %v2912 = vld [vmem:[%s3 + $0x620] sm:$0xff]
    %v2913 = vld [vmem:[%s3 + $0x628] sm:$0xff]
    %v2914 = vld [vmem:[%s3 + $0x630] sm:$0xff]
    %v2915 = vld [vmem:[%s3 + $0x638] sm:$0xff]
    %v2916 = vld [vmem:[%s3 + $0x640] sm:$0xff]
    %v2917 = vld [vmem:[%s3 + $0x648] sm:$0xff]
    %v2918 = vld [vmem:[%s3 + $0x650] sm:$0xff]
    %v2919 = vld [vmem:[%s3 + $0x658] sm:$0xff]
    %v2920 = vld [vmem:[%s3 + $0x660] sm:$0xff]
    %v2921 = vld [vmem:[%s3 + $0x668] sm:$0xff]
    %v2922 = vld [vmem:[%s3 + $0x670] sm:$0xff]
    %v2923 = vld [vmem:[%s3 + $0x678] sm:$0xff]
    %v2924 = vld [vmem:[%s3 + $0x680] sm:$0xff]
    %v2925 = vld [vmem:[%s3 + $0x688] sm:$0xff]
    %v2926 = vld [vmem:[%s3 + $0x690] sm:$0xff]
    %v2927 = vld [vmem:[%s3 + $0x698] sm:$0xff]
    %v2928 = vld [vmem:[%s3 + $0x6a0] sm:$0xff]
    %v2929 = vld [vmem:[%s3 + $0x6a8] sm:$0xff]
    %v2930 = vld [vmem:[%s3 + $0x6b0] sm:$0xff]
    %v2931 = vld [vmem:[%s3 + $0x6b8] sm:$0xff]
    %v2932 = vld [vmem:[%s3 + $0x6c0] sm:$0xff]
    %v2933 = vld [vmem:[%s3 + $0x6c8] sm:$0xff]
    %v2934 = vld [vmem:[%s3 + $0x6d0] sm:$0xff]
    %v2935 = vld [vmem:[%s3 + $0x6d8] sm:$0xff]
    %v2936 = vld [vmem:[%s3 + $0x6e0] sm:$0xff]
    %v2937 = vld [vmem:[%s3 + $0x6e8] sm:$0xff]
    %v2938 = vld [vmem:[%s3 + $0x6f0] sm:$0xff]
    %v2939 = vld [vmem:[%s3 + $0x6f8] sm:$0xff]
    %v2940 = vld [vmem:[%s3 + $0x700] sm:$0xff]
    %v2941 = vld [vmem:[%s3 + $0x708] sm:$0xff]
    %v2942 = vld [vmem:[%s3 + $0x710] sm:$0xff]
    %v2943 = vld [vmem:[%s3 + $0x718] sm:$0xff]
    %v2944 = vld [vmem:[%s3 + $0x720] sm:$0xff]
    %v2945 = vld [vmem:[%s3 + $0x728] sm:$0xff]
    %v2946 = vld [vmem:[%s3 + $0x730] sm:$0xff]
    %v2947 = vld [vmem:[%s3 + $0x738] sm:$0xff]
    %v2948 = vld [vmem:[%s3 + $0x740] sm:$0xff]
    %v2949 = vld [vmem:[%s3 + $0x748] sm:$0xff]
    %v2950 = vld [vmem:[%s3 + $0x750] sm:$0xff]
    %v2951 = vld [vmem:[%s3 + $0x758] sm:$0xff]
    %v2952 = vld [vmem:[%s3 + $0x760] sm:$0xff]
    %v2953 = vld [vmem:[%s3 + $0x768] sm:$0xff]
    %v2954 = vld [vmem:[%s3 + $0x770] sm:$0xff]
    %v2955 = vld [vmem:[%s3 + $0x778] sm:$0xff]
    %v2956 = vld [vmem:[%s3 + $0x780] sm:$0xff]
    %v2957 = vld [vmem:[%s3 + $0x788] sm:$0xff]
    %v2958 = vld [vmem:[%s3 + $0x790] sm:$0xff]
    %v2959 = vld [vmem:[%s3 + $0x798] sm:$0xff]
    %v2960 = vld [vmem:[%s3 + $0x7a0] sm:$0xff]
    %v2961 = vld [vmem:[%s3 + $0x7a8] sm:$0xff]
    %v2962 = vld [vmem:[%s3 + $0x7b0] sm:$0xff]
    %v2963 = vld [vmem:[%s3 + $0x7b8] sm:$0xff]
    %v2964 = vld [vmem:[%s3 + $0x7c0] sm:$0xff]
    %v2965 = vld [vmem:[%s3 + $0x7c8] sm:$0xff]
    %v2966 = vld [vmem:[%s3 + $0x7d0] sm:$0xff]
    %v2967 = vld [vmem:[%s3 + $0x7d8] sm:$0xff]
    %v2968 = vld [vmem:[%s3 + $0x7e0] sm:$0xff]
    %v2969 = vld [vmem:[%s3 + $0x7e8] sm:$0xff]
    %v2970 = vld [vmem:[%s3 + $0x7f0] sm:$0xff]
    %v2971 = vld [vmem:[%s3 + $0x7f8] sm:$0xff]
    %v2972 = vld [vmem:[%s3 + $0x800] sm:$0xff]
    %v2973 = vld [vmem:[%s3 + $0x808] sm:$0xff]
    %v2974 = vld [vmem:[%s3 + $0x810] sm:$0xff]
    %v2975 = vld [vmem:[%s3 + $0x818] sm:$0xff]
    %v2976 = vld [vmem:[%s3 + $0x820] sm:$0xff]
    %v2977 = vld [vmem:[%s3 + $0x828] sm:$0xff]
    %v2978 = vld [vmem:[%s3 + $0x830] sm:$0xff]
    %v2979 = vld [vmem:[%s3 + $0x838] sm:$0xff]
    %v2980 = vld [vmem:[%s3 + $0x840] sm:$0xff]
    %v2981 = vld [vmem:[%s3 + $0x848] sm:$0xff]
    %v2982 = vld [vmem:[%s3 + $0x850] sm:$0xff]
    %v2983 = vld [vmem:[%s3 + $0x858] sm:$0xff]
    %v2984 = vld [vmem:[%s3 + $0x860] sm:$0xff]
    %v2985 = vld [vmem:[%s3 + $0x868] sm:$0xff]
    %v2986 = vld [vmem:[%s3 + $0x870] sm:$0xff]
    %v2987 = vld [vmem:[%s3 + $0x878] sm:$0xff]
    %v2988 = vld [vmem:[%s3 + $0x880] sm:$0xff]
    %v2989 = vld [vmem:[%s3 + $0x888] sm:$0xff]
    %v2990 = vld [vmem:[%s3 + $0x890] sm:$0xff]
    %v2991 = vld [vmem:[%s3 + $0x898] sm:$0xff]
    %v2992 = vld [vmem:[%s3 + $0x8a0] sm:$0xff]
    %v2993 = vld [vmem:[%s3 + $0x8a8] sm:$0xff]
    %v2994 = vld [vmem:[%s3 + $0x8b0] sm:$0xff]
    %v2995 = vld [vmem:[%s3 + $0x8b8] sm:$0xff]
    %v2996 = vld [vmem:[%s3 + $0x8c0] sm:$0xff]
    %v2997 = vld [vmem:[%s3 + $0x8c8] sm:$0xff]
    %v2998 = vld [vmem:[%s3 + $0x8d0] sm:$0xff]
    %v2999 = vld [vmem:[%s3 + $0x8d8] sm:$0xff]
    %v3000 = vld [vmem:[%s3 + $0x8e0] sm:$0xff]
    %v3001 = vld [vmem:[%s3 + $0x8e8] sm:$0xff]
    %v3002 = vld [vmem:[%s3 + $0x8f0] sm:$0xff]
    %v3003 = vld [vmem:[%s3 + $0x8f8] sm:$0xff]
    %v3004 = vld [vmem:[%s3 + $0x900] sm:$0xff]
    %v3005 = vld [vmem:[%s3 + $0x908] sm:$0xff]
    %v3006 = vld [vmem:[%s3 + $0x910] sm:$0xff]
    %v3007 = vld [vmem:[%s3 + $0x918] sm:$0xff]
    %v3008 = vld [vmem:[%s3 + $0x920] sm:$0xff]
    %v3009 = vld [vmem:[%s3 + $0x928] sm:$0xff]
    %v3010 = vld [vmem:[%s3 + $0x930] sm:$0xff]
    %v3011 = vld [vmem:[%s3 + $0x938] sm:$0xff]
    %v3012 = vld [vmem:[%s3 + $0x940] sm:$0xff]
    %v3013 = vld [vmem:[%s3 + $0x948] sm:$0xff]
    %v3014 = vld [vmem:[%s3 + $0x950] sm:$0xff]
    %v3015 = vld [vmem:[%s3 + $0x958] sm:$0xff]
    %v3016 = vld [vmem:[%s3 + $0x960] sm:$0xff]
    %v3017 = vld [vmem:[%s3 + $0x968] sm:$0xff]
    %v3018 = vld [vmem:[%s3 + $0x970] sm:$0xff]
    %v3019 = vld [vmem:[%s3 + $0x978] sm:$0xff]
    %v3020 = vld [vmem:[%s3 + $0x980] sm:$0xff]
    %v3021 = vld [vmem:[%s3 + $0x988] sm:$0xff]
    %v3022 = vld [vmem:[%s3 + $0x990] sm:$0xff]
    %v3023 = vld [vmem:[%s3 + $0x998] sm:$0xff]
    %v3024 = vld [vmem:[%s3 + $0x9a0] sm:$0xff]
    %v3025 = vld [vmem:[%s3 + $0x9a8] sm:$0xff]
    %v3026 = vld [vmem:[%s3 + $0x9b0] sm:$0xff]
    %v3027 = vld [vmem:[%s3 + $0x9b8] sm:$0xff]
    %v3028 = vld [vmem:[%s3 + $0x9c0] sm:$0xff]
    %v3029 = vld [vmem:[%s3 + $0x9c8] sm:$0xff]
    %v3030 = vld [vmem:[%s3 + $0x9d0] sm:$0xff]
    %v3031 = vld [vmem:[%s3 + $0x9d8] sm:$0xff]
    %v3032 = vld [vmem:[%s3 + $0x9e0] sm:$0xff]
    %v3033 = vld [vmem:[%s3 + $0x9e8] sm:$0xff]
    %v3034 = vld [vmem:[%s3 + $0x9f0] sm:$0xff]
    %v3035 = vld [vmem:[%s3 + $0x9f8] sm:$0xff]
    %v3036 = vld [vmem:[%s3 + $0xa00] sm:$0xff]
    %v3037 = vld [vmem:[%s3 + $0xa08] sm:$0xff]
    %v3038 = vld [vmem:[%s3 + $0xa10] sm:$0xff]
    %v3039 = vld [vmem:[%s3 + $0xa18] sm:$0xff]
    %v3040 = vld [vmem:[%s3 + $0xa20] sm:$0xff]
    %v3041 = vld [vmem:[%s3 + $0xa28] sm:$0xff]
    %v3042 = vld [vmem:[%s3 + $0xa30] sm:$0xff]
    %v3043 = vld [vmem:[%s3 + $0xa38] sm:$0xff]
    %v3044 = vld [vmem:[%s3 + $0xa40] sm:$0xff]
    %v3045 = vld [vmem:[%s3 + $0xa48] sm:$0xff]
    %v3046 = vld [vmem:[%s3 + $0xa50] sm:$0xff]
    %v3047 = vld [vmem:[%s3 + $0xa58] sm:$0xff]
    %v3048 = vld [vmem:[%s3 + $0xa60] sm:$0xff]
    %v3049 = vld [vmem:[%s3 + $0xa68] sm:$0xff]
    %v3050 = vld [vmem:[%s3 + $0xa70] sm:$0xff]
    %v3051 = vld [vmem:[%s3 + $0xa78] sm:$0xff]
    %v3052 = vld [vmem:[%s3 + $0xa80] sm:$0xff]
    %v3053 = vld [vmem:[%s3 + $0xa88] sm:$0xff]
    %v3054 = vld [vmem:[%s3 + $0xa90] sm:$0xff]
    %v3055 = vld [vmem:[%s3 + $0xa98] sm:$0xff]
    %v3056 = vld [vmem:[%s3 + $0xaa0] sm:$0xff]
    %v3057 = vld [vmem:[%s3 + $0xaa8] sm:$0xff]
    %v3058 = vld [vmem:[%s3 + $0xab0] sm:$0xff]
    %v3059 = vld [vmem:[%s3 + $0xab8] sm:$0xff]
    %v3060 = vld [vmem:[%s3 + $0xac0] sm:$0xff]
    %v3061 = vld [vmem:[%s3 + $0xac8] sm:$0xff]
    %v3062 = vld [vmem:[%s3 + $0xad0] sm:$0xff]
    %v3063 = vld [vmem:[%s3 + $0xad8] sm:$0xff]
    %v3064 = vld [vmem:[%s3 + $0xae0] sm:$0xff]
    %v3065 = vld [vmem:[%s3 + $0xae8] sm:$0xff]
    %v3066 = vld [vmem:[%s3 + $0xaf0] sm:$0xff]
    %v3067 = vld [vmem:[%s3 + $0xaf8] sm:$0xff]
    %v3068 = vld [vmem:[%s3 + $0xb00] sm:$0xff]
    %v3069 = vld [vmem:[%s3 + $0xb08] sm:$0xff]
    %v3070 = vld [vmem:[%s3 + $0xb10] sm:$0xff]
    %v3071 = vld [vmem:[%s3 + $0xb18] sm:$0xff]
    %v3072 = vld [vmem:[%s3 + $0xb20] sm:$0xff]
    %v3073 = vld [vmem:[%s3 + $0xb28] sm:$0xff]
    %v3074 = vld [vmem:[%s3 + $0xb30] sm:$0xff]
    %v3075 = vld [vmem:[%s3 + $0xb38] sm:$0xff]
    %v3076 = vld [vmem:[%s3 + $0xb40] sm:$0xff]
    %v3077 = vld [vmem:[%s3 + $0xb48] sm:$0xff]
    %v3078 = vld [vmem:[%s3 + $0xb50] sm:$0xff]
    %v3079 = vld [vmem:[%s3 + $0xb58] sm:$0xff]
    %v3080 = vld [vmem:[%s3 + $0xb60] sm:$0xff]
    %v3081 = vld [vmem:[%s3 + $0xb68] sm:$0xff]
    %v3082 = vld [vmem:[%s3 + $0xb70] sm:$0xff]
    %v3083 = vld [vmem:[%s3 + $0xb78] sm:$0xff]
    %v3084 = vld [vmem:[%s3 + $0xb80] sm:$0xff]
    %v3085 = vld [vmem:[%s3 + $0xb88] sm:$0xff]
    %v3086 = vld [vmem:[%s3 + $0xb90] sm:$0xff]
    %v3087 = vld [vmem:[%s3 + $0xb98] sm:$0xff]
    %v3088 = vld [vmem:[%s3 + $0xba0] sm:$0xff]
    %v3089 = vld [vmem:[%s3 + $0xba8] sm:$0xff]
    %v3090 = vld [vmem:[%s3 + $0xbb0] sm:$0xff]
    %v3091 = vld [vmem:[%s3 + $0xbb8] sm:$0xff]
    %v3092 = vld [vmem:[%s3 + $0xbc0] sm:$0xff]
    %v3093 = vld [vmem:[%s3 + $0xbc8] sm:$0xff]
    %v3094 = vld [vmem:[%s3 + $0xbd0] sm:$0xff]
    %v3095 = vld [vmem:[%s3 + $0xbd8] sm:$0xff]
    %v3096 = vld [vmem:[%s3 + $0xbe0] sm:$0xff]
    %v3097 = vld [vmem:[%s3 + $0xbe8] sm:$0xff]
    %v3098 = vld [vmem:[%s3 + $0xbf0] sm:$0xff]
    %v3099 = vld [vmem:[%s3 + $0xbf8] sm:$0xff]
    %v3102 = vcombine.high %v2714, %v2714
    %v3104 = vunpack.c.l.s4 1983009808
    %v3105 = vunpack.c.0.s8 %v3104
    %v3106 = vlaneseq
    %v3107 = vshrl.u32 %v3106, 7
    %v3108 = vsub.s32 %v3105, %v3107
    %v3109 = vrot.slane %v2714, %v3108
    %v3111 = vunpack.c.l.s4 1983009808
    %v3112 = vunpack.c.0.s8 %v3111
    %v3113 = vlaneseq
    %v3114 = vshrl.u32 %v3113, 7
    %v3115 = vsub.s32 %v3112, %v3114
    %v3116 = vrot.slane %v3102, %v3115
    %v3117 = vcombine.high %v3109, %v3109
    %v3118 = vcombine.high %v3116, %v3116
    %v3119 = vcombine.high %v2715, %v2715
    %v3121 = vunpack.c.l.s4 1983009808
    %v3122 = vunpack.c.0.s8 %v3121
    %v3123 = vlaneseq
    %v3124 = vshrl.u32 %v3123, 7
    %v3125 = vsub.s32 %v3122, %v3124
    %v3126 = vrot.slane %v2715, %v3125
    %v3128 = vunpack.c.l.s4 1983009808
    %v3129 = vunpack.c.0.s8 %v3128
    %v3130 = vlaneseq
    %v3131 = vshrl.u32 %v3130, 7
    %v3132 = vsub.s32 %v3129, %v3131
    %v3133 = vrot.slane %v3119, %v3132
    %v3134 = vcombine.high %v3126, %v3126
    %v3135 = vcombine.high %v3133, %v3133
    %3144 = vmatprep.subr.mxu0 %v2717
    %3145 = vmatpush1.msra.mxu0 %v2716
    %3146 = vmatprep.subr.mxu0 %v2720
    %3147 = vmatpush1.msra.mxu0 %v2719
    %3148 = vmatprep.subr.mxu0 %v2723
    %3149 = vmatpush1.msra.mxu0 %v2722
    %3150 = vmatprep.subr.mxu0 %v2726
    %3151 = vmatpush1.msra.mxu0 %v2725
    %3152 = vmatprep.subr.mxu0 %v2729
    %3153 = vmatpush1.msra.mxu0 %v2728
    %3154 = vmatprep.subr.mxu0 %v2732
    %3155 = vmatpush1.msra.mxu0 %v2731
    %3156 = vmatprep.subr.mxu0 %v2735
    %3157 = vmatpush1.msra.mxu0 %v2734
    %3158 = vmatprep.subr.mxu0 %v2738
    %3159 = vmatpush1.msra.mxu0 %v2737
    %3160 = vmatprep.subr.mxu0 %v2741
    %3161 = vmatpush1.msra.mxu0 %v2740
    %3162 = vmatprep.subr.mxu0 %v2744
    %3163 = vmatpush1.msra.mxu0 %v2743
    %3164 = vmatprep.subr.mxu0 %v2747
    %3165 = vmatpush1.msra.mxu0 %v2746
    %3166 = vmatprep.subr.mxu0 %v2750
    %3167 = vmatpush1.msra.mxu0 %v2749
    %3168 = vmatprep.subr.mxu0 %v2753
    %3169 = vmatpush1.msra.mxu0 %v2752
    %3170 = vmatprep.subr.mxu0 %v2756
    %3171 = vmatpush1.msra.mxu0 %v2755
    %3172 = vmatprep.subr.mxu0 %v2759
    %3173 = vmatpush1.msra.mxu0 %v2758
    %3174 = vmatprep.subr.mxu0 %v2762
    %3175 = vmatpush1.msra.mxu0 %v2761
    %3176 = vmatprep.subr.mxu0 %v2765
    %3177 = vmatpush1.msra.mxu0 %v2764
    %3178 = vmatprep.subr.mxu0 %v2768
    %3179 = vmatpush1.msra.mxu0 %v2767
    %3180 = vmatprep.subr.mxu0 %v2771
    %3181 = vmatpush1.msra.mxu0 %v2770
    %3182 = vmatprep.subr.mxu0 %v2774
    %3183 = vmatpush1.msra.mxu0 %v2773
    %3184 = vmatprep.subr.mxu0 %v2777
    %3185 = vmatpush1.msra.mxu0 %v2776
    %3186 = vmatprep.subr.mxu0 %v2780
    %3187 = vmatpush1.msra.mxu0 %v2779
    %3188 = vmatprep.subr.mxu0 %v2783
    %3189 = vmatpush1.msra.mxu0 %v2782
    %3190 = vmatprep.subr.mxu0 %v2786
    %3191 = vmatpush1.msra.mxu0 %v2785
    %3192 = vmatprep.subr.mxu0 %v2789
    %3193 = vmatpush1.msra.mxu0 %v2788
    %3194 = vmatprep.subr.mxu0 %v2792
    %3195 = vmatpush1.msra.mxu0 %v2791
    %3196 = vmatprep.subr.mxu0 %v2795
    %3197 = vmatpush1.msra.mxu0 %v2794
    %3198 = vmatprep.subr.mxu0 %v2798
    %3199 = vmatpush1.msra.mxu0 %v2797
    %3200 = vmatprep.subr.mxu0 %v2801
    %3201 = vmatpush1.msra.mxu0 %v2800
    %3202 = vmatprep.subr.mxu0 %v2804
    %3203 = vmatpush1.msra.mxu0 %v2803
    %3204 = vmatprep.subr.mxu0 %v2807
    %3205 = vmatpush1.msra.mxu0 %v2806
    %3206 = vmatprep.subr.mxu0 %v2810
    %3207 = vmatpush1.msra.mxu0 %v2809
    %3208 = vmatprep.mubr.f32.mxu0 %v3117
    %3209 = vmatmul.mubr.f32.gmra.mrb[0].mxu0 %v3109
    %v3210 = vpop.f32.mrb[0].mxu0
    %v3211 = vadd.f32 0.0, %v3210
    %v3212 = vpop.f32.mrb[0].mxu0
    %v3213 = vadd.f32 0.0, %v3212
    %3214 = vdwg.mxu0
    %3215 = vmatprep.subr.mxu0 %v2813
    %3216 = vmatpush1.msra.mxu0 %v2812
    %3217 = vmatprep.subr.mxu0 %v2816
    %3218 = vmatpush1.msra.mxu0 %v2815
    %3219 = vmatprep.subr.mxu0 %v2819
    %3220 = vmatpush1.msra.mxu0 %v2818
    %3221 = vmatprep.subr.mxu0 %v2822
    %3222 = vmatpush1.msra.mxu0 %v2821
    %3223 = vmatprep.subr.mxu0 %v2825
    %3224 = vmatpush1.msra.mxu0 %v2824
    %3225 = vmatprep.subr.mxu0 %v2828
    %3226 = vmatpush1.msra.mxu0 %v2827
    %3227 = vmatprep.subr.mxu0 %v2831
    %3228 = vmatpush1.msra.mxu0 %v2830
    %3229 = vmatprep.subr.mxu0 %v2834
    %3230 = vmatpush1.msra.mxu0 %v2833
    %3231 = vmatprep.subr.mxu0 %v2837
    %3232 = vmatpush1.msra.mxu0 %v2836
    %3233 = vmatprep.subr.mxu0 %v2840
    %3234 = vmatpush1.msra.mxu0 %v2839
    %3235 = vmatprep.subr.mxu0 %v2843
    %3236 = vmatpush1.msra.mxu0 %v2842
    %3237 = vmatprep.subr.mxu0 %v2846
    %3238 = vmatpush1.msra.mxu0 %v2845
    %3239 = vmatprep.subr.mxu0 %v2849
    %3240 = vmatpush1.msra.mxu0 %v2848
    %3241 = vmatprep.subr.mxu0 %v2852
    %3242 = vmatpush1.msra.mxu0 %v2851
    %3243 = vmatprep.subr.mxu0 %v2855
    %3244 = vmatpush1.msra.mxu0 %v2854
    %3245 = vmatprep.subr.mxu0 %v2858
    %3246 = vmatpush1.msra.mxu0 %v2857
    %3247 = vmatprep.subr.mxu0 %v2861
    %3248 = vmatpush1.msra.mxu0 %v2860
    %3249 = vmatprep.subr.mxu0 %v2864
    %3250 = vmatpush1.msra.mxu0 %v2863
    %3251 = vmatprep.subr.mxu0 %v2867
    %3252 = vmatpush1.msra.mxu0 %v2866
    %3253 = vmatprep.subr.mxu0 %v2870
    %3254 = vmatpush1.msra.mxu0 %v2869
    %3255 = vmatprep.subr.mxu0 %v2873
    %3256 = vmatpush1.msra.mxu0 %v2872
    %3257 = vmatprep.subr.mxu0 %v2876
    %3258 = vmatpush1.msra.mxu0 %v2875
    %3259 = vmatprep.subr.mxu0 %v2879
    %3260 = vmatpush1.msra.mxu0 %v2878
    %3261 = vmatprep.subr.mxu0 %v2882
    %3262 = vmatpush1.msra.mxu0 %v2881
    %3263 = vmatprep.subr.mxu0 %v2885
    %3264 = vmatpush1.msra.mxu0 %v2884
    %3265 = vmatprep.subr.mxu0 %v2888
    %3266 = vmatpush1.msra.mxu0 %v2887
    %3267 = vmatprep.subr.mxu0 %v2891
    %3268 = vmatpush1.msra.mxu0 %v2890
    %3269 = vmatprep.subr.mxu0 %v2894
    %3270 = vmatpush1.msra.mxu0 %v2893
    %3271 = vmatprep.subr.mxu0 %v2897
    %3272 = vmatpush1.msra.mxu0 %v2896
    %3273 = vmatprep.subr.mxu0 %v2900
    %3274 = vmatpush1.msra.mxu0 %v2899
    %3275 = vmatprep.subr.mxu0 %v2903
    %3276 = vmatpush1.msra.mxu0 %v2902
    %3277 = vmatprep.subr.mxu0 %v2906
    %3278 = vmatpush1.msra.mxu0 %v2905
    %3279 = vmatprep.mubr.f32.mxu0 %v3118
    %3280 = vmatmul.mubr.f32.gmra.mrb[0].mxu0 %v3116
    %v3281 = vpop.f32.mrb[0].mxu0
    %v3282 = vadd.f32 %v3211, %v3281
    %v3283 = vpop.f32.mrb[0].mxu0
    %v3284 = vadd.f32 %v3213, %v3283
    %3285 = vdwg.mxu0
    %3286 = vmatprep.subr.mxu0 %v2909
    %3287 = vmatpush1.msra.mxu0 %v2908
    %3288 = vmatprep.subr.mxu0 %v2912
    %3289 = vmatpush1.msra.mxu0 %v2911
    %3290 = vmatprep.subr.mxu0 %v2915
    %3291 = vmatpush1.msra.mxu0 %v2914
    %3292 = vmatprep.subr.mxu0 %v2918
    %3293 = vmatpush1.msra.mxu0 %v2917
    %3294 = vmatprep.subr.mxu0 %v2921
    %3295 = vmatpush1.msra.mxu0 %v2920
    %3296 = vmatprep.subr.mxu0 %v2924
    %3297 = vmatpush1.msra.mxu0 %v2923
    %3298 = vmatprep.subr.mxu0 %v2927
    %3299 = vmatpush1.msra.mxu0 %v2926
    %3300 = vmatprep.subr.mxu0 %v2930
    %3301 = vmatpush1.msra.mxu0 %v2929
    %3302 = vmatprep.subr.mxu0 %v2933
    %3303 = vmatpush1.msra.mxu0 %v2932
    %3304 = vmatprep.subr.mxu0 %v2936
    %3305 = vmatpush1.msra.mxu0 %v2935
    %3306 = vmatprep.subr.mxu0 %v2939
    %3307 = vmatpush1.msra.mxu0 %v2938
    %3308 = vmatprep.subr.mxu0 %v2942
    %3309 = vmatpush1.msra.mxu0 %v2941
    %3310 = vmatprep.subr.mxu0 %v2945
    %3311 = vmatpush1.msra.mxu0 %v2944
    %3312 = vmatprep.subr.mxu0 %v2948
    %3313 = vmatpush1.msra.mxu0 %v2947
    %3314 = vmatprep.subr.mxu0 %v2951
    %3315 = vmatpush1.msra.mxu0 %v2950
    %3316 = vmatprep.subr.mxu0 %v2954
    %3317 = vmatpush1.msra.mxu0 %v2953
    %3318 = vmatprep.subr.mxu0 %v2957
    %3319 = vmatpush1.msra.mxu0 %v2956
    %3320 = vmatprep.subr.mxu0 %v2960
    %3321 = vmatpush1.msra.mxu0 %v2959
    %3322 = vmatprep.subr.mxu0 %v2963
    %3323 = vmatpush1.msra.mxu0 %v2962
    %3324 = vmatprep.subr.mxu0 %v2966
    %3325 = vmatpush1.msra.mxu0 %v2965
    %3326 = vmatprep.subr.mxu0 %v2969
    %3327 = vmatpush1.msra.mxu0 %v2968
    %3328 = vmatprep.subr.mxu0 %v2972
    %3329 = vmatpush1.msra.mxu0 %v2971
    %3330 = vmatprep.subr.mxu0 %v2975
    %3331 = vmatpush1.msra.mxu0 %v2974
    %3332 = vmatprep.subr.mxu0 %v2978
    %3333 = vmatpush1.msra.mxu0 %v2977
    %3334 = vmatprep.subr.mxu0 %v2981
    %3335 = vmatpush1.msra.mxu0 %v2980
    %3336 = vmatprep.subr.mxu0 %v2984
    %3337 = vmatpush1.msra.mxu0 %v2983
    %3338 = vmatprep.subr.mxu0 %v2987
    %3339 = vmatpush1.msra.mxu0 %v2986
    %3340 = vmatprep.subr.mxu0 %v2990
    %3341 = vmatpush1.msra.mxu0 %v2989
    %3342 = vmatprep.subr.mxu0 %v2993
    %3343 = vmatpush1.msra.mxu0 %v2992
    %3344 = vmatprep.subr.mxu0 %v2996
    %3345 = vmatpush1.msra.mxu0 %v2995
    %3346 = vmatprep.subr.mxu0 %v2999
    %3347 = vmatpush1.msra.mxu0 %v2998
    %3348 = vmatprep.subr.mxu0 %v3002
    %3349 = vmatpush1.msra.mxu0 %v3001
    %3350 = vmatprep.mubr.f32.mxu0 %v3134
    %3351 = vmatmul.mubr.f32.gmra.mrb[0].mxu0 %v3126
    %v3352 = vpop.f32.mrb[0].mxu0
    %v3353 = vadd.f32 %v3282, %v3352
    %v3354 = vpop.f32.mrb[0].mxu0
    %v3355 = vadd.f32 %v3284, %v3354
    %3356 = vdwg.mxu0
    %3357 = vmatprep.subr.mxu0 %v3005
    %3358 = vmatpush1.msra.mxu0 %v3004
    %3359 = vmatprep.subr.mxu0 %v3008
    %3360 = vmatpush1.msra.mxu0 %v3007
    %3361 = vmatprep.subr.mxu0 %v3011
    %3362 = vmatpush1.msra.mxu0 %v3010
    %3363 = vmatprep.subr.mxu0 %v3014
    %3364 = vmatpush1.msra.mxu0 %v3013
    %3365 = vmatprep.subr.mxu0 %v3017
    %3366 = vmatpush1.msra.mxu0 %v3016
    %3367 = vmatprep.subr.mxu0 %v3020
    %3368 = vmatpush1.msra.mxu0 %v3019
    %3369 = vmatprep.subr.mxu0 %v3023
    %3370 = vmatpush1.msra.mxu0 %v3022
    %3371 = vmatprep.subr.mxu0 %v3026
    %3372 = vmatpush1.msra.mxu0 %v3025
    %3373 = vmatprep.subr.mxu0 %v3029
    %3374 = vmatpush1.msra.mxu0 %v3028
    %3375 = vmatprep.subr.mxu0 %v3032
    %3376 = vmatpush1.msra.mxu0 %v3031
    %3377 = vmatprep.subr.mxu0 %v3035
    %3378 = vmatpush1.msra.mxu0 %v3034
    %3379 = vmatprep.subr.mxu0 %v3038
    %3380 = vmatpush1.msra.mxu0 %v3037
    %3381 = vmatprep.subr.mxu0 %v3041
    %3382 = vmatpush1.msra.mxu0 %v3040
    %3383 = vmatprep.subr.mxu0 %v3044
    %3384 = vmatpush1.msra.mxu0 %v3043
    %3385 = vmatprep.subr.mxu0 %v3047
    %3386 = vmatpush1.msra.mxu0 %v3046
    %3387 = vmatprep.subr.mxu0 %v3050
    %3388 = vmatpush1.msra.mxu0 %v3049
    %3389 = vmatprep.subr.mxu0 %v3053
    %3390 = vmatpush1.msra.mxu0 %v3052
    %3391 = vmatprep.subr.mxu0 %v3056
    %3392 = vmatpush1.msra.mxu0 %v3055
    %3393 = vmatprep.subr.mxu0 %v3059
    %3394 = vmatpush1.msra.mxu0 %v3058
    %3395 = vmatprep.subr.mxu0 %v3062
    %3396 = vmatpush1.msra.mxu0 %v3061
    %3397 = vmatprep.subr.mxu0 %v3065
    %3398 = vmatpush1.msra.mxu0 %v3064
    %3399 = vmatprep.subr.mxu0 %v3068
    %3400 = vmatpush1.msra.mxu0 %v3067
    %3401 = vmatprep.subr.mxu0 %v3071
    %3402 = vmatpush1.msra.mxu0 %v3070
    %3403 = vmatprep.subr.mxu0 %v3074
    %3404 = vmatpush1.msra.mxu0 %v3073
    %3405 = vmatprep.subr.mxu0 %v3077
    %3406 = vmatpush1.msra.mxu0 %v3076
    %3407 = vmatprep.subr.mxu0 %v3080
    %3408 = vmatpush1.msra.mxu0 %v3079
    %3409 = vmatprep.subr.mxu0 %v3083
    %3410 = vmatpush1.msra.mxu0 %v3082
    %3411 = vmatprep.subr.mxu0 %v3086
    %3412 = vmatpush1.msra.mxu0 %v3085
    %3413 = vmatprep.subr.mxu0 %v3089
    %3414 = vmatpush1.msra.mxu0 %v3088
    %3415 = vmatprep.subr.mxu0 %v3092
    %3416 = vmatpush1.msra.mxu0 %v3091
    %3417 = vmatprep.subr.mxu0 %v3095
    %3418 = vmatpush1.msra.mxu0 %v3094
    %3419 = vmatprep.subr.mxu0 %v3098
    %3420 = vmatpush1.msra.mxu0 %v3097
    %3421 = vmatprep.mubr.f32.mxu0 %v3135
    %3422 = vmatmul.mubr.f32.gmra.mrb[0].mxu0 %v3133
    %v3423 = vpop.f32.mrb[0].mxu0
    %v3424 = vadd.f32 %v3353, %v3423
    %v3425 = vpop.f32.mrb[0].mxu0
    %v3426 = vadd.f32 %v3355, %v3425
    %3427 = vdwg.mxu0
    %3428 = vmatprep.subr.mxu0 0.0
    %3429 = vmatpush1.msra.mxu0 %v2718
    %3430 = vmatprep.subr.mxu0 0.0
    %3431 = vmatpush1.msra.mxu0 %v2721
    %3432 = vmatprep.subr.mxu0 0.0
    %3433 = vmatpush1.msra.mxu0 %v2724
    %3434 = vmatprep.subr.mxu0 0.0
    %3435 = vmatpush1.msra.mxu0 %v2727
    %3436 = vmatprep.subr.mxu0 0.0
    %3437 = vmatpush1.msra.mxu0 %v2730
    %3438 = vmatprep.subr.mxu0 0.0
    %3439 = vmatpush1.msra.mxu0 %v2733
    %3440 = vmatprep.subr.mxu0 0.0
    %3441 = vmatpush1.msra.mxu0 %v2736
    %3442 = vmatprep.subr.mxu0 0.0
    %3443 = vmatpush1.msra.mxu0 %v2739
    %3444 = vmatprep.subr.mxu0 0.0
    %3445 = vmatpush1.msra.mxu0 %v2742
    %3446 = vmatprep.subr.mxu0 0.0
    %3447 = vmatpush1.msra.mxu0 %v2745
    %3448 = vmatprep.subr.mxu0 0.0
    %3449 = vmatpush1.msra.mxu0 %v2748
    %3450 = vmatprep.subr.mxu0 0.0
    %3451 = vmatpush1.msra.mxu0 %v2751
    %3452 = vmatprep.subr.mxu0 0.0
    %3453 = vmatpush1.msra.mxu0 %v2754
    %3454 = vmatprep.subr.mxu0 0.0
    %3455 = vmatpush1.msra.mxu0 %v2757
    %3456 = vmatprep.subr.mxu0 0.0
    %3457 = vmatpush1.msra.mxu0 %v2760
    %3458 = vmatprep.subr.mxu0 0.0
    %3459 = vmatpush1.msra.mxu0 %v2763
    %3460 = vmatprep.subr.mxu0 0.0
    %3461 = vmatpush1.msra.mxu0 %v2766
    %3462 = vmatprep.subr.mxu0 0.0
    %3463 = vmatpush1.msra.mxu0 %v2769
    %3464 = vmatprep.subr.mxu0 0.0
    %3465 = vmatpush1.msra.mxu0 %v2772
    %3466 = vmatprep.subr.mxu0 0.0
    %3467 = vmatpush1.msra.mxu0 %v2775
    %3468 = vmatprep.subr.mxu0 0.0
    %3469 = vmatpush1.msra.mxu0 %v2778
    %3470 = vmatprep.subr.mxu0 0.0
    %3471 = vmatpush1.msra.mxu0 %v2781
    %3472 = vmatprep.subr.mxu0 0.0
    %3473 = vmatpush1.msra.mxu0 %v2784
    %3474 = vmatprep.subr.mxu0 0.0
    %3475 = vmatpush1.msra.mxu0 %v2787
    %3476 = vmatprep.subr.mxu0 0.0
    %3477 = vmatpush1.msra.mxu0 %v2790
    %3478 = vmatprep.subr.mxu0 0.0
    %3479 = vmatpush1.msra.mxu0 %v2793
    %3480 = vmatprep.subr.mxu0 0.0
    %3481 = vmatpush1.msra.mxu0 %v2796
    %3482 = vmatprep.subr.mxu0 0.0
    %3483 = vmatpush1.msra.mxu0 %v2799
    %3484 = vmatprep.subr.mxu0 0.0
    %3485 = vmatpush1.msra.mxu0 %v2802
    %3486 = vmatprep.subr.mxu0 0.0
    %3487 = vmatpush1.msra.mxu0 %v2805
    %3488 = vmatprep.subr.mxu0 0.0
    %3489 = vmatpush1.msra.mxu0 %v2808
    %3490 = vmatprep.subr.mxu0 0.0
    %3491 = vmatpush1.msra.mxu0 %v2811
    %3492 = vmatprep.mubr.f32.mxu0 %v3117
    %3493 = vmatmul.mubr.f32.gmra.mrb[0].mxu0 %v3109
    %v3494 = vpop.f32.mrb[0].mxu0
    %v3495 = vadd.f32 0.0, %v3494
    %v3496 = vpop.f32.mrb[0].mxu0
    %3497 = vdwg.mxu0
    %3498 = vmatprep.subr.mxu0 0.0
    %3499 = vmatpush1.msra.mxu0 %v2814
    %3500 = vmatprep.subr.mxu0 0.0
    %3501 = vmatpush1.msra.mxu0 %v2817
    %3502 = vmatprep.subr.mxu0 0.0
    %3503 = vmatpush1.msra.mxu0 %v2820
    %3504 = vmatprep.subr.mxu0 0.0
    %3505 = vmatpush1.msra.mxu0 %v2823
    %3506 = vmatprep.subr.mxu0 0.0
    %3507 = vmatpush1.msra.mxu0 %v2826
    %3508 = vmatprep.subr.mxu0 0.0
    %3509 = vmatpush1.msra.mxu0 %v2829
    %3510 = vmatprep.subr.mxu0 0.0
    %3511 = vmatpush1.msra.mxu0 %v2832
    %3512 = vmatprep.subr.mxu0 0.0
    %3513 = vmatpush1.msra.mxu0 %v2835
    %3514 = vmatprep.subr.mxu0 0.0
    %3515 = vmatpush1.msra.mxu0 %v2838
    %3516 = vmatprep.subr.mxu0 0.0
    %3517 = vmatpush1.msra.mxu0 %v2841
    %3518 = vmatprep.subr.mxu0 0.0
    %3519 = vmatpush1.msra.mxu0 %v2844
    %3520 = vmatprep.subr.mxu0 0.0
    %3521 = vmatpush1.msra.mxu0 %v2847
    %3522 = vmatprep.subr.mxu0 0.0
    %3523 = vmatpush1.msra.mxu0 %v2850
    %3524 = vmatprep.subr.mxu0 0.0
    %3525 = vmatpush1.msra.mxu0 %v2853
    %3526 = vmatprep.subr.mxu0 0.0
    %3527 = vmatpush1.msra.mxu0 %v2856
    %3528 = vmatprep.subr.mxu0 0.0
    %3529 = vmatpush1.msra.mxu0 %v2859
    %3530 = vmatprep.subr.mxu0 0.0
    %3531 = vmatpush1.msra.mxu0 %v2862
    %3532 = vmatprep.subr.mxu0 0.0
    %3533 = vmatpush1.msra.mxu0 %v2865
    %3534 = vmatprep.subr.mxu0 0.0
    %3535 = vmatpush1.msra.mxu0 %v2868
    %3536 = vmatprep.subr.mxu0 0.0
    %3537 = vmatpush1.msra.mxu0 %v2871
    %3538 = vmatprep.subr.mxu0 0.0
    %3539 = vmatpush1.msra.mxu0 %v2874
    %3540 = vmatprep.subr.mxu0 0.0
    %3541 = vmatpush1.msra.mxu0 %v2877
    %3542 = vmatprep.subr.mxu0 0.0
    %3543 = vmatpush1.msra.mxu0 %v2880
    %3544 = vmatprep.subr.mxu0 0.0
    %3545 = vmatpush1.msra.mxu0 %v2883
    %3546 = vmatprep.subr.mxu0 0.0
    %3547 = vmatpush1.msra.mxu0 %v2886
    %3548 = vmatprep.subr.mxu0 0.0
    %3549 = vmatpush1.msra.mxu0 %v2889
    %3550 = vmatprep.subr.mxu0 0.0
    %3551 = vmatpush1.msra.mxu0 %v2892
    %3552 = vmatprep.subr.mxu0 0.0
    %3553 = vmatpush1.msra.mxu0 %v2895
    %3554 = vmatprep.subr.mxu0 0.0
    %3555 = vmatpush1.msra.mxu0 %v2898
    %3556 = vmatprep.subr.mxu0 0.0
    %3557 = vmatpush1.msra.mxu0 %v2901
    %3558 = vmatprep.subr.mxu0 0.0
    %3559 = vmatpush1.msra.mxu0 %v2904
    %3560 = vmatprep.subr.mxu0 0.0
    %3561 = vmatpush1.msra.mxu0 %v2907
    %3562 = vmatprep.mubr.f32.mxu0 %v3118
    %3563 = vmatmul.mubr.f32.gmra.mrb[0].mxu0 %v3116
    %v3564 = vpop.f32.mrb[0].mxu0
    %v3565 = vadd.f32 %v3495, %v3564
    %v3566 = vpop.f32.mrb[0].mxu0
    %3567 = vdwg.mxu0
    %3568 = vmatprep.subr.mxu0 0.0
    %3569 = vmatpush1.msra.mxu0 %v2910
    %3570 = vmatprep.subr.mxu0 0.0
    %3571 = vmatpush1.msra.mxu0 %v2913
    %3572 = vmatprep.subr.mxu0 0.0
    %3573 = vmatpush1.msra.mxu0 %v2916
    %3574 = vmatprep.subr.mxu0 0.0
    %3575 = vmatpush1.msra.mxu0 %v2919
    %3576 = vmatprep.subr.mxu0 0.0
    %3577 = vmatpush1.msra.mxu0 %v2922
    %3578 = vmatprep.subr.mxu0 0.0
    %3579 = vmatpush1.msra.mxu0 %v2925
    %3580 = vmatprep.subr.mxu0 0.0
    %3581 = vmatpush1.msra.mxu0 %v2928
    %3582 = vmatprep.subr.mxu0 0.0
    %3583 = vmatpush1.msra.mxu0 %v2931
    %3584 = vmatprep.subr.mxu0 0.0
    %3585 = vmatpush1.msra.mxu0 %v2934
    %3586 = vmatprep.subr.mxu0 0.0
    %3587 = vmatpush1.msra.mxu0 %v2937
    %3588 = vmatprep.subr.mxu0 0.0
    %3589 = vmatpush1.msra.mxu0 %v2940
    %3590 = vmatprep.subr.mxu0 0.0
    %3591 = vmatpush1.msra.mxu0 %v2943
    %3592 = vmatprep.subr.mxu0 0.0
    %3593 = vmatpush1.msra.mxu0 %v2946
    %3594 = vmatprep.subr.mxu0 0.0
    %3595 = vmatpush1.msra.mxu0 %v2949
    %3596 = vmatprep.subr.mxu0 0.0
    %3597 = vmatpush1.msra.mxu0 %v2952
    %3598 = vmatprep.subr.mxu0 0.0
    %3599 = vmatpush1.msra.mxu0 %v2955
    %3600 = vmatprep.subr.mxu0 0.0
    %3601 = vmatpush1.msra.mxu0 %v2958
    %3602 = vmatprep.subr.mxu0 0.0
    %3603 = vmatpush1.msra.mxu0 %v2961
    %3604 = vmatprep.subr.mxu0 0.0
    %3605 = vmatpush1.msra.mxu0 %v2964
    %3606 = vmatprep.subr.mxu0 0.0
    %3607 = vmatpush1.msra.mxu0 %v2967
    %3608 = vmatprep.subr.mxu0 0.0
    %3609 = vmatpush1.msra.mxu0 %v2970
    %3610 = vmatprep.subr.mxu0 0.0
    %3611 = vmatpush1.msra.mxu0 %v2973
    %3612 = vmatprep.subr.mxu0 0.0
    %3613 = vmatpush1.msra.mxu0 %v2976
    %3614 = vmatprep.subr.mxu0 0.0
    %3615 = vmatpush1.msra.mxu0 %v2979
    %3616 = vmatprep.subr.mxu0 0.0
    %3617 = vmatpush1.msra.mxu0 %v2982
    %3618 = vmatprep.subr.mxu0 0.0
    %3619 = vmatpush1.msra.mxu0 %v2985
    %3620 = vmatprep.subr.mxu0 0.0
    %3621 = vmatpush1.msra.mxu0 %v2988
    %3622 = vmatprep.subr.mxu0 0.0
    %3623 = vmatpush1.msra.mxu0 %v2991
    %3624 = vmatprep.subr.mxu0 0.0
    %3625 = vmatpush1.msra.mxu0 %v2994
    %3626 = vmatprep.subr.mxu0 0.0
    %3627 = vmatpush1.msra.mxu0 %v2997
    %3628 = vmatprep.subr.mxu0 0.0
    %3629 = vmatpush1.msra.mxu0 %v3000
    %3630 = vmatprep.subr.mxu0 0.0
    %3631 = vmatpush1.msra.mxu0 %v3003
    %3632 = vmatprep.mubr.f32.mxu0 %v3134
    %3633 = vmatmul.mubr.f32.gmra.mrb[0].mxu0 %v3126
    %v3634 = vpop.f32.mrb[0].mxu0
    %v3635 = vadd.f32 %v3565, %v3634
    %v3636 = vpop.f32.mrb[0].mxu0
    %3637 = vdwg.mxu0
    %3638 = vmatprep.subr.mxu0 0.0
    %3639 = vmatpush1.msra.mxu0 %v3006
    %3640 = vmatprep.subr.mxu0 0.0
    %3641 = vmatpush1.msra.mxu0 %v3009
    %3642 = vmatprep.subr.mxu0 0.0
    %3643 = vmatpush1.msra.mxu0 %v3012
    %3644 = vmatprep.subr.mxu0 0.0
    %3645 = vmatpush1.msra.mxu0 %v3015
    %3646 = vmatprep.subr.mxu0 0.0
    %3647 = vmatpush1.msra.mxu0 %v3018
    %3648 = vmatprep.subr.mxu0 0.0
    %3649 = vmatpush1.msra.mxu0 %v3021
    %3650 = vmatprep.subr.mxu0 0.0
    %3651 = vmatpush1.msra.mxu0 %v3024
    %3652 = vmatprep.subr.mxu0 0.0
    %3653 = vmatpush1.msra.mxu0 %v3027
    %3654 = vmatprep.subr.mxu0 0.0
    %3655 = vmatpush1.msra.mxu0 %v3030
    %3656 = vmatprep.subr.mxu0 0.0
    %3657 = vmatpush1.msra.mxu0 %v3033
    %3658 = vmatprep.subr.mxu0 0.0
    %3659 = vmatpush1.msra.mxu0 %v3036
    %3660 = vmatprep.subr.mxu0 0.0
    %3661 = vmatpush1.msra.mxu0 %v3039
    %3662 = vmatprep.subr.mxu0 0.0
    %3663 = vmatpush1.msra.mxu0 %v3042
    %3664 = vmatprep.subr.mxu0 0.0
    %3665 = vmatpush1.msra.mxu0 %v3045
    %3666 = vmatprep.subr.mxu0 0.0
    %3667 = vmatpush1.msra.mxu0 %v3048
    %3668 = vmatprep.subr.mxu0 0.0
    %3669 = vmatpush1.msra.mxu0 %v3051
    %3670 = vmatprep.subr.mxu0 0.0
    %3671 = vmatpush1.msra.mxu0 %v3054
    %3672 = vmatprep.subr.mxu0 0.0
    %3673 = vmatpush1.msra.mxu0 %v3057
    %3674 = vmatprep.subr.mxu0 0.0
    %3675 = vmatpush1.msra.mxu0 %v3060
    %3676 = vmatprep.subr.mxu0 0.0
    %3677 = vmatpush1.msra.mxu0 %v3063
    %3678 = vmatprep.subr.mxu0 0.0
    %3679 = vmatpush1.msra.mxu0 %v3066
    %3680 = vmatprep.subr.mxu0 0.0
    %3681 = vmatpush1.msra.mxu0 %v3069
    %3682 = vmatprep.subr.mxu0 0.0
    %3683 = vmatpush1.msra.mxu0 %v3072
    %3684 = vmatprep.subr.mxu0 0.0
    %3685 = vmatpush1.msra.mxu0 %v3075
    %3686 = vmatprep.subr.mxu0 0.0
    %3687 = vmatpush1.msra.mxu0 %v3078
    %3688 = vmatprep.subr.mxu0 0.0
    %3689 = vmatpush1.msra.mxu0 %v3081
    %3690 = vmatprep.subr.mxu0 0.0
    %3691 = vmatpush1.msra.mxu0 %v3084
    %3692 = vmatprep.subr.mxu0 0.0
    %3693 = vmatpush1.msra.mxu0 %v3087
    %3694 = vmatprep.subr.mxu0 0.0
    %3695 = vmatpush1.msra.mxu0 %v3090
    %3696 = vmatprep.subr.mxu0 0.0
    %3697 = vmatpush1.msra.mxu0 %v3093
    %3698 = vmatprep.subr.mxu0 0.0
    %3699 = vmatpush1.msra.mxu0 %v3096
    %3700 = vmatprep.subr.mxu0 0.0
    %3701 = vmatpush1.msra.mxu0 %v3099
    %3702 = vmatprep.mubr.f32.mxu0 %v3135
    %3703 = vmatmul.mubr.f32.gmra.mrb[0].mxu0 %v3133
    %v3704 = vpop.f32.mrb[0].mxu0
    %v3705 = vadd.f32 %v3635, %v3704
    %v3706 = vpop.f32.mrb[0].mxu0
    %3707 = vdwg.mxu0
    %v3708 = vmul.f32 %v3424, 0.1
    %v3709 = vmul.f32 %v3426, 0.1
    %v3710 = vmul.f32 %v3705, 0.1
    %v3711 = vadd.f32 %v1744, %v3708
    %v3712 = vadd.f32 %v1745, %v3709
    %v3713 = vadd.f32 %v1746, %v3710
    %v3714 = vld [vmem:[%s5] sm:$0x7]
    %v3716 = vlaneseq
    %v3717 = vshrl.u32 %v3716, 7
    %v3718 = vsub.s32 0, %v3717
    %v3719 = vrot.slane %v3714, %v3718
    %v3720 = vlaneseq
    %v3721 = vshrl.u32 %v3720, 7
    %v3722 = vsub.s32 1, %v3721
    %v3723 = vrot.slane %v3714, %v3722
    %v3724 = vlaneseq
    %v3725 = vshrl.u32 %v3724, 7
    %v3726 = vsub.s32 2, %v3725
    %v3727 = vrot.slane %v3714, %v3726
    %v3731 = vsub.f32 %v3711, %v3719
    %v3732 = vsub.f32 %v3712, %v3723
    %v3733 = vsub.f32 %v3713, %v3727
    %v3734 = vmax.f32 %v3731, 0.0
    %v3735 = vmax.f32 %v3732, 0.0
    %v3736 = vmax.f32 %v3733, 0.0
    %v3740 = vcombine.low %v3734, %v3735
    %v3742 = vunpack.c.l.s4 1983009808
    %v3743 = vunpack.c.0.s8 %v3742
    %v3744 = vlaneseq
    %v3745 = vshrl.u32 %v3744, 7
    %v3746 = vsub.s32 %v3743, %v3745
    %v3747 = vrot.slane %v3740, %v3746
    %v3749 = vunpack.c.l.s4 1983009808
    %v3750 = vunpack.c.0.s8 %v3749
    %v3751 = vlaneseq
    %v3752 = vshrl.u32 %v3751, 7
    %v3753 = vsub.s32 %v3750, %v3752
    %v3754 = vrot.slane %v3736, %v3753
    %v3755 = vcombine.low %v3747, %v3754
    %vm3757 = vcmask 1041408
    %vm3758 = vcmask 1043458
    %vm3759 = vmor %vm3758, %vm3757
    %vm3760 = vcmask 553988
    %vm3761 = vmor %vm3760, %vm3759
    %3762 = vst.msk [vmem:[%s11] sm:$0x3f] %vm3761, %v3755
    %v3763 = vld [vmem:[%s8] sm:$0xff]
    %v3764 = vld [vmem:[%s8 + $0x8] sm:$0xff]
    %v3765 = vld [vmem:[%s8 + $0x10] sm:$0xff]
    %v3766 = vld [vmem:[%s8 + $0x18] sm:$0xff]
    %v3767 = vld [vmem:[%s8 + $0x20] sm:$0xff]
    %v3768 = vld [vmem:[%s8 + $0x28] sm:$0xff]
    %v3769 = vld [vmem:[%s8 + $0x30] sm:$0xff]
    %v3770 = vld [vmem:[%s8 + $0x38] sm:$0xff]
    %v3771 = vld [vmem:[%s8 + $0x40] sm:$0xff]
    %v3772 = vld [vmem:[%s8 + $0x48] sm:$0xff]
    %v3773 = vld [vmem:[%s8 + $0x50] sm:$0xff]
    %v3774 = vld [vmem:[%s8 + $0x58] sm:$0xff]
    %v3775 = vld [vmem:[%s8 + $0x60] sm:$0xff]
    %v3776 = vld [vmem:[%s8 + $0x68] sm:$0xff]
    %v3777 = vld [vmem:[%s8 + $0x70] sm:$0xff]
    %v3778 = vld [vmem:[%s8 + $0x78] sm:$0xff]
    %v3779 = vld [vmem:[%s8 + $0x80] sm:$0xff]
    %v3780 = vld [vmem:[%s8 + $0x88] sm:$0xff]
    %v3781 = vld [vmem:[%s8 + $0x90] sm:$0xff]
    %v3782 = vld [vmem:[%s8 + $0x98] sm:$0xff]
    %v3783 = vld [vmem:[%s8 + $0xa0] sm:$0xff]
    %v3784 = vld [vmem:[%s8 + $0xa8] sm:$0xff]
    %v3785 = vld [vmem:[%s8 + $0xb0] sm:$0xff]
    %v3786 = vld [vmem:[%s8 + $0xb8] sm:$0xff]
    %v3787 = vld [vmem:[%s8 + $0xc0] sm:$0xff]
    %v3788 = vld [vmem:[%s8 + $0xc8] sm:$0xff]
    %v3789 = vld [vmem:[%s8 + $0xd0] sm:$0xff]
    %v3790 = vld [vmem:[%s8 + $0xd8] sm:$0xff]
    %v3791 = vld [vmem:[%s8 + $0xe0] sm:$0xff]
    %v3792 = vld [vmem:[%s8 + $0xe8] sm:$0xff]
    %v3793 = vld [vmem:[%s8 + $0xf0] sm:$0xff]
    %v3794 = vld [vmem:[%s8 + $0xf8] sm:$0xff]
    %v3795 = vld [vmem:[%s8 + $0x100] sm:$0xff]
    %v3796 = vld [vmem:[%s8 + $0x108] sm:$0xff]
    %v3797 = vld [vmem:[%s8 + $0x110] sm:$0xff]
    %v3798 = vld [vmem:[%s8 + $0x118] sm:$0xff]
    %v3799 = vld [vmem:[%s8 + $0x120] sm:$0xff]
    %v3800 = vld [vmem:[%s8 + $0x128] sm:$0xff]
    %v3801 = vld [vmem:[%s8 + $0x130] sm:$0xff]
    %v3802 = vld [vmem:[%s8 + $0x138] sm:$0xff]
    %v3803 = vld [vmem:[%s8 + $0x140] sm:$0xf]
    %v3804 = vld [vmem:[%s9] sm:$0x1]
    %v3806 = vlaneseq
    %v3807 = vshrl.u32 %v3806, 7
    %v3808 = vsub.s32 0, %v3807
    %v3809 = vrot.slane %v3804, %v3808
    %v3811 = vsel %vm1102, %v3736, 0
    %v3814 = vsel %vm1106, %v3803, 0
    %3816 = vmatprep.subr.mxu0 0.0
    %3817 = vmatpush1.msra.mxu0 %v3763
    %3818 = vmatprep.subr.mxu0 0.0
    %3819 = vmatpush1.msra.mxu0 %v3764
    %3820 = vmatprep.subr.mxu0 0.0
    %3821 = vmatpush1.msra.mxu0 %v3765
    %3822 = vmatprep.subr.mxu0 0.0
    %3823 = vmatpush1.msra.mxu0 %v3766
    %3824 = vmatprep.subr.mxu0 0.0
    %3825 = vmatpush1.msra.mxu0 %v3767
    %3826 = vmatprep.subr.mxu0 0.0
    %3827 = vmatpush1.msra.mxu0 %v3768
    %3828 = vmatprep.subr.mxu0 0.0
    %3829 = vmatpush1.msra.mxu0 %v3769
    %3830 = vmatprep.subr.mxu0 0.0
    %3831 = vmatpush1.msra.mxu0 %v3770
    %3832 = vmatprep.subr.mxu0 0.0
    %3833 = vmatpush1.msra.mxu0 %v3771
    %3834 = vmatprep.subr.mxu0 0.0
    %3835 = vmatpush1.msra.mxu0 %v3772
    %3836 = vmatprep.subr.mxu0 0.0
    %3837 = vmatpush1.msra.mxu0 %v3773
    %3838 = vmatprep.subr.mxu0 0.0
    %3839 = vmatpush1.msra.mxu0 %v3774
    %3840 = vmatprep.subr.mxu0 0.0
    %3841 = vmatpush1.msra.mxu0 %v3775
    %3842 = vmatprep.subr.mxu0 0.0
    %3843 = vmatpush1.msra.mxu0 %v3776
    %3844 = vmatprep.subr.mxu0 0.0
    %3845 = vmatpush1.msra.mxu0 %v3777
    %3846 = vmatprep.subr.mxu0 0.0
    %3847 = vmatpush1.msra.mxu0 %v3778
    %3848 = vmatprep.subr.mxu0 0.0
    %3849 = vmatpush1.msra.mxu0 %v3779
    %3850 = vmatprep.subr.mxu0 0.0
    %3851 = vmatpush1.msra.mxu0 %v3780
    %3852 = vmatprep.subr.mxu0 0.0
    %3853 = vmatpush1.msra.mxu0 %v3781
    %3854 = vmatprep.subr.mxu0 0.0
    %3855 = vmatpush1.msra.mxu0 %v3782
    %3856 = vmatprep.subr.mxu0 0.0
    %3857 = vmatpush1.msra.mxu0 %v3783
    %3858 = vmatprep.subr.mxu0 0.0
    %3859 = vmatpush1.msra.mxu0 %v3784
    %3860 = vmatprep.subr.mxu0 0.0
    %3861 = vmatpush1.msra.mxu0 %v3785
    %3862 = vmatprep.subr.mxu0 0.0
    %3863 = vmatpush1.msra.mxu0 %v3786
    %3864 = vmatprep.subr.mxu0 0.0
    %3865 = vmatpush1.msra.mxu0 %v3787
    %3866 = vmatprep.subr.mxu0 0.0
    %3867 = vmatpush1.msra.mxu0 %v3788
    %3868 = vmatprep.subr.mxu0 0.0
    %3869 = vmatpush1.msra.mxu0 %v3789
    %3870 = vmatprep.subr.mxu0 0.0
    %3871 = vmatpush1.msra.mxu0 %v3790
    %3872 = vmatprep.subr.mxu0 0.0
    %3873 = vmatpush1.msra.mxu0 %v3791
    %3874 = vmatprep.subr.mxu0 0.0
    %3875 = vmatpush1.msra.mxu0 %v3792
    %3876 = vmatprep.subr.mxu0 0.0
    %3877 = vmatpush1.msra.mxu0 %v3793
    %3878 = vmatprep.subr.mxu0 0.0
    %3879 = vmatpush1.msra.mxu0 %v3794
    %3880 = vmatprep.mubr.f32.mxu0 %v3735
    %3881 = vmatmul.mubr.f32.gmra.mrb[0].mxu0 %v3734
    %v3882 = vpop.f32.mrb[0].mxu0
    %v3883 = vadd.f32 %v3809, %v3882
    %v3884 = vpop.f32.mrb[0].mxu0
    %3885 = vdwg.mxu0
    %3886 = vmatprep.subr.mxu0 0.0
    %3887 = vmatpush1.msra.mxu0 %v3795
    %3888 = vmatprep.subr.mxu0 0.0
    %3889 = vmatpush1.msra.mxu0 %v3796
    %3890 = vmatprep.subr.mxu0 0.0
    %3891 = vmatpush1.msra.mxu0 %v3797
    %3892 = vmatprep.subr.mxu0 0.0
    %3893 = vmatpush1.msra.mxu0 %v3798
    %3894 = vmatprep.subr.mxu0 0.0
    %3895 = vmatpush1.msra.mxu0 %v3799
    %3896 = vmatprep.subr.mxu0 0.0
    %3897 = vmatpush1.msra.mxu0 %v3800
    %3898 = vmatprep.subr.mxu0 0.0
    %3899 = vmatpush1.msra.mxu0 %v3801
    %3900 = vmatprep.subr.mxu0 0.0
    %3901 = vmatpush1.msra.mxu0 %v3802
    %3902 = vmatprep.subr.mxu0 0.0
    %3903 = vmatpush1.msra.mxu0 %v3814
    %3904 = vmatprep.subr.mxu0 0.0
    %3905 = vmatpush1.msra.mxu0 0.0
    %3906 = vmatprep.subr.mxu0 0.0
    %3907 = vmatpush1.msra.mxu0 0.0
    %3908 = vmatprep.subr.mxu0 0.0
    %3909 = vmatpush1.msra.mxu0 0.0
    %3910 = vmatprep.subr.mxu0 0.0
    %3911 = vmatpush1.msra.mxu0 0.0
    %3912 = vmatprep.subr.mxu0 0.0
    %3913 = vmatpush1.msra.mxu0 0.0
    %3914 = vmatprep.subr.mxu0 0.0
    %3915 = vmatpush1.msra.mxu0 0.0
    %3916 = vmatprep.subr.mxu0 0.0
    %3917 = vmatpush1.msra.mxu0 0.0
    %3918 = vmatprep.subr.mxu0 0.0
    %3919 = vmatpush1.msra.mxu0 0.0
    %3920 = vmatprep.subr.mxu0 0.0
    %3921 = vmatpush1.msra.mxu0 0.0
    %3922 = vmatprep.subr.mxu0 0.0
    %3923 = vmatpush1.msra.mxu0 0.0
    %3924 = vmatprep.subr.mxu0 0.0
    %3925 = vmatpush1.msra.mxu0 0.0
    %3926 = vmatprep.subr.mxu0 0.0
    %3927 = vmatpush1.msra.mxu0 0.0
    %3928 = vmatprep.subr.mxu0 0.0
    %3929 = vmatpush1.msra.mxu0 0.0
    %3930 = vmatprep.subr.mxu0 0.0
    %3931 = vmatpush1.msra.mxu0 0.0
    %3932 = vmatprep.subr.mxu0 0.0
    %3933 = vmatpush1.msra.mxu0 0.0
    %3934 = vmatprep.subr.mxu0 0.0
    %3935 = vmatpush1.msra.mxu0 0.0
    %3936 = vmatprep.subr.mxu0 0.0
    %3937 = vmatpush1.msra.mxu0 0.0
    %3938 = vmatprep.subr.mxu0 0.0
    %3939 = vmatpush1.msra.mxu0 0.0
    %3940 = vmatprep.subr.mxu0 0.0
    %3941 = vmatpush1.msra.mxu0 0.0
    %3942 = vmatprep.subr.mxu0 0.0
    %3943 = vmatpush1.msra.mxu0 0.0
    %3944 = vmatprep.subr.mxu0 0.0
    %3945 = vmatpush1.msra.mxu0 0.0
    %3946 = vmatprep.subr.mxu0 0.0
    %3947 = vmatpush1.msra.mxu0 0.0
    %3948 = vmatprep.subr.mxu0 0.0
    %3949 = vmatpush1.msra.mxu0 0.0
    %3950 = vmatprep.mubr.f32.mxu0 0.0
    %3951 = vmatmul.mubr.f32.gmra.mrb[0].mxu0 %v3811
    %v3952 = vpop.f32.mrb[0].mxu0
    %v3953 = vadd.f32 %v3883, %v3952
    %v3954 = vpop.f32.mrb[0].mxu0
    %3955 = vdwg.mxu0
    %3956 = vst.msk [vmem:[#allocation2] sm:$0x3] %vm1396, %v3953
    // Predicated region
    $region42: #{forward.1} parent=1 // pred_check
      _
    $region43: #{forward.1} parent=1 // pred_check_branch
      %3958 = sbr.rel (0) target = $region45
    $region44: #{forward.1} parent=1 // pred_region
      %s3960 = ssub.s32 32, 32
      %3961 = vsyncadd [#allocation3], %s3960
      %s3963 = sshll.u32 [#allocation2], 4
      %s3964 = int_to_ptr.vmem [resolvable:$true] %s3963
      %3966 = dma.vmem_to_hbm [thread:$0]  %s3964, 32, %s10, [#allocation3]
    $region45: #{forward.1} parent=1 // pred_fallthru
      _
    // Predicated region
    $region46: #{forward.1} parent=1 // pred_check
      _
    $region47: #{forward.1} parent=1 // pred_check_branch
      %3968 = sbr.rel (0) target = $region49
    $region48: #{forward.1} parent=1 // pred_region
      _
    $region49: #{forward.1} parent=1 // pred_fallthru
      _
    // Predicated region
    $region50: #{forward.1} parent=1 // pred_check
      _
    $region51: #{forward.1} parent=1 // pred_check_branch
      %3970 = sbr.rel (0) target = $region53
    $region52: #{forward.1} parent=1 // pred_region
      %3971 = dma.done [#allocation3], 32
    $region53: #{forward.1} parent=1 // pred_fallthru
      _
    // Predicated region
    $region54: #{forward.1} parent=1 // pred_check
      _
    $region55: #{forward.1} parent=1 // pred_check_branch
      %3973 = sbr.rel (0) target = $region57
    $region56: #{forward.1} parent=1 // pred_region
      _
    $region57: #{forward.1} parent=1 // pred_fallthru
      _
    %3974 = vsyncpa [#allocation3], 1

</llo_original>
